<compile_context>
chip_gen: v7x
topology: tpu7x:2x2x1
jax: 0.10.0
libtpu: 0.0.40
codegen_flags: <defaults>
</compile_context>

<pallas_src>
import functools
import math

import jax
import jax.numpy as jnp
from jax.experimental import pallas as pl
from jax.experimental.pallas import tpu as pltpu

_VMEM_LIMIT_BYTES = 32 * 1024 * 1024        # safe on v5e / v6e / v7x
_CONV_CFG = ((32, 8, 4), (64, 4, 2), (64, 3, 1))   # (out_ch, kernel, stride)
_FC_HIDDEN = 512


# ------------------------------ Pallas kernels ------------------------------

def _conv_relu_kernel(x_ref, w_ref, b_ref, o_ref, *, oh, ow, nq_w, groups):
    """One image per grid step.

    x_ref : (1, Hq, Wq, s*s*C)  bf16   stride-phase packed image tile
    w_ref : (G, s*s*C, OC)      bf16   grouped conv weight (VMEM resident)
    b_ref : (1, OC)             f32
    o_ref : (1, OH, OW, OC)     bf16
    """
    bias = b_ref[...]                                    # (1, OC) f32
    wgs = [w_ref[g] for g in range(groups)]              # each (s*s*C, OC)
    for oi in range(oh):
        acc = jnp.zeros((ow, wgs[0].shape[1]), jnp.float32)
        for g in range(groups):
            qi = g // nq_w
            qj = g % nq_w
            # contiguous static slice of the VMEM tile -- no im2col in HBM
            patch = x_ref[0, qi + oi, qj:qj + ow, :]      # (OW, s*s*C) bf16
            acc = acc + jnp.dot(patch, wgs[g],
                                preferred_element_type=jnp.float32)
        o_ref[0, oi] = jnp.maximum(acc + bias, 0.0).astype(o_ref.dtype)


def _noisy_fc1_relu_kernel(x_ref, w_ref, sw_ref, ew_ref, b_ref, sb_ref, eb_ref,
                           o_ref):
    """Fused val1|adv1 NoisyLinear + ReLU; noisy weights built in VMEM."""
    w_eff = (w_ref[...] + sw_ref[...] * ew_ref[...]).astype(jnp.bfloat16)
    b_eff = b_ref[...] + sb_ref[...] * eb_ref[...]                # (1, 1024)
    y = jnp.dot(x_ref[...], w_eff, preferred_element_type=jnp.float32)
    o_ref[...] = jnp.maximum(y + b_eff, 0.0).astype(o_ref.dtype)


def _noisy_fc2_dueling_kernel(h_ref, w_ref, sw_ref, ew_ref, b_ref, sb_ref,
                              eb_ref, o_ref, *, batch):
    """Fused (block-diagonal) val2|adv2 NoisyLinear + dueling combine."""
    w_eff = (w_ref[...] + sw_ref[...] * ew_ref[...]).astype(jnp.bfloat16)
    b_eff = b_ref[...] + sb_ref[...] * eb_ref[...]                # (1, 1+A)
    y = jnp.dot(h_ref[...], w_eff, preferred_element_type=jnp.float32) + b_eff
    val = y[:, 0:1]                                               # (Bp, 1)
    adv = y[:, 1:]                                                # (Bp, A)
    # PyTorch reference: val + adv - adv.mean() (global mean over the real
    # batch rows; zero-padded rows are excluded).
    mean = jnp.mean(adv[:batch, :])
    o_ref[...] = val + adv - mean


# ------------------------------ wrapper glue --------------------------------

def _phase_pack(x, stride):
    """(N, H, W, C) -> (N, ceil(H/s), ceil(W/s), s*s*C), feature order (rh, rw, c)."""
    if stride == 1:
        return x
    n, h, w, c = x.shape
    hq = -(-h // stride)
    wq = -(-w // stride)
    x = jnp.pad(x, ((0, 0), (0, hq * stride - h), (0, wq * stride - w), (0, 0)))
    x = x.reshape(n, hq, stride, wq, stride, c)
    x = x.transpose(0, 1, 3, 2, 4, 5)
    return x.reshape(n, hq, wq, stride * stride * c)


def _group_conv_weight(w, stride):
    """PyTorch (OC, C, KH, KW) -> (G, s*s*C, OC) grouped by stride-phase blocks."""
    oc, c, kh, kw = w.shape
    nq_h = (kh - 1) // stride + 1
    nq_w = (kw - 1) // stride + 1
    w = jnp.pad(w, ((0, 0), (0, 0), (0, nq_h * stride - kh),
                    (0, nq_w * stride - kw)))
    w = w.reshape(oc, c, nq_h, stride, nq_w, stride)
    w = w.transpose(2, 4, 3, 5, 1, 0)          # (nq_h, nq_w, rh, rw, C, OC)
    return w.reshape(nq_h * nq_w, stride * stride * c, oc), nq_h, nq_w


def _pallas_conv2d_relu(x_nhwc, w_grouped, bias, *, ksize, stride, nq_w):
    n, h, w, _ = x_nhwc.shape
    oh = (h - ksize) // stride + 1
    ow = (w - ksize) // stride + 1
    xp = _phase_pack(x_nhwc, stride)           # (N, Hq, Wq, s*s*C) bf16
    _, hq, wq, fdim = xp.shape
    groups, _, oc = w_grouped.shape
    kern = functools.partial(_conv_relu_kernel, oh=oh, ow=ow, nq_w=nq_w,
                             groups=groups)
    return pl.pallas_call(
        kern,
        out_shape=jax.ShapeDtypeStruct((n, oh, ow, oc), jnp.bfloat16),
        grid=(n,),
        in_specs=[
            pl.BlockSpec((1, hq, wq, fdim), lambda i: (i, 0, 0, 0)),
            pl.BlockSpec((groups, fdim, oc), lambda i: (0, 0, 0)),  # resident
            pl.BlockSpec((1, oc), lambda i: (0, 0)),                # resident
        ],
        out_specs=pl.BlockSpec((1, oh, ow, oc), lambda i: (i, 0, 0, 0)),
        compiler_params=pltpu.CompilerParams(
            dimension_semantics=("parallel",),
            vmem_limit_bytes=_VMEM_LIMIT_BYTES),
    )(xp, w_grouped, bias)


def _vmem_call(kernel, out_shape, *args):
    return pl.pallas_call(
        kernel,
        out_shape=out_shape,
        in_specs=[pl.BlockSpec(memory_space=pltpu.MemorySpace.VMEM)] * len(args),
        out_specs=pl.BlockSpec(memory_space=pltpu.MemorySpace.VMEM),
        compiler_params=pltpu.CompilerParams(
            vmem_limit_bytes=_VMEM_LIMIT_BYTES),
    )(*args)


# ----------------------------- parameter init -------------------------------

def _uniform(key, shape, bound):
    return jax.random.uniform(key, shape, jnp.float32, -bound, bound)


def init_noisy_linear(key, in_f, out_f, sigma_init=0.017):
    kw, kb = jax.random.split(key)
    std = math.sqrt(3.0 / in_f)
    return {
        "weight": _uniform(kw, (out_f, in_f), std),
        "bias": _uniform(kb, (out_f,), std),
        "sigma_weight": jnp.full((out_f, in_f), sigma_init, jnp.float32),
        "sigma_bias": jnp.full((out_f,), sigma_init, jnp.float32),
    }


def init_conv(key, oc, ic, kh, kw):
    k1, k2 = jax.random.split(key)
    bound = 1.0 / math.sqrt(ic * kh * kw)
    return {
        "weight": _uniform(k1, (oc, ic, kh, kw), bound),
        "bias": _uniform(k2, (oc,), bound),
    }


def conv_shapes(input_shape):
    _, h, w = input_shape
    shapes = []
    for oc, k, s in _CONV_CFG:
        h = (h - k) // s + 1
        w = (w - k) // s + 1
        shapes.append((oc, h, w))
    return shapes


def init_ddqn(key, input_shape, n_actions):
    c = input_shape[0]
    c3, h3, w3 = conv_shapes(input_shape)[-1]
    cos = c3 * h3 * w3
    keys = jax.random.split(key, 7)
    return {
        "conv1": init_conv(keys[0], 32, c, 8, 8),
        "conv2": init_conv(keys[1], 64, 32, 4, 4),
        "conv3": init_conv(keys[2], 64, 64, 3, 3),
        "adv1": init_noisy_linear(keys[3], cos, _FC_HIDDEN),
        "adv2": init_noisy_linear(keys[4], _FC_HIDDEN, n_actions),
        "val1": init_noisy_linear(keys[5], cos, _FC_HIDDEN),
        "val2": init_noisy_linear(keys[6], _FC_HIDDEN, 1),
    }


def prepare_params(params, input_shape, n_actions):
    """One-time re-layout of PyTorch-layout parameters into kernel-friendly form."""
    shapes = conv_shapes(input_shape)
    conv_layers = []
    for name, (oc, k, s) in zip(("conv1", "conv2", "conv3"), _CONV_CFG):
        wg, _, nq_w = _group_conv_weight(params[name]["weight"], s)
        conv_layers.append({
            "w": wg.astype(jnp.bfloat16),
            "b": params[name]["bias"].reshape(1, oc).astype(jnp.float32),
            "ksize": k, "stride": s, "nq_w": nq_w,
        })

    # FC1 columns: PyTorch flattens NCHW (c, h, w); our conv output is (h, w, c).
    c3, h3, w3 = shapes[-1]

    def permute_cols(m):                         # (out, c*h*w) -> (out, h*w*c)
        return m.reshape(m.shape[0], c3, h3, w3).transpose(0, 2, 3, 1) \
                .reshape(m.shape[0], -1)

    fc1 = {   # rows [:512] of the fused output = val path, [512:] = adv path
        "w": jnp.concatenate([permute_cols(params["val1"]["weight"]),
                              permute_cols(params["adv1"]["weight"])], axis=0).T,
        "sw": jnp.concatenate([permute_cols(params["val1"]["sigma_weight"]),
                               permute_cols(params["adv1"]["sigma_weight"])],
                              axis=0).T,
        "b": jnp.concatenate([params["val1"]["bias"],
                              params["adv1"]["bias"]])[None, :],
        "sb": jnp.concatenate([params["val1"]["sigma_bias"],
                               params["adv1"]["sigma_bias"]])[None, :],
    }

    def blockdiag_t(val_m, adv_m):               # (1,H),(A,H) -> (2H, 1+A)
        hid = val_m.shape[1]
        a = adv_m.shape[0]
        top = jnp.concatenate([val_m.T, jnp.zeros((hid, a), jnp.float32)], axis=1)
        bot = jnp.concatenate([jnp.zeros((hid, 1), jnp.float32), adv_m.T], axis=1)
        return jnp.concatenate([top, bot], axis=0)

    fc2 = {   # column 0 = val2 (reads hidden[:, :512]), columns 1.. = adv2
        "w": blockdiag_t(params["val2"]["weight"], params["adv2"]["weight"]),
        "sw": blockdiag_t(params["val2"]["sigma_weight"],
                          params["adv2"]["sigma_weight"]),
        "b": jnp.concatenate([params["val2"]["bias"],
                              params["adv2"]["bias"]])[None, :],
        "sb": jnp.concatenate([params["val2"]["sigma_bias"],
                               params["adv2"]["sigma_bias"]])[None, :],
    }
    return {"conv": conv_layers, "fc1": fc1, "fc2": fc2}


# --------------------------------- forward ----------------------------------

def ddqn_forward(prepared, x_nchw, noise_key):
    batch = x_nchw.shape[0]
    x = jnp.transpose(x_nchw, (0, 2, 3, 1)).astype(jnp.bfloat16)      # NHWC
    for layer in prepared["conv"]:
        x = _pallas_conv2d_relu(x, layer["w"], layer["b"],
                                ksize=layer["ksize"], stride=layer["stride"],
                                nq_w=layer["nq_w"])
    # flatten (h, w, c); FC1 columns were permuted to match PyTorch's (c, h, w)
    conv_out = x.reshape(batch, -1)

    # pad batch rows to a multiple of 8 sublanes (padded rows sliced off at the
    # end; the dueling mean ignores them)
    b_pad = -(-batch // 8) * 8
    conv_out = jnp.pad(conv_out, ((0, b_pad - batch), (0, 0)))

    fc1, fc2 = prepared["fc1"], prepared["fc2"]
    k1, k2, k3, k4 = jax.random.split(noise_key, 4)
    # Fresh gaussian noise per forward, matching NoisyLinear's .normal_().
    # TODO(synk): generate eps in-kernel with pltpu.prng_* to drop the
    # weight-sized eps arrays from HBM (kept in jax.random to preserve the
    # host-side random stream of the existing implementation).
    ew1 = jax.random.normal(k1, fc1["w"].shape, jnp.float32)
    eb1 = jax.random.normal(k2, fc1["b"].shape, jnp.float32)
    ew2 = jax.random.normal(k3, fc2["w"].shape, jnp.float32)
    eb2 = jax.random.normal(k4, fc2["b"].shape, jnp.float32)

    hidden = _vmem_call(
        _noisy_fc1_relu_kernel,
        jax.ShapeDtypeStruct((b_pad, fc1["w"].shape[1]), jnp.bfloat16),
        conv_out, fc1["w"], fc1["sw"], ew1, fc1["b"], fc1["sb"], eb1)

    n_actions = fc2["w"].shape[1] - 1
    out = _vmem_call(
        functools.partial(_noisy_fc2_dueling_kernel, batch=batch),
        jax.ShapeDtypeStruct((b_pad, n_actions), jnp.float32),
        hidden, fc2["w"], fc2["sw"], ew2, fc2["b"], fc2["sb"], eb2)
    return out[:batch]


# ----------------------------------- main ------------------------------------

if __name__ == "__main__":
    key = jax.random.PRNGKey(0)
    k_params, k_x, k_noise = jax.random.split(key, 3)

    # Small shapes consistent with the conv stack (8/4 -> 4/2 -> 3/1 convs).
    input_shape = (4, 44, 44)   # (C, H, W)
    n_actions = 4
    batch = 2

    params = init_ddqn(k_params, input_shape, n_actions)
    prepared = prepare_params(params, input_shape, n_actions)
    x = jax.random.normal(k_x, (batch,) + input_shape, jnp.float32)

    out = ddqn_forward(prepared, x, k_noise)
    out = jax.block_until_ready(out)
    assert out.shape == (batch, n_actions), out.shape
    assert bool(jnp.all(jnp.isfinite(out)))
    print("KERNEL_OK")
</pallas_src>

<mosaic_0001>
module attributes {stable_mosaic.version = 11 : i64} {
  func.func @_conv_relu_kernel(%arg0: i32, %arg1: memref<1x11x11x64xbf16, #tpu.memory_space<vmem>>, %arg2: memref<4x64x32xbf16, #tpu.memory_space<vmem>>, %arg3: memref<1x32xf32, #tpu.memory_space<vmem>>, %arg4: memref<1x10x10x32xbf16, #tpu.memory_space<vmem>>) attributes {dimension_semantics = [#tpu.dimension_semantics<parallel>], iteration_bounds = array<i64: 2>, scalar_prefetch = 0 : i64, scratch_operands = 0 : i64, tpu.core_type = #tpu.core_type<tc>, window_params = [{transform_indices = @transform_0, window_bounds = array<i64: 1, 11, 11, 64>}, {pipeline_mode = #tpu.pipeline_mode<synchronous>, transform_indices = @transform_1, window_bounds = array<i64: 4, 64, 32>}, {pipeline_mode = #tpu.pipeline_mode<synchronous>, transform_indices = @transform_2, window_bounds = array<i64: 1, 32>}, {transform_indices = @transform_3, window_bounds = array<i64: 1, 10, 10, 32>}]} {
    %c0 = arith.constant 0 : index
    %c0_0 = arith.constant 0 : index
    %0 = vector.load %arg3[%c0, %c0_0] : memref<1x32xf32, #tpu.memory_space<vmem>>, vector<1x32xf32>
    %c0_1 = arith.constant 0 : index
    %c0_2 = arith.constant 0 : index
    %c0_3 = arith.constant 0 : index
    %1 = vector.load %arg2[%c0_1, %c0_2, %c0_3] : memref<4x64x32xbf16, #tpu.memory_space<vmem>>, vector<1x64x32xbf16>
    %2 = vector.shape_cast %1 : vector<1x64x32xbf16> to vector<64x32xbf16>
    %c1 = arith.constant 1 : index
    %c0_4 = arith.constant 0 : index
    %c0_5 = arith.constant 0 : index
    %3 = vector.load %arg2[%c1, %c0_4, %c0_5] : memref<4x64x32xbf16, #tpu.memory_space<vmem>>, vector<1x64x32xbf16>
    %4 = vector.shape_cast %3 : vector<1x64x32xbf16> to vector<64x32xbf16>
    %c2 = arith.constant 2 : index
    %c0_6 = arith.constant 0 : index
    %c0_7 = arith.constant 0 : index
    %5 = vector.load %arg2[%c2, %c0_6, %c0_7] : memref<4x64x32xbf16, #tpu.memory_space<vmem>>, vector<1x64x32xbf16>
    %6 = vector.shape_cast %5 : vector<1x64x32xbf16> to vector<64x32xbf16>
    %c3 = arith.constant 3 : index
    %c0_8 = arith.constant 0 : index
    %c0_9 = arith.constant 0 : index
    %7 = vector.load %arg2[%c3, %c0_8, %c0_9] : memref<4x64x32xbf16, #tpu.memory_space<vmem>>, vector<1x64x32xbf16>
    %8 = vector.shape_cast %7 : vector<1x64x32xbf16> to vector<64x32xbf16>
    %cst = arith.constant 0.000000e+00 : f32
    %9 = vector.broadcast %cst : f32 to vector<10x32xf32>
    %c0_10 = arith.constant 0 : index
    %c0_11 = arith.constant 0 : index
    %c0_12 = arith.constant 0 : index
    %c0_13 = arith.constant 0 : index
    %10 = vector.load %arg1[%c0_10, %c0_11, %c0_12, %c0_13] : memref<1x11x11x64xbf16, #tpu.memory_space<vmem>>, vector<1x1x10x64xbf16>
    %11 = vector.shape_cast %10 : vector<1x1x10x64xbf16> to vector<10x64xbf16>
    %cst_14 = arith.constant dense<0.000000e+00> : vector<10x32xf32>
    %12 = tpu.matmul %11, %2, %cst_14 {dimension_numbers = #tpu.dot_dimension_numbers<[1], [0], [0], [1], [0, 0, 1, 1], [], []>} : vector<10x64xbf16>, vector<64x32xbf16>, vector<10x32xf32> -> vector<10x32xf32>
    %13 = arith.addf %9, %12 : vector<10x32xf32>
    %c0_15 = arith.constant 0 : index
    %c0_16 = arith.constant 0 : index
    %c1_17 = arith.constant 1 : index
    %c0_18 = arith.constant 0 : index
    %14 = vector.load %arg1[%c0_15, %c0_16, %c1_17, %c0_18] : memref<1x11x11x64xbf16, #tpu.memory_space<vmem>>, vector<1x1x10x64xbf16>
    %15 = vector.shape_cast %14 : vector<1x1x10x64xbf16> to vector<10x64xbf16>
    %cst_19 = arith.constant dense<0.000000e+00> : vector<10x32xf32>
    %16 = tpu.matmul %15, %4, %cst_19 {dimension_numbers = #tpu.dot_dimension_numbers<[1], [0], [0], [1], [0, 0, 1, 1], [], []>} : vector<10x64xbf16>, vector<64x32xbf16>, vector<10x32xf32> -> vector<10x32xf32>
    %17 = arith.addf %13, %16 : vector<10x32xf32>
    %c0_20 = arith.constant 0 : index
    %c1_21 = arith.constant 1 : index
    %c0_22 = arith.constant 0 : index
    %c0_23 = arith.constant 0 : index
    %18 = vector.load %arg1[%c0_20, %c1_21, %c0_22, %c0_23] : memref<1x11x11x64xbf16, #tpu.memory_space<vmem>>, vector<1x1x10x64xbf16>
    %19 = vector.shape_cast %18 : vector<1x1x10x64xbf16> to vector<10x64xbf16>
    %cst_24 = arith.constant dense<0.000000e+00> : vector<10x32xf32>
    %20 = tpu.matmul %19, %6, %cst_24 {dimension_numbers = #tpu.dot_dimension_numbers<[1], [0], [0], [1], [0, 0, 1, 1], [], []>} : vector<10x64xbf16>, vector<64x32xbf16>, vector<10x32xf32> -> vector<10x32xf32>
    %21 = arith.addf %17, %20 : vector<10x32xf32>
    %c0_25 = arith.constant 0 : index
    %c1_26 = arith.constant 1 : index
    %c1_27 = arith.constant 1 : index
    %c0_28 = arith.constant 0 : index
    %22 = vector.load %arg1[%c0_25, %c1_26, %c1_27, %c0_28] : memref<1x11x11x64xbf16, #tpu.memory_space<vmem>>, vector<1x1x10x64xbf16>
    %23 = vector.shape_cast %22 : vector<1x1x10x64xbf16> to vector<10x64xbf16>
    %cst_29 = arith.constant dense<0.000000e+00> : vector<10x32xf32>
    %24 = tpu.matmul %23, %8, %cst_29 {dimension_numbers = #tpu.dot_dimension_numbers<[1], [0], [0], [1], [0, 0, 1, 1], [], []>} : vector<10x64xbf16>, vector<64x32xbf16>, vector<10x32xf32> -> vector<10x32xf32>
    %25 = arith.addf %21, %24 : vector<10x32xf32>
    %26 = vector.broadcast %0 : vector<1x32xf32> to vector<10x32xf32>
    %27 = arith.addf %25, %26 : vector<10x32xf32>
    %cst_30 = arith.constant 0.000000e+00 : f32
    %28 = vector.broadcast %cst_30 : f32 to vector<10x32xf32>
    %29 = arith.maximumf %27, %28 : vector<10x32xf32>
    %30 = arith.truncf %29 : vector<10x32xf32> to vector<10x32xbf16>
    %c0_31 = arith.constant 0 : index
    %c0_32 = arith.constant 0 : index
    %c0_33 = arith.constant 0 : index
    %c0_34 = arith.constant 0 : index
    %31 = vector.load %arg4[%c0_31, %c0_32, %c0_33, %c0_34] : memref<1x10x10x32xbf16, #tpu.memory_space<vmem>>, vector<1x1x10x32xbf16>
    %32 = vector.shape_cast %31 : vector<1x1x10x32xbf16> to vector<10x32xbf16>
    %33 = vector.shape_cast %30 : vector<10x32xbf16> to vector<1x1x10x32xbf16>
    tpu.vector_store %arg4[%c0_31, %c0_32, %c0_33, %c0_34], %33 {strides = array<i32>} : memref<1x10x10x32xbf16, #tpu.memory_space<vmem>>, vector<1x1x10x32xbf16>,
    %cst_35 = arith.constant 0.000000e+00 : f32
    %34 = vector.broadcast %cst_35 : f32 to vector<10x32xf32>
    %c0_36 = arith.constant 0 : index
    %c1_37 = arith.constant 1 : index
    %c0_38 = arith.constant 0 : index
    %c0_39 = arith.constant 0 : index
    %35 = vector.load %arg1[%c0_36, %c1_37, %c0_38, %c0_39] : memref<1x11x11x64xbf16, #tpu.memory_space<vmem>>, vector<1x1x10x64xbf16>
    %36 = vector.shape_cast %35 : vector<1x1x10x64xbf16> to vector<10x64xbf16>
    %cst_40 = arith.constant dense<0.000000e+00> : vector<10x32xf32>
    %37 = tpu.matmul %36, %2, %cst_40 {dimension_numbers = #tpu.dot_dimension_numbers<[1], [0], [0], [1], [0, 0, 1, 1], [], []>} : vector<10x64xbf16>, vector<64x32xbf16>, vector<10x32xf32> -> vector<10x32xf32>
    %38 = arith.addf %34, %37 : vector<10x32xf32>
    %c0_41 = arith.constant 0 : index
    %c1_42 = arith.constant 1 : index
    %c1_43 = arith.constant 1 : index
    %c0_44 = arith.constant 0 : index
    %39 = vector.load %arg1[%c0_41, %c1_42, %c1_43, %c0_44] : memref<1x11x11x64xbf16, #tpu.memory_space<vmem>>, vector<1x1x10x64xbf16>
    %40 = vector.shape_cast %39 : vector<1x1x10x64xbf16> to vector<10x64xbf16>
    %cst_45 = arith.constant dense<0.000000e+00> : vector<10x32xf32>
    %41 = tpu.matmul %40, %4, %cst_45 {dimension_numbers = #tpu.dot_dimension_numbers<[1], [0], [0], [1], [0, 0, 1, 1], [], []>} : vector<10x64xbf16>, vector<64x32xbf16>, vector<10x32xf32> -> vector<10x32xf32>
    %42 = arith.addf %38, %41 : vector<10x32xf32>
    %c0_46 = arith.constant 0 : index
    %c2_47 = arith.constant 2 : index
    %c0_48 = arith.constant 0 : index
    %c0_49 = arith.constant 0 : index
    %43 = vector.load %arg1[%c0_46, %c2_47, %c0_48, %c0_49] : memref<1x11x11x64xbf16, #tpu.memory_space<vmem>>, vector<1x1x10x64xbf16>
    %44 = vector.shape_cast %43 : vector<1x1x10x64xbf16> to vector<10x64xbf16>
    %cst_50 = arith.constant dense<0.000000e+00> : vector<10x32xf32>
    %45 = tpu.matmul %44, %6, %cst_50 {dimension_numbers = #tpu.dot_dimension_numbers<[1], [0], [0], [1], [0, 0, 1, 1], [], []>} : vector<10x64xbf16>, vector<64x32xbf16>, vector<10x32xf32> -> vector<10x32xf32>
    %46 = arith.addf %42, %45 : vector<10x32xf32>
    %c0_51 = arith.constant 0 : index
    %c2_52 = arith.constant 2 : index
    %c1_53 = arith.constant 1 : index
    %c0_54 = arith.constant 0 : index
    %47 = vector.load %arg1[%c0_51, %c2_52, %c1_53, %c0_54] : memref<1x11x11x64xbf16, #tpu.memory_space<vmem>>, vector<1x1x10x64xbf16>
    %48 = vector.shape_cast %47 : vector<1x1x10x64xbf16> to vector<10x64xbf16>
    %cst_55 = arith.constant dense<0.000000e+00> : vector<10x32xf32>
    %49 = tpu.matmul %48, %8, %cst_55 {dimension_numbers = #tpu.dot_dimension_numbers<[1], [0], [0], [1], [0, 0, 1, 1], [], []>} : vector<10x64xbf16>, vector<64x32xbf16>, vector<10x32xf32> -> vector<10x32xf32>
    %50 = arith.addf %46, %49 : vector<10x32xf32>
    %51 = vector.broadcast %0 : vector<1x32xf32> to vector<10x32xf32>
    %52 = arith.addf %50, %51 : vector<10x32xf32>
    %cst_56 = arith.constant 0.000000e+00 : f32
    %53 = vector.broadcast %cst_56 : f32 to vector<10x32xf32>
    %54 = arith.maximumf %52, %53 : vector<10x32xf32>
    %55 = arith.truncf %54 : vector<10x32xf32> to vector<10x32xbf16>
    %c0_57 = arith.constant 0 : index
    %c1_58 = arith.constant 1 : index
    %c0_59 = arith.constant 0 : index
    %c0_60 = arith.constant 0 : index
    %56 = vector.load %arg4[%c0_57, %c1_58, %c0_59, %c0_60] : memref<1x10x10x32xbf16, #tpu.memory_space<vmem>>, vector<1x1x10x32xbf16>
    %57 = vector.shape_cast %56 : vector<1x1x10x32xbf16> to vector<10x32xbf16>
    %58 = vector.shape_cast %55 : vector<10x32xbf16> to vector<1x1x10x32xbf16>
    tpu.vector_store %arg4[%c0_57, %c1_58, %c0_59, %c0_60], %58 {strides = array<i32>} : memref<1x10x10x32xbf16, #tpu.memory_space<vmem>>, vector<1x1x10x32xbf16>,
    %cst_61 = arith.constant 0.000000e+00 : f32
    %59 = vector.broadcast %cst_61 : f32 to vector<10x32xf32>
    %c0_62 = arith.constant 0 : index
    %c2_63 = arith.constant 2 : index
    %c0_64 = arith.constant 0 : index
    %c0_65 = arith.constant 0 : index
    %60 = vector.load %arg1[%c0_62, %c2_63, %c0_64, %c0_65] : memref<1x11x11x64xbf16, #tpu.memory_space<vmem>>, vector<1x1x10x64xbf16>
    %61 = vector.shape_cast %60 : vector<1x1x10x64xbf16> to vector<10x64xbf16>
    %cst_66 = arith.constant dense<0.000000e+00> : vector<10x32xf32>
    %62 = tpu.matmul %61, %2, %cst_66 {dimension_numbers = #tpu.dot_dimension_numbers<[1], [0], [0], [1], [0, 0, 1, 1], [], []>} : vector<10x64xbf16>, vector<64x32xbf16>, vector<10x32xf32> -> vector<10x32xf32>
    %63 = arith.addf %59, %62 : vector<10x32xf32>
    %c0_67 = arith.constant 0 : index
    %c2_68 = arith.constant 2 : index
    %c1_69 = arith.constant 1 : index
    %c0_70 = arith.constant 0 : index
    %64 = vector.load %arg1[%c0_67, %c2_68, %c1_69, %c0_70] : memref<1x11x11x64xbf16, #tpu.memory_space<vmem>>, vector<1x1x10x64xbf16>
    %65 = vector.shape_cast %64 : vector<1x1x10x64xbf16> to vector<10x64xbf16>
    %cst_71 = arith.constant dense<0.000000e+00> : vector<10x32xf32>
    %66 = tpu.matmul %65, %4, %cst_71 {dimension_numbers = #tpu.dot_dimension_numbers<[1], [0], [0], [1], [0, 0, 1, 1], [], []>} : vector<10x64xbf16>, vector<64x32xbf16>, vector<10x32xf32> -> vector<10x32xf32>
    %67 = arith.addf %63, %66 : vector<10x32xf32>
    %c0_72 = arith.constant 0 : index
    %c3_73 = arith.constant 3 : index
    %c0_74 = arith.constant 0 : index
    %c0_75 = arith.constant 0 : index
    %68 = vector.load %arg1[%c0_72, %c3_73, %c0_74, %c0_75] : memref<1x11x11x64xbf16, #tpu.memory_space<vmem>>, vector<1x1x10x64xbf16>
    %69 = vector.shape_cast %68 : vector<1x1x10x64xbf16> to vector<10x64xbf16>
    %cst_76 = arith.constant dense<0.000000e+00> : vector<10x32xf32>
    %70 = tpu.matmul %69, %6, %cst_76 {dimension_numbers = #tpu.dot_dimension_numbers<[1], [0], [0], [1], [0, 0, 1, 1], [], []>} : vector<10x64xbf16>, vector<64x32xbf16>, vector<10x32xf32> -> vector<10x32xf32>
    %71 = arith.addf %67, %70 : vector<10x32xf32>
    %c0_77 = arith.constant 0 : index
    %c3_78 = arith.constant 3 : index
    %c1_79 = arith.constant 1 : index
    %c0_80 = arith.constant 0 : index
    %72 = vector.load %arg1[%c0_77, %c3_78, %c1_79, %c0_80] : memref<1x11x11x64xbf16, #tpu.memory_space<vmem>>, vector<1x1x10x64xbf16>
    %73 = vector.shape_cast %72 : vector<1x1x10x64xbf16> to vector<10x64xbf16>
    %cst_81 = arith.constant dense<0.000000e+00> : vector<10x32xf32>
    %74 = tpu.matmul %73, %8, %cst_81 {dimension_numbers = #tpu.dot_dimension_numbers<[1], [0], [0], [1], [0, 0, 1, 1], [], []>} : vector<10x64xbf16>, vector<64x32xbf16>, vector<10x32xf32> -> vector<10x32xf32>
    %75 = arith.addf %71, %74 : vector<10x32xf32>
    %76 = vector.broadcast %0 : vector<1x32xf32> to vector<10x32xf32>
    %77 = arith.addf %75, %76 : vector<10x32xf32>
    %cst_82 = arith.constant 0.000000e+00 : f32
    %78 = vector.broadcast %cst_82 : f32 to vector<10x32xf32>
    %79 = arith.maximumf %77, %78 : vector<10x32xf32>
    %80 = arith.truncf %79 : vector<10x32xf32> to vector<10x32xbf16>
    %c0_83 = arith.constant 0 : index
    %c2_84 = arith.constant 2 : index
    %c0_85 = arith.constant 0 : index
    %c0_86 = arith.constant 0 : index
    %81 = vector.load %arg4[%c0_83, %c2_84, %c0_85, %c0_86] : memref<1x10x10x32xbf16, #tpu.memory_space<vmem>>, vector<1x1x10x32xbf16>
    %82 = vector.shape_cast %81 : vector<1x1x10x32xbf16> to vector<10x32xbf16>
    %83 = vector.shape_cast %80 : vector<10x32xbf16> to vector<1x1x10x32xbf16>
    tpu.vector_store %arg4[%c0_83, %c2_84, %c0_85, %c0_86], %83 {strides = array<i32>} : memref<1x10x10x32xbf16, #tpu.memory_space<vmem>>, vector<1x1x10x32xbf16>,
    %cst_87 = arith.constant 0.000000e+00 : f32
    %84 = vector.broadcast %cst_87 : f32 to vector<10x32xf32>
    %c0_88 = arith.constant 0 : index
    %c3_89 = arith.constant 3 : index
    %c0_90 = arith.constant 0 : index
    %c0_91 = arith.constant 0 : index
    %85 = vector.load %arg1[%c0_88, %c3_89, %c0_90, %c0_91] : memref<1x11x11x64xbf16, #tpu.memory_space<vmem>>, vector<1x1x10x64xbf16>
    %86 = vector.shape_cast %85 : vector<1x1x10x64xbf16> to vector<10x64xbf16>
    %cst_92 = arith.constant dense<0.000000e+00> : vector<10x32xf32>
    %87 = tpu.matmul %86, %2, %cst_92 {dimension_numbers = #tpu.dot_dimension_numbers<[1], [0], [0], [1], [0, 0, 1, 1], [], []>} : vector<10x64xbf16>, vector<64x32xbf16>, vector<10x32xf32> -> vector<10x32xf32>
    %88 = arith.addf %84, %87 : vector<10x32xf32>
    %c0_93 = arith.constant 0 : index
    %c3_94 = arith.constant 3 : index
    %c1_95 = arith.constant 1 : index
    %c0_96 = arith.constant 0 : index
    %89 = vector.load %arg1[%c0_93, %c3_94, %c1_95, %c0_96] : memref<1x11x11x64xbf16, #tpu.memory_space<vmem>>, vector<1x1x10x64xbf16>
    %90 = vector.shape_cast %89 : vector<1x1x10x64xbf16> to vector<10x64xbf16>
    %cst_97 = arith.constant dense<0.000000e+00> : vector<10x32xf32>
    %91 = tpu.matmul %90, %4, %cst_97 {dimension_numbers = #tpu.dot_dimension_numbers<[1], [0], [0], [1], [0, 0, 1, 1], [], []>} : vector<10x64xbf16>, vector<64x32xbf16>, vector<10x32xf32> -> vector<10x32xf32>
    %92 = arith.addf %88, %91 : vector<10x32xf32>
    %c0_98 = arith.constant 0 : index
    %c4 = arith.constant 4 : index
    %c0_99 = arith.constant 0 : index
    %c0_100 = arith.constant 0 : index
    %93 = vector.load %arg1[%c0_98, %c4, %c0_99, %c0_100] : memref<1x11x11x64xbf16, #tpu.memory_space<vmem>>, vector<1x1x10x64xbf16>
    %94 = vector.shape_cast %93 : vector<1x1x10x64xbf16> to vector<10x64xbf16>
    %cst_101 = arith.constant dense<0.000000e+00> : vector<10x32xf32>
    %95 = tpu.matmul %94, %6, %cst_101 {dimension_numbers = #tpu.dot_dimension_numbers<[1], [0], [0], [1], [0, 0, 1, 1], [], []>} : vector<10x64xbf16>, vector<64x32xbf16>, vector<10x32xf32> -> vector<10x32xf32>
    %96 = arith.addf %92, %95 : vector<10x32xf32>
    %c0_102 = arith.constant 0 : index
    %c4_103 = arith.constant 4 : index
    %c1_104 = arith.constant 1 : index
    %c0_105 = arith.constant 0 : index
    %97 = vector.load %arg1[%c0_102, %c4_103, %c1_104, %c0_105] : memref<1x11x11x64xbf16, #tpu.memory_space<vmem>>, vector<1x1x10x64xbf16>
    %98 = vector.shape_cast %97 : vector<1x1x10x64xbf16> to vector<10x64xbf16>
    %cst_106 = arith.constant dense<0.000000e+00> : vector<10x32xf32>
    %99 = tpu.matmul %98, %8, %cst_106 {dimension_numbers = #tpu.dot_dimension_numbers<[1], [0], [0], [1], [0, 0, 1, 1], [], []>} : vector<10x64xbf16>, vector<64x32xbf16>, vector<10x32xf32> -> vector<10x32xf32>
    %100 = arith.addf %96, %99 : vector<10x32xf32>
    %101 = vector.broadcast %0 : vector<1x32xf32> to vector<10x32xf32>
    %102 = arith.addf %100, %101 : vector<10x32xf32>
    %cst_107 = arith.constant 0.000000e+00 : f32
    %103 = vector.broadcast %cst_107 : f32 to vector<10x32xf32>
    %104 = arith.maximumf %102, %103 : vector<10x32xf32>
    %105 = arith.truncf %104 : vector<10x32xf32> to vector<10x32xbf16>
    %c0_108 = arith.constant 0 : index
    %c3_109 = arith.constant 3 : index
    %c0_110 = arith.constant 0 : index
    %c0_111 = arith.constant 0 : index
    %106 = vector.load %arg4[%c0_108, %c3_109, %c0_110, %c0_111] : memref<1x10x10x32xbf16, #tpu.memory_space<vmem>>, vector<1x1x10x32xbf16>
    %107 = vector.shape_cast %106 : vector<1x1x10x32xbf16> to vector<10x32xbf16>
    %108 = vector.shape_cast %105 : vector<10x32xbf16> to vector<1x1x10x32xbf16>
    tpu.vector_store %arg4[%c0_108, %c3_109, %c0_110, %c0_111], %108 {strides = array<i32>} : memref<1x10x10x32xbf16, #tpu.memory_space<vmem>>, vector<1x1x10x32xbf16>,
    %cst_112 = arith.constant 0.000000e+00 : f32
    %109 = vector.broadcast %cst_112 : f32 to vector<10x32xf32>
    %c0_113 = arith.constant 0 : index
    %c4_114 = arith.constant 4 : index
    %c0_115 = arith.constant 0 : index
    %c0_116 = arith.constant 0 : index
    %110 = vector.load %arg1[%c0_113, %c4_114, %c0_115, %c0_116] : memref<1x11x11x64xbf16, #tpu.memory_space<vmem>>, vector<1x1x10x64xbf16>
    %111 = vector.shape_cast %110 : vector<1x1x10x64xbf16> to vector<10x64xbf16>
    %cst_117 = arith.constant dense<0.000000e+00> : vector<10x32xf32>
    %112 = tpu.matmul %111, %2, %cst_117 {dimension_numbers = #tpu.dot_dimension_numbers<[1], [0], [0], [1], [0, 0, 1, 1], [], []>} : vector<10x64xbf16>, vector<64x32xbf16>, vector<10x32xf32> -> vector<10x32xf32>
    %113 = arith.addf %109, %112 : vector<10x32xf32>
    %c0_118 = arith.constant 0 : index
    %c4_119 = arith.constant 4 : index
    %c1_120 = arith.constant 1 : index
    %c0_121 = arith.constant 0 : index
    %114 = vector.load %arg1[%c0_118, %c4_119, %c1_120, %c0_121] : memref<1x11x11x64xbf16, #tpu.memory_space<vmem>>, vector<1x1x10x64xbf16>
    %115 = vector.shape_cast %114 : vector<1x1x10x64xbf16> to vector<10x64xbf16>
    %cst_122 = arith.constant dense<0.000000e+00> : vector<10x32xf32>
    %116 = tpu.matmul %115, %4, %cst_122 {dimension_numbers = #tpu.dot_dimension_numbers<[1], [0], [0], [1], [0, 0, 1, 1], [], []>} : vector<10x64xbf16>, vector<64x32xbf16>, vector<10x32xf32> -> vector<10x32xf32>
    %117 = arith.addf %113, %116 : vector<10x32xf32>
    %c0_123 = arith.constant 0 : index
    %c5 = arith.constant 5 : index
    %c0_124 = arith.constant 0 : index
    %c0_125 = arith.constant 0 : index
    %118 = vector.load %arg1[%c0_123, %c5, %c0_124, %c0_125] : memref<1x11x11x64xbf16, #tpu.memory_space<vmem>>, vector<1x1x10x64xbf16>
    %119 = vector.shape_cast %118 : vector<1x1x10x64xbf16> to vector<10x64xbf16>
    %cst_126 = arith.constant dense<0.000000e+00> : vector<10x32xf32>
    %120 = tpu.matmul %119, %6, %cst_126 {dimension_numbers = #tpu.dot_dimension_numbers<[1], [0], [0], [1], [0, 0, 1, 1], [], []>} : vector<10x64xbf16>, vector<64x32xbf16>, vector<10x32xf32> -> vector<10x32xf32>
    %121 = arith.addf %117, %120 : vector<10x32xf32>
    %c0_127 = arith.constant 0 : index
    %c5_128 = arith.constant 5 : index
    %c1_129 = arith.constant 1 : index
    %c0_130 = arith.constant 0 : index
    %122 = vector.load %arg1[%c0_127, %c5_128, %c1_129, %c0_130] : memref<1x11x11x64xbf16, #tpu.memory_space<vmem>>, vector<1x1x10x64xbf16>
    %123 = vector.shape_cast %122 : vector<1x1x10x64xbf16> to vector<10x64xbf16>
    %cst_131 = arith.constant dense<0.000000e+00> : vector<10x32xf32>
    %124 = tpu.matmul %123, %8, %cst_131 {dimension_numbers = #tpu.dot_dimension_numbers<[1], [0], [0], [1], [0, 0, 1, 1], [], []>} : vector<10x64xbf16>, vector<64x32xbf16>, vector<10x32xf32> -> vector<10x32xf32>
    %125 = arith.addf %121, %124 : vector<10x32xf32>
    %126 = vector.broadcast %0 : vector<1x32xf32> to vector<10x32xf32>
    %127 = arith.addf %125, %126 : vector<10x32xf32>
    %cst_132 = arith.constant 0.000000e+00 : f32
    %128 = vector.broadcast %cst_132 : f32 to vector<10x32xf32>
    %129 = arith.maximumf %127, %128 : vector<10x32xf32>
    %130 = arith.truncf %129 : vector<10x32xf32> to vector<10x32xbf16>
    %c0_133 = arith.constant 0 : index
    %c4_134 = arith.constant 4 : index
    %c0_135 = arith.constant 0 : index
    %c0_136 = arith.constant 0 : index
    %131 = vector.load %arg4[%c0_133, %c4_134, %c0_135, %c0_136] : memref<1x10x10x32xbf16, #tpu.memory_space<vmem>>, vector<1x1x10x32xbf16>
    %132 = vector.shape_cast %131 : vector<1x1x10x32xbf16> to vector<10x32xbf16>
    %133 = vector.shape_cast %130 : vector<10x32xbf16> to vector<1x1x10x32xbf16>
    tpu.vector_store %arg4[%c0_133, %c4_134, %c0_135, %c0_136], %133 {strides = array<i32>} : memref<1x10x10x32xbf16, #tpu.memory_space<vmem>>, vector<1x1x10x32xbf16>,
    %cst_137 = arith.constant 0.000000e+00 : f32
    %134 = vector.broadcast %cst_137 : f32 to vector<10x32xf32>
    %c0_138 = arith.constant 0 : index
    %c5_139 = arith.constant 5 : index
    %c0_140 = arith.constant 0 : index
    %c0_141 = arith.constant 0 : index
    %135 = vector.load %arg1[%c0_138, %c5_139, %c0_140, %c0_141] : memref<1x11x11x64xbf16, #tpu.memory_space<vmem>>, vector<1x1x10x64xbf16>
    %136 = vector.shape_cast %135 : vector<1x1x10x64xbf16> to vector<10x64xbf16>
    %cst_142 = arith.constant dense<0.000000e+00> : vector<10x32xf32>
    %137 = tpu.matmul %136, %2, %cst_142 {dimension_numbers = #tpu.dot_dimension_numbers<[1], [0], [0], [1], [0, 0, 1, 1], [], []>} : vector<10x64xbf16>, vector<64x32xbf16>, vector<10x32xf32> -> vector<10x32xf32>
    %138 = arith.addf %134, %137 : vector<10x32xf32>
    %c0_143 = arith.constant 0 : index
    %c5_144 = arith.constant 5 : index
    %c1_145 = arith.constant 1 : index
    %c0_146 = arith.constant 0 : index
    %139 = vector.load %arg1[%c0_143, %c5_144, %c1_145, %c0_146] : memref<1x11x11x64xbf16, #tpu.memory_space<vmem>>, vector<1x1x10x64xbf16>
    %140 = vector.shape_cast %139 : vector<1x1x10x64xbf16> to vector<10x64xbf16>
    %cst_147 = arith.constant dense<0.000000e+00> : vector<10x32xf32>
    %141 = tpu.matmul %140, %4, %cst_147 {dimension_numbers = #tpu.dot_dimension_numbers<[1], [0], [0], [1], [0, 0, 1, 1], [], []>} : vector<10x64xbf16>, vector<64x32xbf16>, vector<10x32xf32> -> vector<10x32xf32>
    %142 = arith.addf %138, %141 : vector<10x32xf32>
    %c0_148 = arith.constant 0 : index
    %c6 = arith.constant 6 : index
    %c0_149 = arith.constant 0 : index
    %c0_150 = arith.constant 0 : index
    %143 = vector.load %arg1[%c0_148, %c6, %c0_149, %c0_150] : memref<1x11x11x64xbf16, #tpu.memory_space<vmem>>, vector<1x1x10x64xbf16>
    %144 = vector.shape_cast %143 : vector<1x1x10x64xbf16> to vector<10x64xbf16>
    %cst_151 = arith.constant dense<0.000000e+00> : vector<10x32xf32>
    %145 = tpu.matmul %144, %6, %cst_151 {dimension_numbers = #tpu.dot_dimension_numbers<[1], [0], [0], [1], [0, 0, 1, 1], [], []>} : vector<10x64xbf16>, vector<64x32xbf16>, vector<10x32xf32> -> vector<10x32xf32>
    %146 = arith.addf %142, %145 : vector<10x32xf32>
    %c0_152 = arith.constant 0 : index
    %c6_153 = arith.constant 6 : index
    %c1_154 = arith.constant 1 : index
    %c0_155 = arith.constant 0 : index
    %147 = vector.load %arg1[%c0_152, %c6_153, %c1_154, %c0_155] : memref<1x11x11x64xbf16, #tpu.memory_space<vmem>>, vector<1x1x10x64xbf16>
    %148 = vector.shape_cast %147 : vector<1x1x10x64xbf16> to vector<10x64xbf16>
    %cst_156 = arith.constant dense<0.000000e+00> : vector<10x32xf32>
    %149 = tpu.matmul %148, %8, %cst_156 {dimension_numbers = #tpu.dot_dimension_numbers<[1], [0], [0], [1], [0, 0, 1, 1], [], []>} : vector<10x64xbf16>, vector<64x32xbf16>, vector<10x32xf32> -> vector<10x32xf32>
    %150 = arith.addf %146, %149 : vector<10x32xf32>
    %151 = vector.broadcast %0 : vector<1x32xf32> to vector<10x32xf32>
    %152 = arith.addf %150, %151 : vector<10x32xf32>
    %cst_157 = arith.constant 0.000000e+00 : f32
    %153 = vector.broadcast %cst_157 : f32 to vector<10x32xf32>
    %154 = arith.maximumf %152, %153 : vector<10x32xf32>
    %155 = arith.truncf %154 : vector<10x32xf32> to vector<10x32xbf16>
    %c0_158 = arith.constant 0 : index
    %c5_159 = arith.constant 5 : index
    %c0_160 = arith.constant 0 : index
    %c0_161 = arith.constant 0 : index
    %156 = vector.load %arg4[%c0_158, %c5_159, %c0_160, %c0_161] : memref<1x10x10x32xbf16, #tpu.memory_space<vmem>>, vector<1x1x10x32xbf16>
    %157 = vector.shape_cast %156 : vector<1x1x10x32xbf16> to vector<10x32xbf16>
    %158 = vector.shape_cast %155 : vector<10x32xbf16> to vector<1x1x10x32xbf16>
    tpu.vector_store %arg4[%c0_158, %c5_159, %c0_160, %c0_161], %158 {strides = array<i32>} : memref<1x10x10x32xbf16, #tpu.memory_space<vmem>>, vector<1x1x10x32xbf16>,
    %cst_162 = arith.constant 0.000000e+00 : f32
    %159 = vector.broadcast %cst_162 : f32 to vector<10x32xf32>
    %c0_163 = arith.constant 0 : index
    %c6_164 = arith.constant 6 : index
    %c0_165 = arith.constant 0 : index
    %c0_166 = arith.constant 0 : index
    %160 = vector.load %arg1[%c0_163, %c6_164, %c0_165, %c0_166] : memref<1x11x11x64xbf16, #tpu.memory_space<vmem>>, vector<1x1x10x64xbf16>
    %161 = vector.shape_cast %160 : vector<1x1x10x64xbf16> to vector<10x64xbf16>
    %cst_167 = arith.constant dense<0.000000e+00> : vector<10x32xf32>
    %162 = tpu.matmul %161, %2, %cst_167 {dimension_numbers = #tpu.dot_dimension_numbers<[1], [0], [0], [1], [0, 0, 1, 1], [], []>} : vector<10x64xbf16>, vector<64x32xbf16>, vector<10x32xf32> -> vector<10x32xf32>
    %163 = arith.addf %159, %162 : vector<10x32xf32>
    %c0_168 = arith.constant 0 : index
    %c6_169 = arith.constant 6 : index
    %c1_170 = arith.constant 1 : index
    %c0_171 = arith.constant 0 : index
    %164 = vector.load %arg1[%c0_168, %c6_169, %c1_170, %c0_171] : memref<1x11x11x64xbf16, #tpu.memory_space<vmem>>, vector<1x1x10x64xbf16>
    %165 = vector.shape_cast %164 : vector<1x1x10x64xbf16> to vector<10x64xbf16>
    %cst_172 = arith.constant dense<0.000000e+00> : vector<10x32xf32>
    %166 = tpu.matmul %165, %4, %cst_172 {dimension_numbers = #tpu.dot_dimension_numbers<[1], [0], [0], [1], [0, 0, 1, 1], [], []>} : vector<10x64xbf16>, vector<64x32xbf16>, vector<10x32xf32> -> vector<10x32xf32>
    %167 = arith.addf %163, %166 : vector<10x32xf32>
    %c0_173 = arith.constant 0 : index
    %c7 = arith.constant 7 : index
    %c0_174 = arith.constant 0 : index
    %c0_175 = arith.constant 0 : index
    %168 = vector.load %arg1[%c0_173, %c7, %c0_174, %c0_175] : memref<1x11x11x64xbf16, #tpu.memory_space<vmem>>, vector<1x1x10x64xbf16>
    %169 = vector.shape_cast %168 : vector<1x1x10x64xbf16> to vector<10x64xbf16>
    %cst_176 = arith.constant dense<0.000000e+00> : vector<10x32xf32>
    %170 = tpu.matmul %169, %6, %cst_176 {dimension_numbers = #tpu.dot_dimension_numbers<[1], [0], [0], [1], [0, 0, 1, 1], [], []>} : vector<10x64xbf16>, vector<64x32xbf16>, vector<10x32xf32> -> vector<10x32xf32>
    %171 = arith.addf %167, %170 : vector<10x32xf32>
    %c0_177 = arith.constant 0 : index
    %c7_178 = arith.constant 7 : index
    %c1_179 = arith.constant 1 : index
    %c0_180 = arith.constant 0 : index
    %172 = vector.load %arg1[%c0_177, %c7_178, %c1_179, %c0_180] : memref<1x11x11x64xbf16, #tpu.memory_space<vmem>>, vector<1x1x10x64xbf16>
    %173 = vector.shape_cast %172 : vector<1x1x10x64xbf16> to vector<10x64xbf16>
    %cst_181 = arith.constant dense<0.000000e+00> : vector<10x32xf32>
    %174 = tpu.matmul %173, %8, %cst_181 {dimension_numbers = #tpu.dot_dimension_numbers<[1], [0], [0], [1], [0, 0, 1, 1], [], []>} : vector<10x64xbf16>, vector<64x32xbf16>, vector<10x32xf32> -> vector<10x32xf32>
    %175 = arith.addf %171, %174 : vector<10x32xf32>
    %176 = vector.broadcast %0 : vector<1x32xf32> to vector<10x32xf32>
    %177 = arith.addf %175, %176 : vector<10x32xf32>
    %cst_182 = arith.constant 0.000000e+00 : f32
    %178 = vector.broadcast %cst_182 : f32 to vector<10x32xf32>
    %179 = arith.maximumf %177, %178 : vector<10x32xf32>
    %180 = arith.truncf %179 : vector<10x32xf32> to vector<10x32xbf16>
    %c0_183 = arith.constant 0 : index
    %c6_184 = arith.constant 6 : index
    %c0_185 = arith.constant 0 : index
    %c0_186 = arith.constant 0 : index
    %181 = vector.load %arg4[%c0_183, %c6_184, %c0_185, %c0_186] : memref<1x10x10x32xbf16, #tpu.memory_space<vmem>>, vector<1x1x10x32xbf16>
    %182 = vector.shape_cast %181 : vector<1x1x10x32xbf16> to vector<10x32xbf16>
    %183 = vector.shape_cast %180 : vector<10x32xbf16> to vector<1x1x10x32xbf16>
    tpu.vector_store %arg4[%c0_183, %c6_184, %c0_185, %c0_186], %183 {strides = array<i32>} : memref<1x10x10x32xbf16, #tpu.memory_space<vmem>>, vector<1x1x10x32xbf16>,
    %cst_187 = arith.constant 0.000000e+00 : f32
    %184 = vector.broadcast %cst_187 : f32 to vector<10x32xf32>
    %c0_188 = arith.constant 0 : index
    %c7_189 = arith.constant 7 : index
    %c0_190 = arith.constant 0 : index
    %c0_191 = arith.constant 0 : index
    %185 = vector.load %arg1[%c0_188, %c7_189, %c0_190, %c0_191] : memref<1x11x11x64xbf16, #tpu.memory_space<vmem>>, vector<1x1x10x64xbf16>
    %186 = vector.shape_cast %185 : vector<1x1x10x64xbf16> to vector<10x64xbf16>
    %cst_192 = arith.constant dense<0.000000e+00> : vector<10x32xf32>
    %187 = tpu.matmul %186, %2, %cst_192 {dimension_numbers = #tpu.dot_dimension_numbers<[1], [0], [0], [1], [0, 0, 1, 1], [], []>} : vector<10x64xbf16>, vector<64x32xbf16>, vector<10x32xf32> -> vector<10x32xf32>
    %188 = arith.addf %184, %187 : vector<10x32xf32>
    %c0_193 = arith.constant 0 : index
    %c7_194 = arith.constant 7 : index
    %c1_195 = arith.constant 1 : index
    %c0_196 = arith.constant 0 : index
    %189 = vector.load %arg1[%c0_193, %c7_194, %c1_195, %c0_196] : memref<1x11x11x64xbf16, #tpu.memory_space<vmem>>, vector<1x1x10x64xbf16>
    %190 = vector.shape_cast %189 : vector<1x1x10x64xbf16> to vector<10x64xbf16>
    %cst_197 = arith.constant dense<0.000000e+00> : vector<10x32xf32>
    %191 = tpu.matmul %190, %4, %cst_197 {dimension_numbers = #tpu.dot_dimension_numbers<[1], [0], [0], [1], [0, 0, 1, 1], [], []>} : vector<10x64xbf16>, vector<64x32xbf16>, vector<10x32xf32> -> vector<10x32xf32>
    %192 = arith.addf %188, %191 : vector<10x32xf32>
    %c0_198 = arith.constant 0 : index
    %c8 = arith.constant 8 : index
    %c0_199 = arith.constant 0 : index
    %c0_200 = arith.constant 0 : index
    %193 = vector.load %arg1[%c0_198, %c8, %c0_199, %c0_200] : memref<1x11x11x64xbf16, #tpu.memory_space<vmem>>, vector<1x1x10x64xbf16>
    %194 = vector.shape_cast %193 : vector<1x1x10x64xbf16> to vector<10x64xbf16>
    %cst_201 = arith.constant dense<0.000000e+00> : vector<10x32xf32>
    %195 = tpu.matmul %194, %6, %cst_201 {dimension_numbers = #tpu.dot_dimension_numbers<[1], [0], [0], [1], [0, 0, 1, 1], [], []>} : vector<10x64xbf16>, vector<64x32xbf16>, vector<10x32xf32> -> vector<10x32xf32>
    %196 = arith.addf %192, %195 : vector<10x32xf32>
    %c0_202 = arith.constant 0 : index
    %c8_203 = arith.constant 8 : index
    %c1_204 = arith.constant 1 : index
    %c0_205 = arith.constant 0 : index
    %197 = vector.load %arg1[%c0_202, %c8_203, %c1_204, %c0_205] : memref<1x11x11x64xbf16, #tpu.memory_space<vmem>>, vector<1x1x10x64xbf16>
    %198 = vector.shape_cast %197 : vector<1x1x10x64xbf16> to vector<10x64xbf16>
    %cst_206 = arith.constant dense<0.000000e+00> : vector<10x32xf32>
    %199 = tpu.matmul %198, %8, %cst_206 {dimension_numbers = #tpu.dot_dimension_numbers<[1], [0], [0], [1], [0, 0, 1, 1], [], []>} : vector<10x64xbf16>, vector<64x32xbf16>, vector<10x32xf32> -> vector<10x32xf32>
    %200 = arith.addf %196, %199 : vector<10x32xf32>
    %201 = vector.broadcast %0 : vector<1x32xf32> to vector<10x32xf32>
    %202 = arith.addf %200, %201 : vector<10x32xf32>
    %cst_207 = arith.constant 0.000000e+00 : f32
    %203 = vector.broadcast %cst_207 : f32 to vector<10x32xf32>
    %204 = arith.maximumf %202, %203 : vector<10x32xf32>
    %205 = arith.truncf %204 : vector<10x32xf32> to vector<10x32xbf16>
    %c0_208 = arith.constant 0 : index
    %c7_209 = arith.constant 7 : index
    %c0_210 = arith.constant 0 : index
    %c0_211 = arith.constant 0 : index
    %206 = vector.load %arg4[%c0_208, %c7_209, %c0_210, %c0_211] : memref<1x10x10x32xbf16, #tpu.memory_space<vmem>>, vector<1x1x10x32xbf16>
    %207 = vector.shape_cast %206 : vector<1x1x10x32xbf16> to vector<10x32xbf16>
    %208 = vector.shape_cast %205 : vector<10x32xbf16> to vector<1x1x10x32xbf16>
    tpu.vector_store %arg4[%c0_208, %c7_209, %c0_210, %c0_211], %208 {strides = array<i32>} : memref<1x10x10x32xbf16, #tpu.memory_space<vmem>>, vector<1x1x10x32xbf16>,
    %cst_212 = arith.constant 0.000000e+00 : f32
    %209 = vector.broadcast %cst_212 : f32 to vector<10x32xf32>
    %c0_213 = arith.constant 0 : index
    %c8_214 = arith.constant 8 : index
    %c0_215 = arith.constant 0 : index
    %c0_216 = arith.constant 0 : index
    %210 = vector.load %arg1[%c0_213, %c8_214, %c0_215, %c0_216] : memref<1x11x11x64xbf16, #tpu.memory_space<vmem>>, vector<1x1x10x64xbf16>
    %211 = vector.shape_cast %210 : vector<1x1x10x64xbf16> to vector<10x64xbf16>
    %cst_217 = arith.constant dense<0.000000e+00> : vector<10x32xf32>
    %212 = tpu.matmul %211, %2, %cst_217 {dimension_numbers = #tpu.dot_dimension_numbers<[1], [0], [0], [1], [0, 0, 1, 1], [], []>} : vector<10x64xbf16>, vector<64x32xbf16>, vector<10x32xf32> -> vector<10x32xf32>
    %213 = arith.addf %209, %212 : vector<10x32xf32>
    %c0_218 = arith.constant 0 : index
    %c8_219 = arith.constant 8 : index
    %c1_220 = arith.constant 1 : index
    %c0_221 = arith.constant 0 : index
    %214 = vector.load %arg1[%c0_218, %c8_219, %c1_220, %c0_221] : memref<1x11x11x64xbf16, #tpu.memory_space<vmem>>, vector<1x1x10x64xbf16>
    %215 = vector.shape_cast %214 : vector<1x1x10x64xbf16> to vector<10x64xbf16>
    %cst_222 = arith.constant dense<0.000000e+00> : vector<10x32xf32>
    %216 = tpu.matmul %215, %4, %cst_222 {dimension_numbers = #tpu.dot_dimension_numbers<[1], [0], [0], [1], [0, 0, 1, 1], [], []>} : vector<10x64xbf16>, vector<64x32xbf16>, vector<10x32xf32> -> vector<10x32xf32>
    %217 = arith.addf %213, %216 : vector<10x32xf32>
    %c0_223 = arith.constant 0 : index
    %c9 = arith.constant 9 : index
    %c0_224 = arith.constant 0 : index
    %c0_225 = arith.constant 0 : index
    %218 = vector.load %arg1[%c0_223, %c9, %c0_224, %c0_225] : memref<1x11x11x64xbf16, #tpu.memory_space<vmem>>, vector<1x1x10x64xbf16>
    %219 = vector.shape_cast %218 : vector<1x1x10x64xbf16> to vector<10x64xbf16>
    %cst_226 = arith.constant dense<0.000000e+00> : vector<10x32xf32>
    %220 = tpu.matmul %219, %6, %cst_226 {dimension_numbers = #tpu.dot_dimension_numbers<[1], [0], [0], [1], [0, 0, 1, 1], [], []>} : vector<10x64xbf16>, vector<64x32xbf16>, vector<10x32xf32> -> vector<10x32xf32>
    %221 = arith.addf %217, %220 : vector<10x32xf32>
    %c0_227 = arith.constant 0 : index
    %c9_228 = arith.constant 9 : index
    %c1_229 = arith.constant 1 : index
    %c0_230 = arith.constant 0 : index
    %222 = vector.load %arg1[%c0_227, %c9_228, %c1_229, %c0_230] : memref<1x11x11x64xbf16, #tpu.memory_space<vmem>>, vector<1x1x10x64xbf16>
    %223 = vector.shape_cast %222 : vector<1x1x10x64xbf16> to vector<10x64xbf16>
    %cst_231 = arith.constant dense<0.000000e+00> : vector<10x32xf32>
    %224 = tpu.matmul %223, %8, %cst_231 {dimension_numbers = #tpu.dot_dimension_numbers<[1], [0], [0], [1], [0, 0, 1, 1], [], []>} : vector<10x64xbf16>, vector<64x32xbf16>, vector<10x32xf32> -> vector<10x32xf32>
    %225 = arith.addf %221, %224 : vector<10x32xf32>
    %226 = vector.broadcast %0 : vector<1x32xf32> to vector<10x32xf32>
    %227 = arith.addf %225, %226 : vector<10x32xf32>
    %cst_232 = arith.constant 0.000000e+00 : f32
    %228 = vector.broadcast %cst_232 : f32 to vector<10x32xf32>
    %229 = arith.maximumf %227, %228 : vector<10x32xf32>
    %230 = arith.truncf %229 : vector<10x32xf32> to vector<10x32xbf16>
    %c0_233 = arith.constant 0 : index
    %c8_234 = arith.constant 8 : index
    %c0_235 = arith.constant 0 : index
    %c0_236 = arith.constant 0 : index
    %231 = vector.load %arg4[%c0_233, %c8_234, %c0_235, %c0_236] : memref<1x10x10x32xbf16, #tpu.memory_space<vmem>>, vector<1x1x10x32xbf16>
    %232 = vector.shape_cast %231 : vector<1x1x10x32xbf16> to vector<10x32xbf16>
    %233 = vector.shape_cast %230 : vector<10x32xbf16> to vector<1x1x10x32xbf16>
    tpu.vector_store %arg4[%c0_233, %c8_234, %c0_235, %c0_236], %233 {strides = array<i32>} : memref<1x10x10x32xbf16, #tpu.memory_space<vmem>>, vector<1x1x10x32xbf16>,
    %cst_237 = arith.constant 0.000000e+00 : f32
    %234 = vector.broadcast %cst_237 : f32 to vector<10x32xf32>
    %c0_238 = arith.constant 0 : index
    %c9_239 = arith.constant 9 : index
    %c0_240 = arith.constant 0 : index
    %c0_241 = arith.constant 0 : index
    %235 = vector.load %arg1[%c0_238, %c9_239, %c0_240, %c0_241] : memref<1x11x11x64xbf16, #tpu.memory_space<vmem>>, vector<1x1x10x64xbf16>
    %236 = vector.shape_cast %235 : vector<1x1x10x64xbf16> to vector<10x64xbf16>
    %cst_242 = arith.constant dense<0.000000e+00> : vector<10x32xf32>
    %237 = tpu.matmul %236, %2, %cst_242 {dimension_numbers = #tpu.dot_dimension_numbers<[1], [0], [0], [1], [0, 0, 1, 1], [], []>} : vector<10x64xbf16>, vector<64x32xbf16>, vector<10x32xf32> -> vector<10x32xf32>
    %238 = arith.addf %234, %237 : vector<10x32xf32>
    %c0_243 = arith.constant 0 : index
    %c9_244 = arith.constant 9 : index
    %c1_245 = arith.constant 1 : index
    %c0_246 = arith.constant 0 : index
    %239 = vector.load %arg1[%c0_243, %c9_244, %c1_245, %c0_246] : memref<1x11x11x64xbf16, #tpu.memory_space<vmem>>, vector<1x1x10x64xbf16>
    %240 = vector.shape_cast %239 : vector<1x1x10x64xbf16> to vector<10x64xbf16>
    %cst_247 = arith.constant dense<0.000000e+00> : vector<10x32xf32>
    %241 = tpu.matmul %240, %4, %cst_247 {dimension_numbers = #tpu.dot_dimension_numbers<[1], [0], [0], [1], [0, 0, 1, 1], [], []>} : vector<10x64xbf16>, vector<64x32xbf16>, vector<10x32xf32> -> vector<10x32xf32>
    %242 = arith.addf %238, %241 : vector<10x32xf32>
    %c0_248 = arith.constant 0 : index
    %c10 = arith.constant 10 : index
    %c0_249 = arith.constant 0 : index
    %c0_250 = arith.constant 0 : index
    %243 = vector.load %arg1[%c0_248, %c10, %c0_249, %c0_250] : memref<1x11x11x64xbf16, #tpu.memory_space<vmem>>, vector<1x1x10x64xbf16>
    %244 = vector.shape_cast %243 : vector<1x1x10x64xbf16> to vector<10x64xbf16>
    %cst_251 = arith.constant dense<0.000000e+00> : vector<10x32xf32>
    %245 = tpu.matmul %244, %6, %cst_251 {dimension_numbers = #tpu.dot_dimension_numbers<[1], [0], [0], [1], [0, 0, 1, 1], [], []>} : vector<10x64xbf16>, vector<64x32xbf16>, vector<10x32xf32> -> vector<10x32xf32>
    %246 = arith.addf %242, %245 : vector<10x32xf32>
    %c0_252 = arith.constant 0 : index
    %c10_253 = arith.constant 10 : index
    %c1_254 = arith.constant 1 : index
    %c0_255 = arith.constant 0 : index
    %247 = vector.load %arg1[%c0_252, %c10_253, %c1_254, %c0_255] : memref<1x11x11x64xbf16, #tpu.memory_space<vmem>>, vector<1x1x10x64xbf16>
    %248 = vector.shape_cast %247 : vector<1x1x10x64xbf16> to vector<10x64xbf16>
    %cst_256 = arith.constant dense<0.000000e+00> : vector<10x32xf32>
    %249 = tpu.matmul %248, %8, %cst_256 {dimension_numbers = #tpu.dot_dimension_numbers<[1], [0], [0], [1], [0, 0, 1, 1], [], []>} : vector<10x64xbf16>, vector<64x32xbf16>, vector<10x32xf32> -> vector<10x32xf32>
    %250 = arith.addf %246, %249 : vector<10x32xf32>
    %251 = vector.broadcast %0 : vector<1x32xf32> to vector<10x32xf32>
    %252 = arith.addf %250, %251 : vector<10x32xf32>
    %cst_257 = arith.constant 0.000000e+00 : f32
    %253 = vector.broadcast %cst_257 : f32 to vector<10x32xf32>
    %254 = arith.maximumf %252, %253 : vector<10x32xf32>
    %255 = arith.truncf %254 : vector<10x32xf32> to vector<10x32xbf16>
    %c0_258 = arith.constant 0 : index
    %c9_259 = arith.constant 9 : index
    %c0_260 = arith.constant 0 : index
    %c0_261 = arith.constant 0 : index
    %256 = vector.load %arg4[%c0_258, %c9_259, %c0_260, %c0_261] : memref<1x10x10x32xbf16, #tpu.memory_space<vmem>>, vector<1x1x10x32xbf16>
    %257 = vector.shape_cast %256 : vector<1x1x10x32xbf16> to vector<10x32xbf16>
    %258 = vector.shape_cast %255 : vector<10x32xbf16> to vector<1x1x10x32xbf16>
    tpu.vector_store %arg4[%c0_258, %c9_259, %c0_260, %c0_261], %258 {strides = array<i32>} : memref<1x10x10x32xbf16, #tpu.memory_space<vmem>>, vector<1x1x10x32xbf16>,
    return
  }
  func.func @transform_0(%arg0: i32) -> (i32, i32, i32, i32) {
    %c0_i32 = arith.constant 0 : i32
    %c0_i32_0 = arith.constant 0 : i32
    %c0_i32_1 = arith.constant 0 : i32
    %c0_i32_2 = arith.constant 0 : i32
    return %arg0, %c0_i32, %c0_i32_0, %c0_i32_1 : i32, i32, i32, i32
  }
  func.func @transform_1(%arg0: i32) -> (i32, i32, i32) {
    %c0_i32 = arith.constant 0 : i32
    %c0_i32_0 = arith.constant 0 : i32
    %c0_i32_1 = arith.constant 0 : i32
    %c0_i32_2 = arith.constant 0 : i32
    return %c0_i32, %c0_i32_0, %c0_i32_1 : i32, i32, i32
  }
  func.func @transform_2(%arg0: i32) -> (i32, i32) {
    %c0_i32 = arith.constant 0 : i32
    %c0_i32_0 = arith.constant 0 : i32
    %c0_i32_1 = arith.constant 0 : i32
    return %c0_i32, %c0_i32_0 : i32, i32
  }
  func.func @transform_3(%arg0: i32) -> (i32, i32, i32, i32) {
    %c0_i32 = arith.constant 0 : i32
    %c0_i32_0 = arith.constant 0 : i32
    %c0_i32_1 = arith.constant 0 : i32
    %c0_i32_2 = arith.constant 0 : i32
    return %arg0, %c0_i32, %c0_i32_0, %c0_i32_1 : i32, i32, i32, i32
  }
}

</mosaic_0001>

<llo_original>
// kernel: tpu_custom_call.1
$region0: #{tpu_custom_call.1}
  #allocation0 [shape = 'u32[]', space=smem, size = 0x4, offset = 0x4, fixed_abs, tag = 'smem constant byte address 0x4 - core index']
  #allocation1 [shape = 'u32[144,128]{1,0:T(1,128)}', space=vmem, size = 0x12000, scoped, tag = 'internal scratch']
  %s0 = inlined_call_operand.vmem [shape: bf16[2,11,11,64], index: 0, kind: input, shape index: {}]
  %s1 = inlined_call_operand.vmem [shape: bf16[4,64,32], index: 1, kind: input, shape index: {}]
  %s2 = inlined_call_operand.vmem [shape: f32[1,32], index: 2, kind: input, shape index: {}]
  %s3 = inlined_call_operand.vmem [shape: bf16[2,10,10,32], index: 3, kind: output, shape index: {}]
  %s4 = sld [smem:[#allocation0]]
  $region45: #{tpu_custom_call.1} parent=0
    _
  %s6 = ssub.s32 1, %s4
  %s7 = scalar_select 0, %s6, %s4
  loop: start=0, step=1, limit=4
  $region2: #{tpu_custom_call.1} parent=0 // loop_pre_header
    _
  $region3: #{tpu_custom_call.1} parent=0 // loop_header
    %s9 = sphi 0, %s13
    %p10 = scmp.ge.s32.totalorder %s9, 4
    %s19 = sphi 0, %s21
    %s22 = sphi 0, %s19
    %s23 = sphi 0, %s22
    %s39 = sphi 0, %s23
    %s43 = sphi 0, %s43
    %s45 = sphi 0, %s43
    %s46 = sphi 0, %s45
    %s60 = sphi 0, %s46
    %s64 = sphi 0, %s64
    %s66 = sphi 0, %s64
    %s67 = sphi 0, %s66
    %s81 = sphi 0, %s67
    %s87 = sphi 0, %s89
    %s90 = sphi 0, %s87
    %s91 = sphi 0, %s90
    %s107 = sphi 0, %s91
  $region4: #{tpu_custom_call.1} parent=0 // loop_header_branch
    %12 = sbr.rel (%p10) target = $region8
  $region5: #{tpu_custom_call.1} parent=0 // loop_body
    %s14 = ssub.s32 %s9, 1
    %s15 = ssub.s32 %s9, 2
    %s16 = sadd.s32 %s9, 1
    %s17 = ssub.s32 %s9, %s16
    %p18 = scmp.eq.s32.totalorder %s17, 0
    %s20 = sadd.s32 %s19, 1
    %s21 = scalar_select %p18, %s19, %s20
    %p24 = pneg %p18
    %p25 = scmp.eq.s32.totalorder %s9, 1
    %p26 = por %p24, %p25
    %p27 = scmp.ne.s32.totalorder %s19, %s22
    %p28 = scmp.eq.s32.totalorder %s9, 0
    %p29 = por %p27, %p28
    %p30 = scmp.ne.s32.totalorder %s19, %s22
    %p31 = scmp.eq.s32.totalorder %s14, 1
    %p32 = por %p30, %p31
    %p33 = scmp.ne.s32.totalorder %s22, %s23
    %p34 = scmp.eq.s32.totalorder %s14, 0
    %p35 = por %p33, %p34
    %p36 = scmp.ne.s32.totalorder %s22, %s23
    %p37 = scmp.eq.s32.totalorder %s15, 1
    %p38 = por %p36, %p37
    %p40 = scmp.ne.s32.totalorder %s23, %s39
    %p41 = scmp.eq.s32.totalorder %s15, 0
    %p42 = por %p40, %p41
    %s44 = sadd.s32 %s43, 1
    %p47 = scmp.eq.s32.totalorder %s9, 1
    %p48 = scmp.ne.s32.totalorder %s43, %s45
    %p49 = scmp.eq.s32.totalorder %s9, 0
    %p50 = por %p48, %p49
    %p51 = scmp.ne.s32.totalorder %s43, %s45
    %p52 = scmp.eq.s32.totalorder %s14, 1
    %p53 = por %p51, %p52
    %p54 = scmp.ne.s32.totalorder %s45, %s46
    %p55 = scmp.eq.s32.totalorder %s14, 0
    %p56 = por %p54, %p55
    %p57 = scmp.ne.s32.totalorder %s45, %s46
    %p58 = scmp.eq.s32.totalorder %s15, 1
    %p59 = por %p57, %p58
    %p61 = scmp.ne.s32.totalorder %s46, %s60
    %p62 = scmp.eq.s32.totalorder %s15, 0
    %p63 = por %p61, %p62
    %s65 = sadd.s32 %s64, 1
    %p68 = scmp.eq.s32.totalorder %s9, 1
    %p69 = scmp.ne.s32.totalorder %s64, %s66
    %p70 = scmp.eq.s32.totalorder %s9, 0
    %p71 = por %p69, %p70
    %p72 = scmp.ne.s32.totalorder %s64, %s66
    %p73 = scmp.eq.s32.totalorder %s14, 1
    %p74 = por %p72, %p73
    %p75 = scmp.ne.s32.totalorder %s66, %s67
    %p76 = scmp.eq.s32.totalorder %s14, 0
    %p77 = por %p75, %p76
    %p78 = scmp.ne.s32.totalorder %s66, %s67
    %p79 = scmp.eq.s32.totalorder %s15, 1
    %p80 = por %p78, %p79
    %p82 = scmp.ne.s32.totalorder %s67, %s81
    %p83 = scmp.eq.s32.totalorder %s15, 0
    %p84 = por %p82, %p83
    %s85 = ssub.s32 %s9, %s16
    %p86 = scmp.eq.s32.totalorder %s85, 0
    %s88 = sadd.s32 %s87, 1
    %s89 = scalar_select %p86, %s87, %s88
    %p92 = pneg %p86
    %p93 = scmp.eq.s32.totalorder %s9, 1
    %p94 = por %p92, %p93
    %p95 = scmp.ne.s32.totalorder %s87, %s90
    %p96 = scmp.eq.s32.totalorder %s9, 0
    %p97 = por %p95, %p96
    %p98 = scmp.ne.s32.totalorder %s87, %s90
    %p99 = scmp.eq.s32.totalorder %s14, 1
    %p100 = por %p98, %p99
    %p101 = scmp.ne.s32.totalorder %s90, %s91
    %p102 = scmp.eq.s32.totalorder %s14, 0
    %p103 = por %p101, %p102
    %p104 = scmp.ne.s32.totalorder %s90, %s91
    %p105 = scmp.eq.s32.totalorder %s15, 1
    %p106 = por %p104, %p105
    %p108 = scmp.ne.s32.totalorder %s91, %s107
    %p109 = scmp.eq.s32.totalorder %s15, 0
    %p110 = por %p108, %p109
    %p111 = scmp.le.s32.totalorder 1, %s9
    %p112 = scmp.lt.s32.totalorder %s9, 3
    %p113 = pnand %p111, %p112
    %p114 = pneg %p113
    // Predicated region
    $region9: #{tpu_custom_call.1} parent=5 // pred_check
      _
    $region10: #{tpu_custom_call.1} parent=5 // pred_check_branch
      %116 = sbr.rel (%p113) target = $region12
    $region11: #{tpu_custom_call.1} parent=5 // pred_region
      %s117 = ssub.s32 %s9, 1
      // Predicated region
      $region13: #{tpu_custom_call.1} parent=11 // pred_check
        %p118 = pneg %p56
      $region14: #{tpu_custom_call.1} parent=11 // pred_check_branch
        %120 = sbr.rel (%p118) target = $region16
      $region15: #{tpu_custom_call.1} parent=11 // pred_region
        _
      $region16: #{tpu_custom_call.1} parent=11 // pred_fallthru
        _
      // Predicated region
      $region17: #{tpu_custom_call.1} parent=11 // pred_check
        %p121 = pneg %p77
      $region18: #{tpu_custom_call.1} parent=11 // pred_check_branch
        %123 = sbr.rel (%p121) target = $region20
      $region19: #{tpu_custom_call.1} parent=11 // pred_region
        _
      $region20: #{tpu_custom_call.1} parent=11 // pred_fallthru
        _
    $region12: #{tpu_custom_call.1} parent=5 // pred_fallthru
      _
    %p124 = scmp.lt.s32.totalorder %s9, 2
    // Predicated region
    $region21: #{tpu_custom_call.1} parent=5 // pred_check
      %p125 = pneg %p124
    $region22: #{tpu_custom_call.1} parent=5 // pred_check_branch
      %127 = sbr.rel (%p125) target = $region24
    $region23: #{tpu_custom_call.1} parent=5 // pred_region
      // Predicated region
      $region25: #{tpu_custom_call.1} parent=23 // pred_check
        %p128 = pneg %p29
      $region26: #{tpu_custom_call.1} parent=23 // pred_check_branch
        %130 = sbr.rel (%p128) target = $region28
      $region27: #{tpu_custom_call.1} parent=23 // pred_region
        %p131 = scmp.lt.s32.totalorder %s9, 1
        %s132 = scalar_select %p131, %s9, 1
        %s133 = smul.addr %s132, 22
        %s134 = smul.addr %s133, 4
        %s135 = scalar_lea.vmem %s0, %s134
      $region28: #{tpu_custom_call.1} parent=23 // pred_fallthru
        _
    $region24: #{tpu_custom_call.1} parent=5 // pred_fallthru
      _
    %p136 = scmp.le.s32.totalorder 1, %s9
    %p137 = scmp.lt.s32.totalorder %s9, 3
    %p138 = pnand %p136, %p137
    %p139 = pneg %p138
    // Predicated region
    $region29: #{tpu_custom_call.1} parent=5 // pred_check
      _
    $region30: #{tpu_custom_call.1} parent=5 // pred_check_branch
      %141 = sbr.rel (%p138) target = $region32
    $region31: #{tpu_custom_call.1} parent=5 // pred_region
      %s142 = ssub.s32 %s9, 1
      %p143 = scmp.lt.s32.totalorder %s14, 1
      %s144 = scalar_select %p143, %s14, 1
      %s145 = smul.addr %s144, 22
      %s146 = smul.addr %s145, 4
      %s147 = scalar_lea.vmem %s0, %s146
      %p148 = pneg %p35
      %p149 = pneg %p32
      %p150 = pneg %p56
      %p151 = pneg %p53
      %p152 = pneg %p77
      %p153 = pneg %p74
      %p154 = pneg %p103
      %p155 = pneg %p100
      %p156 = scmp.lt.s32.totalorder %s14, 1
      %s157 = scalar_select %p156, %s14, 1
      %s158 = smul.addr %s157, 20
      %s159 = smul.addr %s158, 4
      %s160 = scalar_lea.vmem %s3, %s159
      %p161 = scmp.lt.s32.totalorder %s14, 1
      %s162 = scalar_select %p161, %s14, 1
      %s163 = smul.addr %s162, 22
      %s164 = smul.addr %s163, 4
      %s165 = scalar_lea.vmem %s0, %s164
      %p166 = scmp.lt.s32.totalorder %s14, 1
      %s167 = scalar_select %p166, %s14, 1
      %s168 = smul.addr %s167, 20
      %s169 = smul.addr %s168, 4
      %s170 = scalar_lea.vmem %s3, %s169
      %v172 = vld [vmem:[%s2] sm:$0x1]
      %v173 = vld [vmem:[%s1] sm:$0xf]
      %v174 = vld [vmem:[%s1 + $0x4] sm:$0xf]
      %v175 = vld [vmem:[%s1 + $0x8] sm:$0xf]
      %v176 = vld [vmem:[%s1 + $0xc] sm:$0xf]
      %v177 = vld [vmem:[%s1 + $0x10] sm:$0xf]
      %v178 = vld [vmem:[%s1 + $0x14] sm:$0xf]
      %v179 = vld [vmem:[%s1 + $0x18] sm:$0xf]
      %v180 = vld [vmem:[%s1 + $0x1c] sm:$0xf]
      %s181 = scalar_lea.vmem %s1, 32
      %v182 = vld [vmem:[%s181] sm:$0xf]
      %v183 = vld [vmem:[%s181 + $0x4] sm:$0xf]
      %v184 = vld [vmem:[%s181 + $0x8] sm:$0xf]
      %v185 = vld [vmem:[%s181 + $0xc] sm:$0xf]
      %v186 = vld [vmem:[%s181 + $0x10] sm:$0xf]
      %v187 = vld [vmem:[%s181 + $0x14] sm:$0xf]
      %v188 = vld [vmem:[%s181 + $0x18] sm:$0xf]
      %v189 = vld [vmem:[%s181 + $0x1c] sm:$0xf]
      %s190 = scalar_lea.vmem %s1, 64
      %v191 = vld [vmem:[%s190] sm:$0xf]
      %v192 = vld [vmem:[%s190 + $0x4] sm:$0xf]
      %v193 = vld [vmem:[%s190 + $0x8] sm:$0xf]
      %v194 = vld [vmem:[%s190 + $0xc] sm:$0xf]
      %v195 = vld [vmem:[%s190 + $0x10] sm:$0xf]
      %v196 = vld [vmem:[%s190 + $0x14] sm:$0xf]
      %v197 = vld [vmem:[%s190 + $0x18] sm:$0xf]
      %v198 = vld [vmem:[%s190 + $0x1c] sm:$0xf]
      %s199 = scalar_lea.vmem %s1, 96
      %v200 = vld [vmem:[%s199] sm:$0xf]
      %v201 = vld [vmem:[%s199 + $0x4] sm:$0xf]
      %v202 = vld [vmem:[%s199 + $0x8] sm:$0xf]
      %v203 = vld [vmem:[%s199 + $0xc] sm:$0xf]
      %v204 = vld [vmem:[%s199 + $0x10] sm:$0xf]
      %v205 = vld [vmem:[%s199 + $0x14] sm:$0xf]
      %v206 = vld [vmem:[%s199 + $0x18] sm:$0xf]
      %v207 = vld [vmem:[%s199 + $0x1c] sm:$0xf]
      %v208 = vld [vmem:[%s165] sm:$0xf]
      %v209 = vld [vmem:[%s165 + $0x4] sm:$0x1]
      %v210 = vld [vmem:[%s165 + $0x4] sm:$0x3]
      %v213 = vunpack.c.l.b16 %v208
      %v214 = vunpack.c.l.b16 %v210
      %v215 = vpack.c.b16 %v214, %v213
      %v217 = vshrl.u32 %v215, 16
      %v219 = vshll.u32 %v215, 16
      %v221 = vrot.slane %v219, 1
      %v222 = vor.u32 %v217, %v221
      %v231 = vunpack.c.l.b16 %v182
      %v232 = vunpack.c.l.b16 %v183
      %v233 = vunpack.c.l.b16 %v184
      %v234 = vunpack.c.l.b16 %v185
      %v235 = vunpack.c.l.b16 %v186
      %v236 = vunpack.c.l.b16 %v187
      %v237 = vunpack.c.l.b16 %v188
      %v238 = vunpack.c.l.b16 %v189
      %v239 = vpack.c.b16 %v232, %v231
      %v240 = vpack.c.b16 %v234, %v233
      %v241 = vpack.c.b16 %v236, %v235
      %v242 = vpack.c.b16 %v238, %v237
      %vm247 = vcmask 523264
      %v249 = vsel %vm247, %v222, 0
      %251 = vmatprep.subr.bf16.mxu0 0
      %252 = vmatpush1.bf16.msra.mxu0 %v239
      %253 = vmatprep.subr.bf16.mxu0 0
      %254 = vmatpush1.bf16.msra.mxu0 %v240
      %255 = vmatprep.subr.bf16.mxu0 0
      %256 = vmatpush1.bf16.msra.mxu0 %v241
      %257 = vmatprep.subr.bf16.mxu0 0
      %258 = vmatpush1.bf16.msra.mxu0 %v242
      %259 = vmatprep.subr.bf16.mxu0 0
      %260 = vmatpush1.bf16.msra.mxu0 0
      %261 = vmatprep.subr.bf16.mxu0 0
      %262 = vmatpush1.bf16.msra.mxu0 0
      %263 = vmatprep.subr.bf16.mxu0 0
      %264 = vmatpush1.bf16.msra.mxu0 0
      %265 = vmatprep.subr.bf16.mxu0 0
      %266 = vmatpush1.bf16.msra.mxu0 0
      %267 = vmatprep.subr.bf16.mxu0 0
      %268 = vmatpush1.bf16.msra.mxu0 0
      %269 = vmatprep.subr.bf16.mxu0 0
      %270 = vmatpush1.bf16.msra.mxu0 0
      %271 = vmatprep.subr.bf16.mxu0 0
      %272 = vmatpush1.bf16.msra.mxu0 0
      %273 = vmatprep.subr.bf16.mxu0 0
      %274 = vmatpush1.bf16.msra.mxu0 0
      %275 = vmatprep.subr.bf16.mxu0 0
      %276 = vmatpush1.bf16.msra.mxu0 0
      %277 = vmatprep.subr.bf16.mxu0 0
      %278 = vmatpush1.bf16.msra.mxu0 0
      %279 = vmatprep.subr.bf16.mxu0 0
      %280 = vmatpush1.bf16.msra.mxu0 0
      %281 = vmatprep.subr.bf16.mxu0 0
      %282 = vmatpush1.bf16.msra.mxu0 0
      %283 = vmatprep.mubr.bf16.mxu0 0
      %284 = vmatmul.mubr.bf16.gmra.mrb[0].mxu0 %v249
      %v285 = vpop.f32.mrb[0].mxu0
      %v286 = vadd.f32 0.0, %v285
      %v287 = vpop.f32.mrb[0].mxu0
      %v288 = vpop.f32.mrb[0].mxu0
      %v289 = vadd.f32 0.0, %v288
      %v290 = vpop.f32.mrb[0].mxu0
      %291 = vdwg.mxu0
      %v293 = vunpack.c.l.b16 %v209
      %v294 = vpack.c.b16 %v293, %v213
      %v303 = vunpack.c.l.b16 %v173
      %v304 = vunpack.c.l.b16 %v174
      %v305 = vunpack.c.l.b16 %v175
      %v306 = vunpack.c.l.b16 %v176
      %v307 = vunpack.c.l.b16 %v177
      %v308 = vunpack.c.l.b16 %v178
      %v309 = vunpack.c.l.b16 %v179
      %v310 = vunpack.c.l.b16 %v180
      %v311 = vpack.c.b16 %v304, %v303
      %v312 = vpack.c.b16 %v306, %v305
      %v313 = vpack.c.b16 %v308, %v307
      %v314 = vpack.c.b16 %v310, %v309
      %v320 = vsel %vm247, %v294, 0
      %322 = vmatprep.subr.bf16.mxu0 0
      %323 = vmatpush1.bf16.msra.mxu0 %v311
      %324 = vmatprep.subr.bf16.mxu0 0
      %325 = vmatpush1.bf16.msra.mxu0 %v312
      %326 = vmatprep.subr.bf16.mxu0 0
      %327 = vmatpush1.bf16.msra.mxu0 %v313
      %328 = vmatprep.subr.bf16.mxu0 0
      %329 = vmatpush1.bf16.msra.mxu0 %v314
      %330 = vmatprep.subr.bf16.mxu0 0
      %331 = vmatpush1.bf16.msra.mxu0 0
      %332 = vmatprep.subr.bf16.mxu0 0
      %333 = vmatpush1.bf16.msra.mxu0 0
      %334 = vmatprep.subr.bf16.mxu0 0
      %335 = vmatpush1.bf16.msra.mxu0 0
      %336 = vmatprep.subr.bf16.mxu0 0
      %337 = vmatpush1.bf16.msra.mxu0 0
      %338 = vmatprep.subr.bf16.mxu0 0
      %339 = vmatpush1.bf16.msra.mxu0 0
      %340 = vmatprep.subr.bf16.mxu0 0
      %341 = vmatpush1.bf16.msra.mxu0 0
      %342 = vmatprep.subr.bf16.mxu0 0
      %343 = vmatpush1.bf16.msra.mxu0 0
      %344 = vmatprep.subr.bf16.mxu0 0
      %345 = vmatpush1.bf16.msra.mxu0 0
      %346 = vmatprep.subr.bf16.mxu0 0
      %347 = vmatpush1.bf16.msra.mxu0 0
      %348 = vmatprep.subr.bf16.mxu0 0
      %349 = vmatpush1.bf16.msra.mxu0 0
      %350 = vmatprep.subr.bf16.mxu0 0
      %351 = vmatpush1.bf16.msra.mxu0 0
      %352 = vmatprep.subr.bf16.mxu0 0
      %353 = vmatpush1.bf16.msra.mxu0 0
      %354 = vmatprep.mubr.bf16.mxu0 0
      %355 = vmatmul.mubr.bf16.gmra.mrb[0].mxu0 %v320
      %v356 = vpop.f32.mrb[0].mxu0
      %v357 = vadd.f32 %v286, %v356
      %v358 = vpop.f32.mrb[0].mxu0
      %v359 = vpop.f32.mrb[0].mxu0
      %v360 = vadd.f32 %v289, %v359
      %v361 = vpop.f32.mrb[0].mxu0
      %362 = vdwg.mxu0
      %s363 = scalar_lea.vmem %s165, 8
      %v364 = vld [vmem:[%s363] sm:$0xf]
      %v365 = vld [vmem:[%s363 + $0x4] sm:$0x1]
      %v368 = vunpack.c.l.b16 %v364
      %v369 = vunpack.c.l.b16 %v365
      %v370 = vpack.c.b16 %v369, %v368
      %v379 = vunpack.c.l.b16 %v191
      %v380 = vunpack.c.l.b16 %v192
      %v381 = vunpack.c.l.b16 %v193
      %v382 = vunpack.c.l.b16 %v194
      %v383 = vunpack.c.l.b16 %v195
      %v384 = vunpack.c.l.b16 %v196
      %v385 = vunpack.c.l.b16 %v197
      %v386 = vunpack.c.l.b16 %v198
      %v387 = vpack.c.b16 %v380, %v379
      %v388 = vpack.c.b16 %v382, %v381
      %v389 = vpack.c.b16 %v384, %v383
      %v390 = vpack.c.b16 %v386, %v385
      %v396 = vsel %vm247, %v370, 0
      %398 = vmatprep.subr.bf16.mxu0 0
      %399 = vmatpush1.bf16.msra.mxu0 %v387
      %400 = vmatprep.subr.bf16.mxu0 0
      %401 = vmatpush1.bf16.msra.mxu0 %v388
      %402 = vmatprep.subr.bf16.mxu0 0
      %403 = vmatpush1.bf16.msra.mxu0 %v389
      %404 = vmatprep.subr.bf16.mxu0 0
      %405 = vmatpush1.bf16.msra.mxu0 %v390
      %406 = vmatprep.subr.bf16.mxu0 0
      %407 = vmatpush1.bf16.msra.mxu0 0
      %408 = vmatprep.subr.bf16.mxu0 0
      %409 = vmatpush1.bf16.msra.mxu0 0
      %410 = vmatprep.subr.bf16.mxu0 0
      %411 = vmatpush1.bf16.msra.mxu0 0
      %412 = vmatprep.subr.bf16.mxu0 0
      %413 = vmatpush1.bf16.msra.mxu0 0
      %414 = vmatprep.subr.bf16.mxu0 0
      %415 = vmatpush1.bf16.msra.mxu0 0
      %416 = vmatprep.subr.bf16.mxu0 0
      %417 = vmatpush1.bf16.msra.mxu0 0
      %418 = vmatprep.subr.bf16.mxu0 0
      %419 = vmatpush1.bf16.msra.mxu0 0
      %420 = vmatprep.subr.bf16.mxu0 0
      %421 = vmatpush1.bf16.msra.mxu0 0
      %422 = vmatprep.subr.bf16.mxu0 0
      %423 = vmatpush1.bf16.msra.mxu0 0
      %424 = vmatprep.subr.bf16.mxu0 0
      %425 = vmatpush1.bf16.msra.mxu0 0
      %426 = vmatprep.subr.bf16.mxu0 0
      %427 = vmatpush1.bf16.msra.mxu0 0
      %428 = vmatprep.subr.bf16.mxu0 0
      %429 = vmatpush1.bf16.msra.mxu0 0
      %430 = vmatprep.mubr.bf16.mxu0 0
      %431 = vmatmul.mubr.bf16.gmra.mrb[0].mxu0 %v396
      %v432 = vpop.f32.mrb[0].mxu0
      %v433 = vadd.f32 0.0, %v432
      %v434 = vpop.f32.mrb[0].mxu0
      %v435 = vpop.f32.mrb[0].mxu0
      %v436 = vadd.f32 0.0, %v435
      %v437 = vpop.f32.mrb[0].mxu0
      %438 = vdwg.mxu0
      %v439 = vadd.f32 %v357, %v433
      %v440 = vadd.f32 %v360, %v436
      %v441 = vld [vmem:[%s363 + $0x4] sm:$0x3]
      %v443 = vunpack.c.l.b16 %v441
      %v444 = vpack.c.b16 %v443, %v368
      %v446 = vshrl.u32 %v444, 16
      %v448 = vshll.u32 %v444, 16
      %v450 = vrot.slane %v448, 1
      %v451 = vor.u32 %v446, %v450
      %v460 = vunpack.c.l.b16 %v200
      %v461 = vunpack.c.l.b16 %v201
      %v462 = vunpack.c.l.b16 %v202
      %v463 = vunpack.c.l.b16 %v203
      %v464 = vunpack.c.l.b16 %v204
      %v465 = vunpack.c.l.b16 %v205
      %v466 = vunpack.c.l.b16 %v206
      %v467 = vunpack.c.l.b16 %v207
      %v468 = vpack.c.b16 %v461, %v460
      %v469 = vpack.c.b16 %v463, %v462
      %v470 = vpack.c.b16 %v465, %v464
      %v471 = vpack.c.b16 %v467, %v466
      %v477 = vsel %vm247, %v451, 0
      %479 = vmatprep.subr.bf16.mxu0 0
      %480 = vmatpush1.bf16.msra.mxu0 %v468
      %481 = vmatprep.subr.bf16.mxu0 0
      %482 = vmatpush1.bf16.msra.mxu0 %v469
      %483 = vmatprep.subr.bf16.mxu0 0
      %484 = vmatpush1.bf16.msra.mxu0 %v470
      %485 = vmatprep.subr.bf16.mxu0 0
      %486 = vmatpush1.bf16.msra.mxu0 %v471
      %487 = vmatprep.subr.bf16.mxu0 0
      %488 = vmatpush1.bf16.msra.mxu0 0
      %489 = vmatprep.subr.bf16.mxu0 0
      %490 = vmatpush1.bf16.msra.mxu0 0
      %491 = vmatprep.subr.bf16.mxu0 0
      %492 = vmatpush1.bf16.msra.mxu0 0
      %493 = vmatprep.subr.bf16.mxu0 0
      %494 = vmatpush1.bf16.msra.mxu0 0
      %495 = vmatprep.subr.bf16.mxu0 0
      %496 = vmatpush1.bf16.msra.mxu0 0
      %497 = vmatprep.subr.bf16.mxu0 0
      %498 = vmatpush1.bf16.msra.mxu0 0
      %499 = vmatprep.subr.bf16.mxu0 0
      %500 = vmatpush1.bf16.msra.mxu0 0
      %501 = vmatprep.subr.bf16.mxu0 0
      %502 = vmatpush1.bf16.msra.mxu0 0
      %503 = vmatprep.subr.bf16.mxu0 0
      %504 = vmatpush1.bf16.msra.mxu0 0
      %505 = vmatprep.subr.bf16.mxu0 0
      %506 = vmatpush1.bf16.msra.mxu0 0
      %507 = vmatprep.subr.bf16.mxu0 0
      %508 = vmatpush1.bf16.msra.mxu0 0
      %509 = vmatprep.subr.bf16.mxu0 0
      %510 = vmatpush1.bf16.msra.mxu0 0
      %511 = vmatprep.mubr.bf16.mxu0 0
      %512 = vmatmul.mubr.bf16.gmra.mrb[0].mxu0 %v477
      %v513 = vpop.f32.mrb[0].mxu0
      %v514 = vadd.f32 0.0, %v513
      %v515 = vpop.f32.mrb[0].mxu0
      %v516 = vpop.f32.mrb[0].mxu0
      %v517 = vadd.f32 0.0, %v516
      %v518 = vpop.f32.mrb[0].mxu0
      %519 = vdwg.mxu0
      %v520 = vadd.f32 %v439, %v514
      %v521 = vadd.f32 %v440, %v517
      %v523 = vlaneseq
      %v524 = vshrl.u32 %v523, 7
      %v525 = vsub.s32 0, %v524
      %v526 = vrot.slane %v172, %v525
      %v528 = vadd.f32 %v520, %v526
      %v529 = vadd.f32 %v521, %v526
      %v530 = vmax.f32 %v528, 0.0
      %v531 = vmax.f32 %v529, 0.0
      %v532 = vpack.c.bf16 %v531, %v530
      %v534 = vunpack.c.l.b16 %v532
      %v535 = vunpack.c.h.b16 %v532
      %v536 = vpack.c.b16 %v534, %v534
      %v537 = vpack.c.b16 %v535, %v535
      %vm540 = vcmask 257024
      %541 = vst.msk [vmem:[%s170] sm:$0xf] %vm540, %v536
      %vm542 = vcmask 253952
      %543 = vst.msk [vmem:[%s170 + $0x4] sm:$0x1] %vm542, %v537
      %v544 = vld [vmem:[%s363] sm:$0xf]
      %v545 = vld [vmem:[%s363 + $0x4] sm:$0x1]
      %v546 = vld [vmem:[%s363 + $0x4] sm:$0x3]
      %v549 = vunpack.c.l.b16 %v544
      %v550 = vunpack.c.l.b16 %v546
      %v551 = vpack.c.b16 %v550, %v549
      %v553 = vshrl.u32 %v551, 16
      %v555 = vshll.u32 %v551, 16
      %v557 = vrot.slane %v555, 1
      %v558 = vor.u32 %v553, %v557
      %v560 = vsel %vm247, %v558, 0
      %562 = vmatprep.subr.bf16.mxu0 0
      %563 = vmatpush1.bf16.msra.mxu0 %v239
      %564 = vmatprep.subr.bf16.mxu0 0
      %565 = vmatpush1.bf16.msra.mxu0 %v240
      %566 = vmatprep.subr.bf16.mxu0 0
      %567 = vmatpush1.bf16.msra.mxu0 %v241
      %568 = vmatprep.subr.bf16.mxu0 0
      %569 = vmatpush1.bf16.msra.mxu0 %v242
      %570 = vmatprep.subr.bf16.mxu0 0
      %571 = vmatpush1.bf16.msra.mxu0 0
      %572 = vmatprep.subr.bf16.mxu0 0
      %573 = vmatpush1.bf16.msra.mxu0 0
      %574 = vmatprep.subr.bf16.mxu0 0
      %575 = vmatpush1.bf16.msra.mxu0 0
      %576 = vmatprep.subr.bf16.mxu0 0
      %577 = vmatpush1.bf16.msra.mxu0 0
      %578 = vmatprep.subr.bf16.mxu0 0
      %579 = vmatpush1.bf16.msra.mxu0 0
      %580 = vmatprep.subr.bf16.mxu0 0
      %581 = vmatpush1.bf16.msra.mxu0 0
      %582 = vmatprep.subr.bf16.mxu0 0
      %583 = vmatpush1.bf16.msra.mxu0 0
      %584 = vmatprep.subr.bf16.mxu0 0
      %585 = vmatpush1.bf16.msra.mxu0 0
      %586 = vmatprep.subr.bf16.mxu0 0
      %587 = vmatpush1.bf16.msra.mxu0 0
      %588 = vmatprep.subr.bf16.mxu0 0
      %589 = vmatpush1.bf16.msra.mxu0 0
      %590 = vmatprep.subr.bf16.mxu0 0
      %591 = vmatpush1.bf16.msra.mxu0 0
      %592 = vmatprep.subr.bf16.mxu0 0
      %593 = vmatpush1.bf16.msra.mxu0 0
      %594 = vmatprep.mubr.bf16.mxu0 0
      %595 = vmatmul.mubr.bf16.gmra.mrb[0].mxu0 %v560
      %v596 = vpop.f32.mrb[0].mxu0
      %v597 = vadd.f32 0.0, %v596
      %v598 = vpop.f32.mrb[0].mxu0
      %v599 = vpop.f32.mrb[0].mxu0
      %v600 = vadd.f32 0.0, %v599
      %v601 = vpop.f32.mrb[0].mxu0
      %602 = vdwg.mxu0
      %v604 = vunpack.c.l.b16 %v545
      %v605 = vpack.c.b16 %v604, %v549
      %v607 = vsel %vm247, %v605, 0
      %609 = vmatprep.subr.bf16.mxu0 0
      %610 = vmatpush1.bf16.msra.mxu0 %v311
      %611 = vmatprep.subr.bf16.mxu0 0
      %612 = vmatpush1.bf16.msra.mxu0 %v312
      %613 = vmatprep.subr.bf16.mxu0 0
      %614 = vmatpush1.bf16.msra.mxu0 %v313
      %615 = vmatprep.subr.bf16.mxu0 0
      %616 = vmatpush1.bf16.msra.mxu0 %v314
      %617 = vmatprep.subr.bf16.mxu0 0
      %618 = vmatpush1.bf16.msra.mxu0 0
      %619 = vmatprep.subr.bf16.mxu0 0
      %620 = vmatpush1.bf16.msra.mxu0 0
      %621 = vmatprep.subr.bf16.mxu0 0
      %622 = vmatpush1.bf16.msra.mxu0 0
      %623 = vmatprep.subr.bf16.mxu0 0
      %624 = vmatpush1.bf16.msra.mxu0 0
      %625 = vmatprep.subr.bf16.mxu0 0
      %626 = vmatpush1.bf16.msra.mxu0 0
      %627 = vmatprep.subr.bf16.mxu0 0
      %628 = vmatpush1.bf16.msra.mxu0 0
      %629 = vmatprep.subr.bf16.mxu0 0
      %630 = vmatpush1.bf16.msra.mxu0 0
      %631 = vmatprep.subr.bf16.mxu0 0
      %632 = vmatpush1.bf16.msra.mxu0 0
      %633 = vmatprep.subr.bf16.mxu0 0
      %634 = vmatpush1.bf16.msra.mxu0 0
      %635 = vmatprep.subr.bf16.mxu0 0
      %636 = vmatpush1.bf16.msra.mxu0 0
      %637 = vmatprep.subr.bf16.mxu0 0
      %638 = vmatpush1.bf16.msra.mxu0 0
      %639 = vmatprep.subr.bf16.mxu0 0
      %640 = vmatpush1.bf16.msra.mxu0 0
      %641 = vmatprep.mubr.bf16.mxu0 0
      %642 = vmatmul.mubr.bf16.gmra.mrb[0].mxu0 %v607
      %v643 = vpop.f32.mrb[0].mxu0
      %v644 = vadd.f32 %v597, %v643
      %v645 = vpop.f32.mrb[0].mxu0
      %v646 = vpop.f32.mrb[0].mxu0
      %v647 = vadd.f32 %v600, %v646
      %v648 = vpop.f32.mrb[0].mxu0
      %649 = vdwg.mxu0
      %s650 = scalar_lea.vmem %s165, 16
      %v651 = vld [vmem:[%s650] sm:$0xf]
      %v652 = vld [vmem:[%s650 + $0x4] sm:$0x1]
      %v655 = vunpack.c.l.b16 %v651
      %v656 = vunpack.c.l.b16 %v652
      %v657 = vpack.c.b16 %v656, %v655
      %v659 = vsel %vm247, %v657, 0
      %661 = vmatprep.subr.bf16.mxu0 0
      %662 = vmatpush1.bf16.msra.mxu0 %v387
      %663 = vmatprep.subr.bf16.mxu0 0
      %664 = vmatpush1.bf16.msra.mxu0 %v388
      %665 = vmatprep.subr.bf16.mxu0 0
      %666 = vmatpush1.bf16.msra.mxu0 %v389
      %667 = vmatprep.subr.bf16.mxu0 0
      %668 = vmatpush1.bf16.msra.mxu0 %v390
      %669 = vmatprep.subr.bf16.mxu0 0
      %670 = vmatpush1.bf16.msra.mxu0 0
      %671 = vmatprep.subr.bf16.mxu0 0
      %672 = vmatpush1.bf16.msra.mxu0 0
      %673 = vmatprep.subr.bf16.mxu0 0
      %674 = vmatpush1.bf16.msra.mxu0 0
      %675 = vmatprep.subr.bf16.mxu0 0
      %676 = vmatpush1.bf16.msra.mxu0 0
      %677 = vmatprep.subr.bf16.mxu0 0
      %678 = vmatpush1.bf16.msra.mxu0 0
      %679 = vmatprep.subr.bf16.mxu0 0
      %680 = vmatpush1.bf16.msra.mxu0 0
      %681 = vmatprep.subr.bf16.mxu0 0
      %682 = vmatpush1.bf16.msra.mxu0 0
      %683 = vmatprep.subr.bf16.mxu0 0
      %684 = vmatpush1.bf16.msra.mxu0 0
      %685 = vmatprep.subr.bf16.mxu0 0
      %686 = vmatpush1.bf16.msra.mxu0 0
      %687 = vmatprep.subr.bf16.mxu0 0
      %688 = vmatpush1.bf16.msra.mxu0 0
      %689 = vmatprep.subr.bf16.mxu0 0
      %690 = vmatpush1.bf16.msra.mxu0 0
      %691 = vmatprep.subr.bf16.mxu0 0
      %692 = vmatpush1.bf16.msra.mxu0 0
      %693 = vmatprep.mubr.bf16.mxu0 0
      %694 = vmatmul.mubr.bf16.gmra.mrb[0].mxu0 %v659
      %v695 = vpop.f32.mrb[0].mxu0
      %v696 = vadd.f32 0.0, %v695
      %v697 = vpop.f32.mrb[0].mxu0
      %v698 = vpop.f32.mrb[0].mxu0
      %v699 = vadd.f32 0.0, %v698
      %v700 = vpop.f32.mrb[0].mxu0
      %701 = vdwg.mxu0
      %v702 = vadd.f32 %v644, %v696
      %v703 = vadd.f32 %v647, %v699
      %v704 = vld [vmem:[%s650 + $0x4] sm:$0x3]
      %v706 = vunpack.c.l.b16 %v704
      %v707 = vpack.c.b16 %v706, %v655
      %v709 = vshrl.u32 %v707, 16
      %v711 = vshll.u32 %v707, 16
      %v713 = vrot.slane %v711, 1
      %v714 = vor.u32 %v709, %v713
      %v716 = vsel %vm247, %v714, 0
      %718 = vmatprep.subr.bf16.mxu0 0
      %719 = vmatpush1.bf16.msra.mxu0 %v468
      %720 = vmatprep.subr.bf16.mxu0 0
      %721 = vmatpush1.bf16.msra.mxu0 %v469
      %722 = vmatprep.subr.bf16.mxu0 0
      %723 = vmatpush1.bf16.msra.mxu0 %v470
      %724 = vmatprep.subr.bf16.mxu0 0
      %725 = vmatpush1.bf16.msra.mxu0 %v471
      %726 = vmatprep.subr.bf16.mxu0 0
      %727 = vmatpush1.bf16.msra.mxu0 0
      %728 = vmatprep.subr.bf16.mxu0 0
      %729 = vmatpush1.bf16.msra.mxu0 0
      %730 = vmatprep.subr.bf16.mxu0 0
      %731 = vmatpush1.bf16.msra.mxu0 0
      %732 = vmatprep.subr.bf16.mxu0 0
      %733 = vmatpush1.bf16.msra.mxu0 0
      %734 = vmatprep.subr.bf16.mxu0 0
      %735 = vmatpush1.bf16.msra.mxu0 0
      %736 = vmatprep.subr.bf16.mxu0 0
      %737 = vmatpush1.bf16.msra.mxu0 0
      %738 = vmatprep.subr.bf16.mxu0 0
      %739 = vmatpush1.bf16.msra.mxu0 0
      %740 = vmatprep.subr.bf16.mxu0 0
      %741 = vmatpush1.bf16.msra.mxu0 0
      %742 = vmatprep.subr.bf16.mxu0 0
      %743 = vmatpush1.bf16.msra.mxu0 0
      %744 = vmatprep.subr.bf16.mxu0 0
      %745 = vmatpush1.bf16.msra.mxu0 0
      %746 = vmatprep.subr.bf16.mxu0 0
      %747 = vmatpush1.bf16.msra.mxu0 0
      %748 = vmatprep.subr.bf16.mxu0 0
      %749 = vmatpush1.bf16.msra.mxu0 0
      %750 = vmatprep.mubr.bf16.mxu0 0
      %751 = vmatmul.mubr.bf16.gmra.mrb[0].mxu0 %v716
      %v752 = vpop.f32.mrb[0].mxu0
      %v753 = vadd.f32 0.0, %v752
      %v754 = vpop.f32.mrb[0].mxu0
      %v755 = vpop.f32.mrb[0].mxu0
      %v756 = vadd.f32 0.0, %v755
      %v757 = vpop.f32.mrb[0].mxu0
      %758 = vdwg.mxu0
      %v759 = vadd.f32 %v702, %v753
      %v760 = vadd.f32 %v703, %v756
      %v761 = vadd.f32 %v759, %v526
      %v762 = vadd.f32 %v760, %v526
      %v763 = vmax.f32 %v761, 0.0
      %v764 = vmax.f32 %v762, 0.0
      %v765 = vpack.c.bf16 %v764, %v763
      %v767 = vunpack.c.l.b16 %v765
      %v768 = vunpack.c.h.b16 %v765
      %v769 = vpack.c.b16 %v767, %v767
      %v770 = vpack.c.b16 %v768, %v768
      %s773 = scalar_lea.vmem %s170, 8
      %774 = vst.msk [vmem:[%s773] sm:$0xf] %vm540, %v769
      %775 = vst.msk [vmem:[%s773 + $0x4] sm:$0x1] %vm542, %v770
      %v776 = vld [vmem:[%s650] sm:$0xf]
      %v777 = vld [vmem:[%s650 + $0x4] sm:$0x1]
      %v778 = vld [vmem:[%s650 + $0x4] sm:$0x3]
      %v781 = vunpack.c.l.b16 %v776
      %v782 = vunpack.c.l.b16 %v778
      %v783 = vpack.c.b16 %v782, %v781
      %v785 = vshrl.u32 %v783, 16
      %v787 = vshll.u32 %v783, 16
      %v789 = vrot.slane %v787, 1
      %v790 = vor.u32 %v785, %v789
      %v792 = vsel %vm247, %v790, 0
      %794 = vmatprep.subr.bf16.mxu0 0
      %795 = vmatpush1.bf16.msra.mxu0 %v239
      %796 = vmatprep.subr.bf16.mxu0 0
      %797 = vmatpush1.bf16.msra.mxu0 %v240
      %798 = vmatprep.subr.bf16.mxu0 0
      %799 = vmatpush1.bf16.msra.mxu0 %v241
      %800 = vmatprep.subr.bf16.mxu0 0
      %801 = vmatpush1.bf16.msra.mxu0 %v242
      %802 = vmatprep.subr.bf16.mxu0 0
      %803 = vmatpush1.bf16.msra.mxu0 0
      %804 = vmatprep.subr.bf16.mxu0 0
      %805 = vmatpush1.bf16.msra.mxu0 0
      %806 = vmatprep.subr.bf16.mxu0 0
      %807 = vmatpush1.bf16.msra.mxu0 0
      %808 = vmatprep.subr.bf16.mxu0 0
      %809 = vmatpush1.bf16.msra.mxu0 0
      %810 = vmatprep.subr.bf16.mxu0 0
      %811 = vmatpush1.bf16.msra.mxu0 0
      %812 = vmatprep.subr.bf16.mxu0 0
      %813 = vmatpush1.bf16.msra.mxu0 0
      %814 = vmatprep.subr.bf16.mxu0 0
      %815 = vmatpush1.bf16.msra.mxu0 0
      %816 = vmatprep.subr.bf16.mxu0 0
      %817 = vmatpush1.bf16.msra.mxu0 0
      %818 = vmatprep.subr.bf16.mxu0 0
      %819 = vmatpush1.bf16.msra.mxu0 0
      %820 = vmatprep.subr.bf16.mxu0 0
      %821 = vmatpush1.bf16.msra.mxu0 0
      %822 = vmatprep.subr.bf16.mxu0 0
      %823 = vmatpush1.bf16.msra.mxu0 0
      %824 = vmatprep.subr.bf16.mxu0 0
      %825 = vmatpush1.bf16.msra.mxu0 0
      %826 = vmatprep.mubr.bf16.mxu0 0
      %827 = vmatmul.mubr.bf16.gmra.mrb[0].mxu0 %v792
      %v828 = vpop.f32.mrb[0].mxu0
      %v829 = vadd.f32 0.0, %v828
      %v830 = vpop.f32.mrb[0].mxu0
      %v831 = vpop.f32.mrb[0].mxu0
      %v832 = vadd.f32 0.0, %v831
      %v833 = vpop.f32.mrb[0].mxu0
      %834 = vdwg.mxu0
      %v836 = vunpack.c.l.b16 %v777
      %v837 = vpack.c.b16 %v836, %v781
      %v839 = vsel %vm247, %v837, 0
      %841 = vmatprep.subr.bf16.mxu0 0
      %842 = vmatpush1.bf16.msra.mxu0 %v311
      %843 = vmatprep.subr.bf16.mxu0 0
      %844 = vmatpush1.bf16.msra.mxu0 %v312
      %845 = vmatprep.subr.bf16.mxu0 0
      %846 = vmatpush1.bf16.msra.mxu0 %v313
      %847 = vmatprep.subr.bf16.mxu0 0
      %848 = vmatpush1.bf16.msra.mxu0 %v314
      %849 = vmatprep.subr.bf16.mxu0 0
      %850 = vmatpush1.bf16.msra.mxu0 0
      %851 = vmatprep.subr.bf16.mxu0 0
      %852 = vmatpush1.bf16.msra.mxu0 0
      %853 = vmatprep.subr.bf16.mxu0 0
      %854 = vmatpush1.bf16.msra.mxu0 0
      %855 = vmatprep.subr.bf16.mxu0 0
      %856 = vmatpush1.bf16.msra.mxu0 0
      %857 = vmatprep.subr.bf16.mxu0 0
      %858 = vmatpush1.bf16.msra.mxu0 0
      %859 = vmatprep.subr.bf16.mxu0 0
      %860 = vmatpush1.bf16.msra.mxu0 0
      %861 = vmatprep.subr.bf16.mxu0 0
      %862 = vmatpush1.bf16.msra.mxu0 0
      %863 = vmatprep.subr.bf16.mxu0 0
      %864 = vmatpush1.bf16.msra.mxu0 0
      %865 = vmatprep.subr.bf16.mxu0 0
      %866 = vmatpush1.bf16.msra.mxu0 0
      %867 = vmatprep.subr.bf16.mxu0 0
      %868 = vmatpush1.bf16.msra.mxu0 0
      %869 = vmatprep.subr.bf16.mxu0 0
      %870 = vmatpush1.bf16.msra.mxu0 0
      %871 = vmatprep.subr.bf16.mxu0 0
      %872 = vmatpush1.bf16.msra.mxu0 0
      %873 = vmatprep.mubr.bf16.mxu0 0
      %874 = vmatmul.mubr.bf16.gmra.mrb[0].mxu0 %v839
      %v875 = vpop.f32.mrb[0].mxu0
      %v876 = vadd.f32 %v829, %v875
      %v877 = vpop.f32.mrb[0].mxu0
      %v878 = vpop.f32.mrb[0].mxu0
      %v879 = vadd.f32 %v832, %v878
      %v880 = vpop.f32.mrb[0].mxu0
      %881 = vdwg.mxu0
      %s882 = scalar_lea.vmem %s165, 24
      %v883 = vld [vmem:[%s882] sm:$0xf]
      %v884 = vld [vmem:[%s882 + $0x4] sm:$0x1]
      %v887 = vunpack.c.l.b16 %v883
      %v888 = vunpack.c.l.b16 %v884
      %v889 = vpack.c.b16 %v888, %v887
      %v891 = vsel %vm247, %v889, 0
      %893 = vmatprep.subr.bf16.mxu0 0
      %894 = vmatpush1.bf16.msra.mxu0 %v387
      %895 = vmatprep.subr.bf16.mxu0 0
      %896 = vmatpush1.bf16.msra.mxu0 %v388
      %897 = vmatprep.subr.bf16.mxu0 0
      %898 = vmatpush1.bf16.msra.mxu0 %v389
      %899 = vmatprep.subr.bf16.mxu0 0
      %900 = vmatpush1.bf16.msra.mxu0 %v390
      %901 = vmatprep.subr.bf16.mxu0 0
      %902 = vmatpush1.bf16.msra.mxu0 0
      %903 = vmatprep.subr.bf16.mxu0 0
      %904 = vmatpush1.bf16.msra.mxu0 0
      %905 = vmatprep.subr.bf16.mxu0 0
      %906 = vmatpush1.bf16.msra.mxu0 0
      %907 = vmatprep.subr.bf16.mxu0 0
      %908 = vmatpush1.bf16.msra.mxu0 0
      %909 = vmatprep.subr.bf16.mxu0 0
      %910 = vmatpush1.bf16.msra.mxu0 0
      %911 = vmatprep.subr.bf16.mxu0 0
      %912 = vmatpush1.bf16.msra.mxu0 0
      %913 = vmatprep.subr.bf16.mxu0 0
      %914 = vmatpush1.bf16.msra.mxu0 0
      %915 = vmatprep.subr.bf16.mxu0 0
      %916 = vmatpush1.bf16.msra.mxu0 0
      %917 = vmatprep.subr.bf16.mxu0 0
      %918 = vmatpush1.bf16.msra.mxu0 0
      %919 = vmatprep.subr.bf16.mxu0 0
      %920 = vmatpush1.bf16.msra.mxu0 0
      %921 = vmatprep.subr.bf16.mxu0 0
      %922 = vmatpush1.bf16.msra.mxu0 0
      %923 = vmatprep.subr.bf16.mxu0 0
      %924 = vmatpush1.bf16.msra.mxu0 0
      %925 = vmatprep.mubr.bf16.mxu0 0
      %926 = vmatmul.mubr.bf16.gmra.mrb[0].mxu0 %v891
      %v927 = vpop.f32.mrb[0].mxu0
      %v928 = vadd.f32 0.0, %v927
      %v929 = vpop.f32.mrb[0].mxu0
      %v930 = vpop.f32.mrb[0].mxu0
      %v931 = vadd.f32 0.0, %v930
      %v932 = vpop.f32.mrb[0].mxu0
      %933 = vdwg.mxu0
      %v934 = vadd.f32 %v876, %v928
      %v935 = vadd.f32 %v879, %v931
      %v936 = vld [vmem:[%s882 + $0x4] sm:$0x3]
      %v938 = vunpack.c.l.b16 %v936
      %v939 = vpack.c.b16 %v938, %v887
      %v941 = vshrl.u32 %v939, 16
      %v943 = vshll.u32 %v939, 16
      %v945 = vrot.slane %v943, 1
      %v946 = vor.u32 %v941, %v945
      %v948 = vsel %vm247, %v946, 0
      %950 = vmatprep.subr.bf16.mxu0 0
      %951 = vmatpush1.bf16.msra.mxu0 %v468
      %952 = vmatprep.subr.bf16.mxu0 0
      %953 = vmatpush1.bf16.msra.mxu0 %v469
      %954 = vmatprep.subr.bf16.mxu0 0
      %955 = vmatpush1.bf16.msra.mxu0 %v470
      %956 = vmatprep.subr.bf16.mxu0 0
      %957 = vmatpush1.bf16.msra.mxu0 %v471
      %958 = vmatprep.subr.bf16.mxu0 0
      %959 = vmatpush1.bf16.msra.mxu0 0
      %960 = vmatprep.subr.bf16.mxu0 0
      %961 = vmatpush1.bf16.msra.mxu0 0
      %962 = vmatprep.subr.bf16.mxu0 0
      %963 = vmatpush1.bf16.msra.mxu0 0
      %964 = vmatprep.subr.bf16.mxu0 0
      %965 = vmatpush1.bf16.msra.mxu0 0
      %966 = vmatprep.subr.bf16.mxu0 0
      %967 = vmatpush1.bf16.msra.mxu0 0
      %968 = vmatprep.subr.bf16.mxu0 0
      %969 = vmatpush1.bf16.msra.mxu0 0
      %970 = vmatprep.subr.bf16.mxu0 0
      %971 = vmatpush1.bf16.msra.mxu0 0
      %972 = vmatprep.subr.bf16.mxu0 0
      %973 = vmatpush1.bf16.msra.mxu0 0
      %974 = vmatprep.subr.bf16.mxu0 0
      %975 = vmatpush1.bf16.msra.mxu0 0
      %976 = vmatprep.subr.bf16.mxu0 0
      %977 = vmatpush1.bf16.msra.mxu0 0
      %978 = vmatprep.subr.bf16.mxu0 0
      %979 = vmatpush1.bf16.msra.mxu0 0
      %980 = vmatprep.subr.bf16.mxu0 0
      %981 = vmatpush1.bf16.msra.mxu0 0
      %982 = vmatprep.mubr.bf16.mxu0 0
      %983 = vmatmul.mubr.bf16.gmra.mrb[0].mxu0 %v948
      %v984 = vpop.f32.mrb[0].mxu0
      %v985 = vadd.f32 0.0, %v984
      %v986 = vpop.f32.mrb[0].mxu0
      %v987 = vpop.f32.mrb[0].mxu0
      %v988 = vadd.f32 0.0, %v987
      %v989 = vpop.f32.mrb[0].mxu0
      %990 = vdwg.mxu0
      %v991 = vadd.f32 %v934, %v985
      %v992 = vadd.f32 %v935, %v988
      %v993 = vadd.f32 %v991, %v526
      %v994 = vadd.f32 %v992, %v526
      %v995 = vmax.f32 %v993, 0.0
      %v996 = vmax.f32 %v994, 0.0
      %v997 = vpack.c.bf16 %v996, %v995
      %v999 = vunpack.c.l.b16 %v997
      %v1000 = vunpack.c.h.b16 %v997
      %v1001 = vpack.c.b16 %v999, %v999
      %v1002 = vpack.c.b16 %v1000, %v1000
      %s1005 = scalar_lea.vmem %s170, 16
      %1006 = vst.msk [vmem:[%s1005] sm:$0xf] %vm540, %v1001
      %1007 = vst.msk [vmem:[%s1005 + $0x4] sm:$0x1] %vm542, %v1002
      %v1008 = vld [vmem:[%s882] sm:$0xf]
      %v1009 = vld [vmem:[%s882 + $0x4] sm:$0x1]
      %v1010 = vld [vmem:[%s882 + $0x4] sm:$0x3]
      %v1013 = vunpack.c.l.b16 %v1008
      %v1014 = vunpack.c.l.b16 %v1010
      %v1015 = vpack.c.b16 %v1014, %v1013
      %v1017 = vshrl.u32 %v1015, 16
      %v1019 = vshll.u32 %v1015, 16
      %v1021 = vrot.slane %v1019, 1
      %v1022 = vor.u32 %v1017, %v1021
      %v1024 = vsel %vm247, %v1022, 0
      %1026 = vmatprep.subr.bf16.mxu0 0
      %1027 = vmatpush1.bf16.msra.mxu0 %v239
      %1028 = vmatprep.subr.bf16.mxu0 0
      %1029 = vmatpush1.bf16.msra.mxu0 %v240
      %1030 = vmatprep.subr.bf16.mxu0 0
      %1031 = vmatpush1.bf16.msra.mxu0 %v241
      %1032 = vmatprep.subr.bf16.mxu0 0
      %1033 = vmatpush1.bf16.msra.mxu0 %v242
      %1034 = vmatprep.subr.bf16.mxu0 0
      %1035 = vmatpush1.bf16.msra.mxu0 0
      %1036 = vmatprep.subr.bf16.mxu0 0
      %1037 = vmatpush1.bf16.msra.mxu0 0
      %1038 = vmatprep.subr.bf16.mxu0 0
      %1039 = vmatpush1.bf16.msra.mxu0 0
      %1040 = vmatprep.subr.bf16.mxu0 0
      %1041 = vmatpush1.bf16.msra.mxu0 0
      %1042 = vmatprep.subr.bf16.mxu0 0
      %1043 = vmatpush1.bf16.msra.mxu0 0
      %1044 = vmatprep.subr.bf16.mxu0 0
      %1045 = vmatpush1.bf16.msra.mxu0 0
      %1046 = vmatprep.subr.bf16.mxu0 0
      %1047 = vmatpush1.bf16.msra.mxu0 0
      %1048 = vmatprep.subr.bf16.mxu0 0
      %1049 = vmatpush1.bf16.msra.mxu0 0
      %1050 = vmatprep.subr.bf16.mxu0 0
      %1051 = vmatpush1.bf16.msra.mxu0 0
      %1052 = vmatprep.subr.bf16.mxu0 0
      %1053 = vmatpush1.bf16.msra.mxu0 0
      %1054 = vmatprep.subr.bf16.mxu0 0
      %1055 = vmatpush1.bf16.msra.mxu0 0
      %1056 = vmatprep.subr.bf16.mxu0 0
      %1057 = vmatpush1.bf16.msra.mxu0 0
      %1058 = vmatprep.mubr.bf16.mxu0 0
      %1059 = vmatmul.mubr.bf16.gmra.mrb[0].mxu0 %v1024
      %v1060 = vpop.f32.mrb[0].mxu0
      %v1061 = vadd.f32 0.0, %v1060
      %v1062 = vpop.f32.mrb[0].mxu0
      %v1063 = vpop.f32.mrb[0].mxu0
      %v1064 = vadd.f32 0.0, %v1063
      %v1065 = vpop.f32.mrb[0].mxu0
      %1066 = vdwg.mxu0
      %v1068 = vunpack.c.l.b16 %v1009
      %v1069 = vpack.c.b16 %v1068, %v1013
      %v1071 = vsel %vm247, %v1069, 0
      %1073 = vmatprep.subr.bf16.mxu0 0
      %1074 = vmatpush1.bf16.msra.mxu0 %v311
      %1075 = vmatprep.subr.bf16.mxu0 0
      %1076 = vmatpush1.bf16.msra.mxu0 %v312
      %1077 = vmatprep.subr.bf16.mxu0 0
      %1078 = vmatpush1.bf16.msra.mxu0 %v313
      %1079 = vmatprep.subr.bf16.mxu0 0
      %1080 = vmatpush1.bf16.msra.mxu0 %v314
      %1081 = vmatprep.subr.bf16.mxu0 0
      %1082 = vmatpush1.bf16.msra.mxu0 0
      %1083 = vmatprep.subr.bf16.mxu0 0
      %1084 = vmatpush1.bf16.msra.mxu0 0
      %1085 = vmatprep.subr.bf16.mxu0 0
      %1086 = vmatpush1.bf16.msra.mxu0 0
      %1087 = vmatprep.subr.bf16.mxu0 0
      %1088 = vmatpush1.bf16.msra.mxu0 0
      %1089 = vmatprep.subr.bf16.mxu0 0
      %1090 = vmatpush1.bf16.msra.mxu0 0
      %1091 = vmatprep.subr.bf16.mxu0 0
      %1092 = vmatpush1.bf16.msra.mxu0 0
      %1093 = vmatprep.subr.bf16.mxu0 0
      %1094 = vmatpush1.bf16.msra.mxu0 0
      %1095 = vmatprep.subr.bf16.mxu0 0
      %1096 = vmatpush1.bf16.msra.mxu0 0
      %1097 = vmatprep.subr.bf16.mxu0 0
      %1098 = vmatpush1.bf16.msra.mxu0 0
      %1099 = vmatprep.subr.bf16.mxu0 0
      %1100 = vmatpush1.bf16.msra.mxu0 0
      %1101 = vmatprep.subr.bf16.mxu0 0
      %1102 = vmatpush1.bf16.msra.mxu0 0
      %1103 = vmatprep.subr.bf16.mxu0 0
      %1104 = vmatpush1.bf16.msra.mxu0 0
      %1105 = vmatprep.mubr.bf16.mxu0 0
      %1106 = vmatmul.mubr.bf16.gmra.mrb[0].mxu0 %v1071
      %v1107 = vpop.f32.mrb[0].mxu0
      %v1108 = vadd.f32 %v1061, %v1107
      %v1109 = vpop.f32.mrb[0].mxu0
      %v1110 = vpop.f32.mrb[0].mxu0
      %v1111 = vadd.f32 %v1064, %v1110
      %v1112 = vpop.f32.mrb[0].mxu0
      %1113 = vdwg.mxu0
      %s1114 = scalar_lea.vmem %s165, 32
      %v1115 = vld [vmem:[%s1114] sm:$0xf]
      %v1116 = vld [vmem:[%s1114 + $0x4] sm:$0x1]
      %v1119 = vunpack.c.l.b16 %v1115
      %v1120 = vunpack.c.l.b16 %v1116
      %v1121 = vpack.c.b16 %v1120, %v1119
      %v1123 = vsel %vm247, %v1121, 0
      %1125 = vmatprep.subr.bf16.mxu0 0
      %1126 = vmatpush1.bf16.msra.mxu0 %v387
      %1127 = vmatprep.subr.bf16.mxu0 0
      %1128 = vmatpush1.bf16.msra.mxu0 %v388
      %1129 = vmatprep.subr.bf16.mxu0 0
      %1130 = vmatpush1.bf16.msra.mxu0 %v389
      %1131 = vmatprep.subr.bf16.mxu0 0
      %1132 = vmatpush1.bf16.msra.mxu0 %v390
      %1133 = vmatprep.subr.bf16.mxu0 0
      %1134 = vmatpush1.bf16.msra.mxu0 0
      %1135 = vmatprep.subr.bf16.mxu0 0
      %1136 = vmatpush1.bf16.msra.mxu0 0
      %1137 = vmatprep.subr.bf16.mxu0 0
      %1138 = vmatpush1.bf16.msra.mxu0 0
      %1139 = vmatprep.subr.bf16.mxu0 0
      %1140 = vmatpush1.bf16.msra.mxu0 0
      %1141 = vmatprep.subr.bf16.mxu0 0
      %1142 = vmatpush1.bf16.msra.mxu0 0
      %1143 = vmatprep.subr.bf16.mxu0 0
      %1144 = vmatpush1.bf16.msra.mxu0 0
      %1145 = vmatprep.subr.bf16.mxu0 0
      %1146 = vmatpush1.bf16.msra.mxu0 0
      %1147 = vmatprep.subr.bf16.mxu0 0
      %1148 = vmatpush1.bf16.msra.mxu0 0
      %1149 = vmatprep.subr.bf16.mxu0 0
      %1150 = vmatpush1.bf16.msra.mxu0 0
      %1151 = vmatprep.subr.bf16.mxu0 0
      %1152 = vmatpush1.bf16.msra.mxu0 0
      %1153 = vmatprep.subr.bf16.mxu0 0
      %1154 = vmatpush1.bf16.msra.mxu0 0
      %1155 = vmatprep.subr.bf16.mxu0 0
      %1156 = vmatpush1.bf16.msra.mxu0 0
      %1157 = vmatprep.mubr.bf16.mxu0 0
      %1158 = vmatmul.mubr.bf16.gmra.mrb[0].mxu0 %v1123
      %v1159 = vpop.f32.mrb[0].mxu0
      %v1160 = vadd.f32 0.0, %v1159
      %v1161 = vpop.f32.mrb[0].mxu0
      %v1162 = vpop.f32.mrb[0].mxu0
      %v1163 = vadd.f32 0.0, %v1162
      %v1164 = vpop.f32.mrb[0].mxu0
      %1165 = vdwg.mxu0
      %v1166 = vadd.f32 %v1108, %v1160
      %v1167 = vadd.f32 %v1111, %v1163
      %v1168 = vld [vmem:[%s1114 + $0x4] sm:$0x3]
      %v1170 = vunpack.c.l.b16 %v1168
      %v1171 = vpack.c.b16 %v1170, %v1119
      %v1173 = vshrl.u32 %v1171, 16
      %v1175 = vshll.u32 %v1171, 16
      %v1177 = vrot.slane %v1175, 1
      %v1178 = vor.u32 %v1173, %v1177
      %v1180 = vsel %vm247, %v1178, 0
      %1182 = vmatprep.subr.bf16.mxu0 0
      %1183 = vmatpush1.bf16.msra.mxu0 %v468
      %1184 = vmatprep.subr.bf16.mxu0 0
      %1185 = vmatpush1.bf16.msra.mxu0 %v469
      %1186 = vmatprep.subr.bf16.mxu0 0
      %1187 = vmatpush1.bf16.msra.mxu0 %v470
      %1188 = vmatprep.subr.bf16.mxu0 0
      %1189 = vmatpush1.bf16.msra.mxu0 %v471
      %1190 = vmatprep.subr.bf16.mxu0 0
      %1191 = vmatpush1.bf16.msra.mxu0 0
      %1192 = vmatprep.subr.bf16.mxu0 0
      %1193 = vmatpush1.bf16.msra.mxu0 0
      %1194 = vmatprep.subr.bf16.mxu0 0
      %1195 = vmatpush1.bf16.msra.mxu0 0
      %1196 = vmatprep.subr.bf16.mxu0 0
      %1197 = vmatpush1.bf16.msra.mxu0 0
      %1198 = vmatprep.subr.bf16.mxu0 0
      %1199 = vmatpush1.bf16.msra.mxu0 0
      %1200 = vmatprep.subr.bf16.mxu0 0
      %1201 = vmatpush1.bf16.msra.mxu0 0
      %1202 = vmatprep.subr.bf16.mxu0 0
      %1203 = vmatpush1.bf16.msra.mxu0 0
      %1204 = vmatprep.subr.bf16.mxu0 0
      %1205 = vmatpush1.bf16.msra.mxu0 0
      %1206 = vmatprep.subr.bf16.mxu0 0
      %1207 = vmatpush1.bf16.msra.mxu0 0
      %1208 = vmatprep.subr.bf16.mxu0 0
      %1209 = vmatpush1.bf16.msra.mxu0 0
      %1210 = vmatprep.subr.bf16.mxu0 0
      %1211 = vmatpush1.bf16.msra.mxu0 0
      %1212 = vmatprep.subr.bf16.mxu0 0
      %1213 = vmatpush1.bf16.msra.mxu0 0
      %1214 = vmatprep.mubr.bf16.mxu0 0
      %1215 = vmatmul.mubr.bf16.gmra.mrb[0].mxu0 %v1180
      %v1216 = vpop.f32.mrb[0].mxu0
      %v1217 = vadd.f32 0.0, %v1216
      %v1218 = vpop.f32.mrb[0].mxu0
      %v1219 = vpop.f32.mrb[0].mxu0
      %v1220 = vadd.f32 0.0, %v1219
      %v1221 = vpop.f32.mrb[0].mxu0
      %1222 = vdwg.mxu0
      %v1223 = vadd.f32 %v1166, %v1217
      %v1224 = vadd.f32 %v1167, %v1220
      %v1225 = vadd.f32 %v1223, %v526
      %v1226 = vadd.f32 %v1224, %v526
      %v1227 = vmax.f32 %v1225, 0.0
      %v1228 = vmax.f32 %v1226, 0.0
      %v1229 = vpack.c.bf16 %v1228, %v1227
      %v1231 = vunpack.c.l.b16 %v1229
      %v1232 = vunpack.c.h.b16 %v1229
      %v1233 = vpack.c.b16 %v1231, %v1231
      %v1234 = vpack.c.b16 %v1232, %v1232
      %s1237 = scalar_lea.vmem %s170, 24
      %1238 = vst.msk [vmem:[%s1237] sm:$0xf] %vm540, %v1233
      %1239 = vst.msk [vmem:[%s1237 + $0x4] sm:$0x1] %vm542, %v1234
      %v1240 = vld [vmem:[%s1114] sm:$0xf]
      %v1241 = vld [vmem:[%s1114 + $0x4] sm:$0x1]
      %v1242 = vld [vmem:[%s1114 + $0x4] sm:$0x3]
      %v1245 = vunpack.c.l.b16 %v1240
      %v1246 = vunpack.c.l.b16 %v1242
      %v1247 = vpack.c.b16 %v1246, %v1245
      %v1249 = vshrl.u32 %v1247, 16
      %v1251 = vshll.u32 %v1247, 16
      %v1253 = vrot.slane %v1251, 1
      %v1254 = vor.u32 %v1249, %v1253
      %v1256 = vsel %vm247, %v1254, 0
      %1258 = vmatprep.subr.bf16.mxu0 0
      %1259 = vmatpush1.bf16.msra.mxu0 %v239
      %1260 = vmatprep.subr.bf16.mxu0 0
      %1261 = vmatpush1.bf16.msra.mxu0 %v240
      %1262 = vmatprep.subr.bf16.mxu0 0
      %1263 = vmatpush1.bf16.msra.mxu0 %v241
      %1264 = vmatprep.subr.bf16.mxu0 0
      %1265 = vmatpush1.bf16.msra.mxu0 %v242
      %1266 = vmatprep.subr.bf16.mxu0 0
      %1267 = vmatpush1.bf16.msra.mxu0 0
      %1268 = vmatprep.subr.bf16.mxu0 0
      %1269 = vmatpush1.bf16.msra.mxu0 0
      %1270 = vmatprep.subr.bf16.mxu0 0
      %1271 = vmatpush1.bf16.msra.mxu0 0
      %1272 = vmatprep.subr.bf16.mxu0 0
      %1273 = vmatpush1.bf16.msra.mxu0 0
      %1274 = vmatprep.subr.bf16.mxu0 0
      %1275 = vmatpush1.bf16.msra.mxu0 0
      %1276 = vmatprep.subr.bf16.mxu0 0
      %1277 = vmatpush1.bf16.msra.mxu0 0
      %1278 = vmatprep.subr.bf16.mxu0 0
      %1279 = vmatpush1.bf16.msra.mxu0 0
      %1280 = vmatprep.subr.bf16.mxu0 0
      %1281 = vmatpush1.bf16.msra.mxu0 0
      %1282 = vmatprep.subr.bf16.mxu0 0
      %1283 = vmatpush1.bf16.msra.mxu0 0
      %1284 = vmatprep.subr.bf16.mxu0 0
      %1285 = vmatpush1.bf16.msra.mxu0 0
      %1286 = vmatprep.subr.bf16.mxu0 0
      %1287 = vmatpush1.bf16.msra.mxu0 0
      %1288 = vmatprep.subr.bf16.mxu0 0
      %1289 = vmatpush1.bf16.msra.mxu0 0
      %1290 = vmatprep.mubr.bf16.mxu0 0
      %1291 = vmatmul.mubr.bf16.gmra.mrb[0].mxu0 %v1256
      %v1292 = vpop.f32.mrb[0].mxu0
      %v1293 = vadd.f32 0.0, %v1292
      %v1294 = vpop.f32.mrb[0].mxu0
      %v1295 = vpop.f32.mrb[0].mxu0
      %v1296 = vadd.f32 0.0, %v1295
      %v1297 = vpop.f32.mrb[0].mxu0
      %1298 = vdwg.mxu0
      %v1300 = vunpack.c.l.b16 %v1241
      %v1301 = vpack.c.b16 %v1300, %v1245
      %v1303 = vsel %vm247, %v1301, 0
      %1305 = vmatprep.subr.bf16.mxu0 0
      %1306 = vmatpush1.bf16.msra.mxu0 %v311
      %1307 = vmatprep.subr.bf16.mxu0 0
      %1308 = vmatpush1.bf16.msra.mxu0 %v312
      %1309 = vmatprep.subr.bf16.mxu0 0
      %1310 = vmatpush1.bf16.msra.mxu0 %v313
      %1311 = vmatprep.subr.bf16.mxu0 0
      %1312 = vmatpush1.bf16.msra.mxu0 %v314
      %1313 = vmatprep.subr.bf16.mxu0 0
      %1314 = vmatpush1.bf16.msra.mxu0 0
      %1315 = vmatprep.subr.bf16.mxu0 0
      %1316 = vmatpush1.bf16.msra.mxu0 0
      %1317 = vmatprep.subr.bf16.mxu0 0
      %1318 = vmatpush1.bf16.msra.mxu0 0
      %1319 = vmatprep.subr.bf16.mxu0 0
      %1320 = vmatpush1.bf16.msra.mxu0 0
      %1321 = vmatprep.subr.bf16.mxu0 0
      %1322 = vmatpush1.bf16.msra.mxu0 0
      %1323 = vmatprep.subr.bf16.mxu0 0
      %1324 = vmatpush1.bf16.msra.mxu0 0
      %1325 = vmatprep.subr.bf16.mxu0 0
      %1326 = vmatpush1.bf16.msra.mxu0 0
      %1327 = vmatprep.subr.bf16.mxu0 0
      %1328 = vmatpush1.bf16.msra.mxu0 0
      %1329 = vmatprep.subr.bf16.mxu0 0
      %1330 = vmatpush1.bf16.msra.mxu0 0
      %1331 = vmatprep.subr.bf16.mxu0 0
      %1332 = vmatpush1.bf16.msra.mxu0 0
      %1333 = vmatprep.subr.bf16.mxu0 0
      %1334 = vmatpush1.bf16.msra.mxu0 0
      %1335 = vmatprep.subr.bf16.mxu0 0
      %1336 = vmatpush1.bf16.msra.mxu0 0
      %1337 = vmatprep.mubr.bf16.mxu0 0
      %1338 = vmatmul.mubr.bf16.gmra.mrb[0].mxu0 %v1303
      %v1339 = vpop.f32.mrb[0].mxu0
      %v1340 = vadd.f32 %v1293, %v1339
      %v1341 = vpop.f32.mrb[0].mxu0
      %v1342 = vpop.f32.mrb[0].mxu0
      %v1343 = vadd.f32 %v1296, %v1342
      %v1344 = vpop.f32.mrb[0].mxu0
      %1345 = vdwg.mxu0
      %s1346 = scalar_lea.vmem %s165, 40
      %v1347 = vld [vmem:[%s1346] sm:$0xf]
      %v1348 = vld [vmem:[%s1346 + $0x4] sm:$0x1]
      %v1351 = vunpack.c.l.b16 %v1347
      %v1352 = vunpack.c.l.b16 %v1348
      %v1353 = vpack.c.b16 %v1352, %v1351
      %v1355 = vsel %vm247, %v1353, 0
      %1357 = vmatprep.subr.bf16.mxu0 0
      %1358 = vmatpush1.bf16.msra.mxu0 %v387
      %1359 = vmatprep.subr.bf16.mxu0 0
      %1360 = vmatpush1.bf16.msra.mxu0 %v388
      %1361 = vmatprep.subr.bf16.mxu0 0
      %1362 = vmatpush1.bf16.msra.mxu0 %v389
      %1363 = vmatprep.subr.bf16.mxu0 0
      %1364 = vmatpush1.bf16.msra.mxu0 %v390
      %1365 = vmatprep.subr.bf16.mxu0 0
      %1366 = vmatpush1.bf16.msra.mxu0 0
      %1367 = vmatprep.subr.bf16.mxu0 0
      %1368 = vmatpush1.bf16.msra.mxu0 0
      %1369 = vmatprep.subr.bf16.mxu0 0
      %1370 = vmatpush1.bf16.msra.mxu0 0
      %1371 = vmatprep.subr.bf16.mxu0 0
      %1372 = vmatpush1.bf16.msra.mxu0 0
      %1373 = vmatprep.subr.bf16.mxu0 0
      %1374 = vmatpush1.bf16.msra.mxu0 0
      %1375 = vmatprep.subr.bf16.mxu0 0
      %1376 = vmatpush1.bf16.msra.mxu0 0
      %1377 = vmatprep.subr.bf16.mxu0 0
      %1378 = vmatpush1.bf16.msra.mxu0 0
      %1379 = vmatprep.subr.bf16.mxu0 0
      %1380 = vmatpush1.bf16.msra.mxu0 0
      %1381 = vmatprep.subr.bf16.mxu0 0
      %1382 = vmatpush1.bf16.msra.mxu0 0
      %1383 = vmatprep.subr.bf16.mxu0 0
      %1384 = vmatpush1.bf16.msra.mxu0 0
      %1385 = vmatprep.subr.bf16.mxu0 0
      %1386 = vmatpush1.bf16.msra.mxu0 0
      %1387 = vmatprep.subr.bf16.mxu0 0
      %1388 = vmatpush1.bf16.msra.mxu0 0
      %1389 = vmatprep.mubr.bf16.mxu0 0
      %1390 = vmatmul.mubr.bf16.gmra.mrb[0].mxu0 %v1355
      %v1391 = vpop.f32.mrb[0].mxu0
      %v1392 = vadd.f32 0.0, %v1391
      %v1393 = vpop.f32.mrb[0].mxu0
      %v1394 = vpop.f32.mrb[0].mxu0
      %v1395 = vadd.f32 0.0, %v1394
      %v1396 = vpop.f32.mrb[0].mxu0
      %1397 = vdwg.mxu0
      %v1398 = vadd.f32 %v1340, %v1392
      %v1399 = vadd.f32 %v1343, %v1395
      %v1400 = vld [vmem:[%s1346 + $0x4] sm:$0x3]
      %v1402 = vunpack.c.l.b16 %v1400
      %v1403 = vpack.c.b16 %v1402, %v1351
      %v1405 = vshrl.u32 %v1403, 16
      %v1407 = vshll.u32 %v1403, 16
      %v1409 = vrot.slane %v1407, 1
      %v1410 = vor.u32 %v1405, %v1409
      %v1412 = vsel %vm247, %v1410, 0
      %1414 = vmatprep.subr.bf16.mxu0 0
      %1415 = vmatpush1.bf16.msra.mxu0 %v468
      %1416 = vmatprep.subr.bf16.mxu0 0
      %1417 = vmatpush1.bf16.msra.mxu0 %v469
      %1418 = vmatprep.subr.bf16.mxu0 0
      %1419 = vmatpush1.bf16.msra.mxu0 %v470
      %1420 = vmatprep.subr.bf16.mxu0 0
      %1421 = vmatpush1.bf16.msra.mxu0 %v471
      %1422 = vmatprep.subr.bf16.mxu0 0
      %1423 = vmatpush1.bf16.msra.mxu0 0
      %1424 = vmatprep.subr.bf16.mxu0 0
      %1425 = vmatpush1.bf16.msra.mxu0 0
      %1426 = vmatprep.subr.bf16.mxu0 0
      %1427 = vmatpush1.bf16.msra.mxu0 0
      %1428 = vmatprep.subr.bf16.mxu0 0
      %1429 = vmatpush1.bf16.msra.mxu0 0
      %1430 = vmatprep.subr.bf16.mxu0 0
      %1431 = vmatpush1.bf16.msra.mxu0 0
      %1432 = vmatprep.subr.bf16.mxu0 0
      %1433 = vmatpush1.bf16.msra.mxu0 0
      %1434 = vmatprep.subr.bf16.mxu0 0
      %1435 = vmatpush1.bf16.msra.mxu0 0
      %1436 = vmatprep.subr.bf16.mxu0 0
      %1437 = vmatpush1.bf16.msra.mxu0 0
      %1438 = vmatprep.subr.bf16.mxu0 0
      %1439 = vmatpush1.bf16.msra.mxu0 0
      %1440 = vmatprep.subr.bf16.mxu0 0
      %1441 = vmatpush1.bf16.msra.mxu0 0
      %1442 = vmatprep.subr.bf16.mxu0 0
      %1443 = vmatpush1.bf16.msra.mxu0 0
      %1444 = vmatprep.subr.bf16.mxu0 0
      %1445 = vmatpush1.bf16.msra.mxu0 0
      %1446 = vmatprep.mubr.bf16.mxu0 0
      %1447 = vmatmul.mubr.bf16.gmra.mrb[0].mxu0 %v1412
      %v1448 = vpop.f32.mrb[0].mxu0
      %v1449 = vadd.f32 0.0, %v1448
      %v1450 = vpop.f32.mrb[0].mxu0
      %v1451 = vpop.f32.mrb[0].mxu0
      %v1452 = vadd.f32 0.0, %v1451
      %v1453 = vpop.f32.mrb[0].mxu0
      %1454 = vdwg.mxu0
      %v1455 = vadd.f32 %v1398, %v1449
      %v1456 = vadd.f32 %v1399, %v1452
      %v1457 = vadd.f32 %v1455, %v526
      %v1458 = vadd.f32 %v1456, %v526
      %v1459 = vmax.f32 %v1457, 0.0
      %v1460 = vmax.f32 %v1458, 0.0
      %v1461 = vpack.c.bf16 %v1460, %v1459
      %v1463 = vunpack.c.l.b16 %v1461
      %v1464 = vunpack.c.h.b16 %v1461
      %v1465 = vpack.c.b16 %v1463, %v1463
      %v1466 = vpack.c.b16 %v1464, %v1464
      %s1469 = scalar_lea.vmem %s170, 32
      %1470 = vst.msk [vmem:[%s1469] sm:$0xf] %vm540, %v1465
      %1471 = vst.msk [vmem:[%s1469 + $0x4] sm:$0x1] %vm542, %v1466
      %v1472 = vld [vmem:[%s1346] sm:$0xf]
      %v1473 = vld [vmem:[%s1346 + $0x4] sm:$0x1]
      %v1474 = vld [vmem:[%s1346 + $0x4] sm:$0x3]
      %v1477 = vunpack.c.l.b16 %v1472
      %v1478 = vunpack.c.l.b16 %v1474
      %v1479 = vpack.c.b16 %v1478, %v1477
      %v1481 = vshrl.u32 %v1479, 16
      %v1483 = vshll.u32 %v1479, 16
      %v1485 = vrot.slane %v1483, 1
      %v1486 = vor.u32 %v1481, %v1485
      %v1488 = vsel %vm247, %v1486, 0
      %1490 = vmatprep.subr.bf16.mxu0 0
      %1491 = vmatpush1.bf16.msra.mxu0 %v239
      %1492 = vmatprep.subr.bf16.mxu0 0
      %1493 = vmatpush1.bf16.msra.mxu0 %v240
      %1494 = vmatprep.subr.bf16.mxu0 0
      %1495 = vmatpush1.bf16.msra.mxu0 %v241
      %1496 = vmatprep.subr.bf16.mxu0 0
      %1497 = vmatpush1.bf16.msra.mxu0 %v242
      %1498 = vmatprep.subr.bf16.mxu0 0
      %1499 = vmatpush1.bf16.msra.mxu0 0
      %1500 = vmatprep.subr.bf16.mxu0 0
      %1501 = vmatpush1.bf16.msra.mxu0 0
      %1502 = vmatprep.subr.bf16.mxu0 0
      %1503 = vmatpush1.bf16.msra.mxu0 0
      %1504 = vmatprep.subr.bf16.mxu0 0
      %1505 = vmatpush1.bf16.msra.mxu0 0
      %1506 = vmatprep.subr.bf16.mxu0 0
      %1507 = vmatpush1.bf16.msra.mxu0 0
      %1508 = vmatprep.subr.bf16.mxu0 0
      %1509 = vmatpush1.bf16.msra.mxu0 0
      %1510 = vmatprep.subr.bf16.mxu0 0
      %1511 = vmatpush1.bf16.msra.mxu0 0
      %1512 = vmatprep.subr.bf16.mxu0 0
      %1513 = vmatpush1.bf16.msra.mxu0 0
      %1514 = vmatprep.subr.bf16.mxu0 0
      %1515 = vmatpush1.bf16.msra.mxu0 0
      %1516 = vmatprep.subr.bf16.mxu0 0
      %1517 = vmatpush1.bf16.msra.mxu0 0
      %1518 = vmatprep.subr.bf16.mxu0 0
      %1519 = vmatpush1.bf16.msra.mxu0 0
      %1520 = vmatprep.subr.bf16.mxu0 0
      %1521 = vmatpush1.bf16.msra.mxu0 0
      %1522 = vmatprep.mubr.bf16.mxu0 0
      %1523 = vmatmul.mubr.bf16.gmra.mrb[0].mxu0 %v1488
      %v1524 = vpop.f32.mrb[0].mxu0
      %v1525 = vadd.f32 0.0, %v1524
      %v1526 = vpop.f32.mrb[0].mxu0
      %v1527 = vpop.f32.mrb[0].mxu0
      %v1528 = vadd.f32 0.0, %v1527
      %v1529 = vpop.f32.mrb[0].mxu0
      %1530 = vdwg.mxu0
      %v1532 = vunpack.c.l.b16 %v1473
      %v1533 = vpack.c.b16 %v1532, %v1477
      %v1535 = vsel %vm247, %v1533, 0
      %1537 = vmatprep.subr.bf16.mxu0 0
      %1538 = vmatpush1.bf16.msra.mxu0 %v311
      %1539 = vmatprep.subr.bf16.mxu0 0
      %1540 = vmatpush1.bf16.msra.mxu0 %v312
      %1541 = vmatprep.subr.bf16.mxu0 0
      %1542 = vmatpush1.bf16.msra.mxu0 %v313
      %1543 = vmatprep.subr.bf16.mxu0 0
      %1544 = vmatpush1.bf16.msra.mxu0 %v314
      %1545 = vmatprep.subr.bf16.mxu0 0
      %1546 = vmatpush1.bf16.msra.mxu0 0
      %1547 = vmatprep.subr.bf16.mxu0 0
      %1548 = vmatpush1.bf16.msra.mxu0 0
      %1549 = vmatprep.subr.bf16.mxu0 0
      %1550 = vmatpush1.bf16.msra.mxu0 0
      %1551 = vmatprep.subr.bf16.mxu0 0
      %1552 = vmatpush1.bf16.msra.mxu0 0
      %1553 = vmatprep.subr.bf16.mxu0 0
      %1554 = vmatpush1.bf16.msra.mxu0 0
      %1555 = vmatprep.subr.bf16.mxu0 0
      %1556 = vmatpush1.bf16.msra.mxu0 0
      %1557 = vmatprep.subr.bf16.mxu0 0
      %1558 = vmatpush1.bf16.msra.mxu0 0
      %1559 = vmatprep.subr.bf16.mxu0 0
      %1560 = vmatpush1.bf16.msra.mxu0 0
      %1561 = vmatprep.subr.bf16.mxu0 0
      %1562 = vmatpush1.bf16.msra.mxu0 0
      %1563 = vmatprep.subr.bf16.mxu0 0
      %1564 = vmatpush1.bf16.msra.mxu0 0
      %1565 = vmatprep.subr.bf16.mxu0 0
      %1566 = vmatpush1.bf16.msra.mxu0 0
      %1567 = vmatprep.subr.bf16.mxu0 0
      %1568 = vmatpush1.bf16.msra.mxu0 0
      %1569 = vmatprep.mubr.bf16.mxu0 0
      %1570 = vmatmul.mubr.bf16.gmra.mrb[0].mxu0 %v1535
      %v1571 = vpop.f32.mrb[0].mxu0
      %v1572 = vadd.f32 %v1525, %v1571
      %v1573 = vpop.f32.mrb[0].mxu0
      %v1574 = vpop.f32.mrb[0].mxu0
      %v1575 = vadd.f32 %v1528, %v1574
      %v1576 = vpop.f32.mrb[0].mxu0
      %1577 = vdwg.mxu0
      %s1578 = scalar_lea.vmem %s165, 48
      %v1579 = vld [vmem:[%s1578] sm:$0xf]
      %v1580 = vld [vmem:[%s1578 + $0x4] sm:$0x1]
      %v1583 = vunpack.c.l.b16 %v1579
      %v1584 = vunpack.c.l.b16 %v1580
      %v1585 = vpack.c.b16 %v1584, %v1583
      %v1587 = vsel %vm247, %v1585, 0
      %1589 = vmatprep.subr.bf16.mxu0 0
      %1590 = vmatpush1.bf16.msra.mxu0 %v387
      %1591 = vmatprep.subr.bf16.mxu0 0
      %1592 = vmatpush1.bf16.msra.mxu0 %v388
      %1593 = vmatprep.subr.bf16.mxu0 0
      %1594 = vmatpush1.bf16.msra.mxu0 %v389
      %1595 = vmatprep.subr.bf16.mxu0 0
      %1596 = vmatpush1.bf16.msra.mxu0 %v390
      %1597 = vmatprep.subr.bf16.mxu0 0
      %1598 = vmatpush1.bf16.msra.mxu0 0
      %1599 = vmatprep.subr.bf16.mxu0 0
      %1600 = vmatpush1.bf16.msra.mxu0 0
      %1601 = vmatprep.subr.bf16.mxu0 0
      %1602 = vmatpush1.bf16.msra.mxu0 0
      %1603 = vmatprep.subr.bf16.mxu0 0
      %1604 = vmatpush1.bf16.msra.mxu0 0
      %1605 = vmatprep.subr.bf16.mxu0 0
      %1606 = vmatpush1.bf16.msra.mxu0 0
      %1607 = vmatprep.subr.bf16.mxu0 0
      %1608 = vmatpush1.bf16.msra.mxu0 0
      %1609 = vmatprep.subr.bf16.mxu0 0
      %1610 = vmatpush1.bf16.msra.mxu0 0
      %1611 = vmatprep.subr.bf16.mxu0 0
      %1612 = vmatpush1.bf16.msra.mxu0 0
      %1613 = vmatprep.subr.bf16.mxu0 0
      %1614 = vmatpush1.bf16.msra.mxu0 0
      %1615 = vmatprep.subr.bf16.mxu0 0
      %1616 = vmatpush1.bf16.msra.mxu0 0
      %1617 = vmatprep.subr.bf16.mxu0 0
      %1618 = vmatpush1.bf16.msra.mxu0 0
      %1619 = vmatprep.subr.bf16.mxu0 0
      %1620 = vmatpush1.bf16.msra.mxu0 0
      %1621 = vmatprep.mubr.bf16.mxu0 0
      %1622 = vmatmul.mubr.bf16.gmra.mrb[0].mxu0 %v1587
      %v1623 = vpop.f32.mrb[0].mxu0
      %v1624 = vadd.f32 0.0, %v1623
      %v1625 = vpop.f32.mrb[0].mxu0
      %v1626 = vpop.f32.mrb[0].mxu0
      %v1627 = vadd.f32 0.0, %v1626
      %v1628 = vpop.f32.mrb[0].mxu0
      %1629 = vdwg.mxu0
      %v1630 = vadd.f32 %v1572, %v1624
      %v1631 = vadd.f32 %v1575, %v1627
      %v1632 = vld [vmem:[%s1578 + $0x4] sm:$0x3]
      %v1634 = vunpack.c.l.b16 %v1632
      %v1635 = vpack.c.b16 %v1634, %v1583
      %v1637 = vshrl.u32 %v1635, 16
      %v1639 = vshll.u32 %v1635, 16
      %v1641 = vrot.slane %v1639, 1
      %v1642 = vor.u32 %v1637, %v1641
      %v1644 = vsel %vm247, %v1642, 0
      %1646 = vmatprep.subr.bf16.mxu0 0
      %1647 = vmatpush1.bf16.msra.mxu0 %v468
      %1648 = vmatprep.subr.bf16.mxu0 0
      %1649 = vmatpush1.bf16.msra.mxu0 %v469
      %1650 = vmatprep.subr.bf16.mxu0 0
      %1651 = vmatpush1.bf16.msra.mxu0 %v470
      %1652 = vmatprep.subr.bf16.mxu0 0
      %1653 = vmatpush1.bf16.msra.mxu0 %v471
      %1654 = vmatprep.subr.bf16.mxu0 0
      %1655 = vmatpush1.bf16.msra.mxu0 0
      %1656 = vmatprep.subr.bf16.mxu0 0
      %1657 = vmatpush1.bf16.msra.mxu0 0
      %1658 = vmatprep.subr.bf16.mxu0 0
      %1659 = vmatpush1.bf16.msra.mxu0 0
      %1660 = vmatprep.subr.bf16.mxu0 0
      %1661 = vmatpush1.bf16.msra.mxu0 0
      %1662 = vmatprep.subr.bf16.mxu0 0
      %1663 = vmatpush1.bf16.msra.mxu0 0
      %1664 = vmatprep.subr.bf16.mxu0 0
      %1665 = vmatpush1.bf16.msra.mxu0 0
      %1666 = vmatprep.subr.bf16.mxu0 0
      %1667 = vmatpush1.bf16.msra.mxu0 0
      %1668 = vmatprep.subr.bf16.mxu0 0
      %1669 = vmatpush1.bf16.msra.mxu0 0
      %1670 = vmatprep.subr.bf16.mxu0 0
      %1671 = vmatpush1.bf16.msra.mxu0 0
      %1672 = vmatprep.subr.bf16.mxu0 0
      %1673 = vmatpush1.bf16.msra.mxu0 0
      %1674 = vmatprep.subr.bf16.mxu0 0
      %1675 = vmatpush1.bf16.msra.mxu0 0
      %1676 = vmatprep.subr.bf16.mxu0 0
      %1677 = vmatpush1.bf16.msra.mxu0 0
      %1678 = vmatprep.mubr.bf16.mxu0 0
      %1679 = vmatmul.mubr.bf16.gmra.mrb[0].mxu0 %v1644
      %v1680 = vpop.f32.mrb[0].mxu0
      %v1681 = vadd.f32 0.0, %v1680
      %v1682 = vpop.f32.mrb[0].mxu0
      %v1683 = vpop.f32.mrb[0].mxu0
      %v1684 = vadd.f32 0.0, %v1683
      %v1685 = vpop.f32.mrb[0].mxu0
      %1686 = vdwg.mxu0
      %v1687 = vadd.f32 %v1630, %v1681
      %v1688 = vadd.f32 %v1631, %v1684
      %v1689 = vadd.f32 %v1687, %v526
      %v1690 = vadd.f32 %v1688, %v526
      %v1691 = vmax.f32 %v1689, 0.0
      %v1692 = vmax.f32 %v1690, 0.0
      %v1693 = vpack.c.bf16 %v1692, %v1691
      %v1695 = vunpack.c.l.b16 %v1693
      %v1696 = vunpack.c.h.b16 %v1693
      %v1697 = vpack.c.b16 %v1695, %v1695
      %v1698 = vpack.c.b16 %v1696, %v1696
      %s1701 = scalar_lea.vmem %s170, 40
      %1702 = vst.msk [vmem:[%s1701] sm:$0xf] %vm540, %v1697
      %1703 = vst.msk [vmem:[%s1701 + $0x4] sm:$0x1] %vm542, %v1698
      %v1704 = vld [vmem:[%s1578] sm:$0xf]
      %v1705 = vld [vmem:[%s1578 + $0x4] sm:$0x1]
      %v1706 = vld [vmem:[%s1578 + $0x4] sm:$0x3]
      %v1709 = vunpack.c.l.b16 %v1704
      %v1710 = vunpack.c.l.b16 %v1706
      %v1711 = vpack.c.b16 %v1710, %v1709
      %v1713 = vshrl.u32 %v1711, 16
      %v1715 = vshll.u32 %v1711, 16
      %v1717 = vrot.slane %v1715, 1
      %v1718 = vor.u32 %v1713, %v1717
      %v1720 = vsel %vm247, %v1718, 0
      %1722 = vmatprep.subr.bf16.mxu0 0
      %1723 = vmatpush1.bf16.msra.mxu0 %v239
      %1724 = vmatprep.subr.bf16.mxu0 0
      %1725 = vmatpush1.bf16.msra.mxu0 %v240
      %1726 = vmatprep.subr.bf16.mxu0 0
      %1727 = vmatpush1.bf16.msra.mxu0 %v241
      %1728 = vmatprep.subr.bf16.mxu0 0
      %1729 = vmatpush1.bf16.msra.mxu0 %v242
      %1730 = vmatprep.subr.bf16.mxu0 0
      %1731 = vmatpush1.bf16.msra.mxu0 0
      %1732 = vmatprep.subr.bf16.mxu0 0
      %1733 = vmatpush1.bf16.msra.mxu0 0
      %1734 = vmatprep.subr.bf16.mxu0 0
      %1735 = vmatpush1.bf16.msra.mxu0 0
      %1736 = vmatprep.subr.bf16.mxu0 0
      %1737 = vmatpush1.bf16.msra.mxu0 0
      %1738 = vmatprep.subr.bf16.mxu0 0
      %1739 = vmatpush1.bf16.msra.mxu0 0
      %1740 = vmatprep.subr.bf16.mxu0 0
      %1741 = vmatpush1.bf16.msra.mxu0 0
      %1742 = vmatprep.subr.bf16.mxu0 0
      %1743 = vmatpush1.bf16.msra.mxu0 0
      %1744 = vmatprep.subr.bf16.mxu0 0
      %1745 = vmatpush1.bf16.msra.mxu0 0
      %1746 = vmatprep.subr.bf16.mxu0 0
      %1747 = vmatpush1.bf16.msra.mxu0 0
      %1748 = vmatprep.subr.bf16.mxu0 0
      %1749 = vmatpush1.bf16.msra.mxu0 0
      %1750 = vmatprep.subr.bf16.mxu0 0
      %1751 = vmatpush1.bf16.msra.mxu0 0
      %1752 = vmatprep.subr.bf16.mxu0 0
      %1753 = vmatpush1.bf16.msra.mxu0 0
      %1754 = vmatprep.mubr.bf16.mxu0 0
      %1755 = vmatmul.mubr.bf16.gmra.mrb[0].mxu0 %v1720
      %v1756 = vpop.f32.mrb[0].mxu0
      %v1757 = vadd.f32 0.0, %v1756
      %v1758 = vpop.f32.mrb[0].mxu0
      %v1759 = vpop.f32.mrb[0].mxu0
      %v1760 = vadd.f32 0.0, %v1759
      %v1761 = vpop.f32.mrb[0].mxu0
      %1762 = vdwg.mxu0
      %v1764 = vunpack.c.l.b16 %v1705
      %v1765 = vpack.c.b16 %v1764, %v1709
      %v1767 = vsel %vm247, %v1765, 0
      %1769 = vmatprep.subr.bf16.mxu0 0
      %1770 = vmatpush1.bf16.msra.mxu0 %v311
      %1771 = vmatprep.subr.bf16.mxu0 0
      %1772 = vmatpush1.bf16.msra.mxu0 %v312
      %1773 = vmatprep.subr.bf16.mxu0 0
      %1774 = vmatpush1.bf16.msra.mxu0 %v313
      %1775 = vmatprep.subr.bf16.mxu0 0
      %1776 = vmatpush1.bf16.msra.mxu0 %v314
      %1777 = vmatprep.subr.bf16.mxu0 0
      %1778 = vmatpush1.bf16.msra.mxu0 0
      %1779 = vmatprep.subr.bf16.mxu0 0
      %1780 = vmatpush1.bf16.msra.mxu0 0
      %1781 = vmatprep.subr.bf16.mxu0 0
      %1782 = vmatpush1.bf16.msra.mxu0 0
      %1783 = vmatprep.subr.bf16.mxu0 0
      %1784 = vmatpush1.bf16.msra.mxu0 0
      %1785 = vmatprep.subr.bf16.mxu0 0
      %1786 = vmatpush1.bf16.msra.mxu0 0
      %1787 = vmatprep.subr.bf16.mxu0 0
      %1788 = vmatpush1.bf16.msra.mxu0 0
      %1789 = vmatprep.subr.bf16.mxu0 0
      %1790 = vmatpush1.bf16.msra.mxu0 0
      %1791 = vmatprep.subr.bf16.mxu0 0
      %1792 = vmatpush1.bf16.msra.mxu0 0
      %1793 = vmatprep.subr.bf16.mxu0 0
      %1794 = vmatpush1.bf16.msra.mxu0 0
      %1795 = vmatprep.subr.bf16.mxu0 0
      %1796 = vmatpush1.bf16.msra.mxu0 0
      %1797 = vmatprep.subr.bf16.mxu0 0
      %1798 = vmatpush1.bf16.msra.mxu0 0
      %1799 = vmatprep.subr.bf16.mxu0 0
      %1800 = vmatpush1.bf16.msra.mxu0 0
      %1801 = vmatprep.mubr.bf16.mxu0 0
      %1802 = vmatmul.mubr.bf16.gmra.mrb[0].mxu0 %v1767
      %v1803 = vpop.f32.mrb[0].mxu0
      %v1804 = vadd.f32 %v1757, %v1803
      %v1805 = vpop.f32.mrb[0].mxu0
      %v1806 = vpop.f32.mrb[0].mxu0
      %v1807 = vadd.f32 %v1760, %v1806
      %v1808 = vpop.f32.mrb[0].mxu0
      %1809 = vdwg.mxu0
      %s1810 = scalar_lea.vmem %s165, 56
      %v1811 = vld [vmem:[%s1810] sm:$0xf]
      %v1812 = vld [vmem:[%s1810 + $0x4] sm:$0x1]
      %v1815 = vunpack.c.l.b16 %v1811
      %v1816 = vunpack.c.l.b16 %v1812
      %v1817 = vpack.c.b16 %v1816, %v1815
      %v1819 = vsel %vm247, %v1817, 0
      %1821 = vmatprep.subr.bf16.mxu0 0
      %1822 = vmatpush1.bf16.msra.mxu0 %v387
      %1823 = vmatprep.subr.bf16.mxu0 0
      %1824 = vmatpush1.bf16.msra.mxu0 %v388
      %1825 = vmatprep.subr.bf16.mxu0 0
      %1826 = vmatpush1.bf16.msra.mxu0 %v389
      %1827 = vmatprep.subr.bf16.mxu0 0
      %1828 = vmatpush1.bf16.msra.mxu0 %v390
      %1829 = vmatprep.subr.bf16.mxu0 0
      %1830 = vmatpush1.bf16.msra.mxu0 0
      %1831 = vmatprep.subr.bf16.mxu0 0
      %1832 = vmatpush1.bf16.msra.mxu0 0
      %1833 = vmatprep.subr.bf16.mxu0 0
      %1834 = vmatpush1.bf16.msra.mxu0 0
      %1835 = vmatprep.subr.bf16.mxu0 0
      %1836 = vmatpush1.bf16.msra.mxu0 0
      %1837 = vmatprep.subr.bf16.mxu0 0
      %1838 = vmatpush1.bf16.msra.mxu0 0
      %1839 = vmatprep.subr.bf16.mxu0 0
      %1840 = vmatpush1.bf16.msra.mxu0 0
      %1841 = vmatprep.subr.bf16.mxu0 0
      %1842 = vmatpush1.bf16.msra.mxu0 0
      %1843 = vmatprep.subr.bf16.mxu0 0
      %1844 = vmatpush1.bf16.msra.mxu0 0
      %1845 = vmatprep.subr.bf16.mxu0 0
      %1846 = vmatpush1.bf16.msra.mxu0 0
      %1847 = vmatprep.subr.bf16.mxu0 0
      %1848 = vmatpush1.bf16.msra.mxu0 0
      %1849 = vmatprep.subr.bf16.mxu0 0
      %1850 = vmatpush1.bf16.msra.mxu0 0
      %1851 = vmatprep.subr.bf16.mxu0 0
      %1852 = vmatpush1.bf16.msra.mxu0 0
      %1853 = vmatprep.mubr.bf16.mxu0 0
      %1854 = vmatmul.mubr.bf16.gmra.mrb[0].mxu0 %v1819
      %v1855 = vpop.f32.mrb[0].mxu0
      %v1856 = vadd.f32 0.0, %v1855
      %v1857 = vpop.f32.mrb[0].mxu0
      %v1858 = vpop.f32.mrb[0].mxu0
      %v1859 = vadd.f32 0.0, %v1858
      %v1860 = vpop.f32.mrb[0].mxu0
      %1861 = vdwg.mxu0
      %v1862 = vadd.f32 %v1804, %v1856
      %v1863 = vadd.f32 %v1807, %v1859
      %v1864 = vld [vmem:[%s1810 + $0x4] sm:$0x3]
      %v1866 = vunpack.c.l.b16 %v1864
      %v1867 = vpack.c.b16 %v1866, %v1815
      %v1869 = vshrl.u32 %v1867, 16
      %v1871 = vshll.u32 %v1867, 16
      %v1873 = vrot.slane %v1871, 1
      %v1874 = vor.u32 %v1869, %v1873
      %v1876 = vsel %vm247, %v1874, 0
      %1878 = vmatprep.subr.bf16.mxu0 0
      %1879 = vmatpush1.bf16.msra.mxu0 %v468
      %1880 = vmatprep.subr.bf16.mxu0 0
      %1881 = vmatpush1.bf16.msra.mxu0 %v469
      %1882 = vmatprep.subr.bf16.mxu0 0
      %1883 = vmatpush1.bf16.msra.mxu0 %v470
      %1884 = vmatprep.subr.bf16.mxu0 0
      %1885 = vmatpush1.bf16.msra.mxu0 %v471
      %1886 = vmatprep.subr.bf16.mxu0 0
      %1887 = vmatpush1.bf16.msra.mxu0 0
      %1888 = vmatprep.subr.bf16.mxu0 0
      %1889 = vmatpush1.bf16.msra.mxu0 0
      %1890 = vmatprep.subr.bf16.mxu0 0
      %1891 = vmatpush1.bf16.msra.mxu0 0
      %1892 = vmatprep.subr.bf16.mxu0 0
      %1893 = vmatpush1.bf16.msra.mxu0 0
      %1894 = vmatprep.subr.bf16.mxu0 0
      %1895 = vmatpush1.bf16.msra.mxu0 0
      %1896 = vmatprep.subr.bf16.mxu0 0
      %1897 = vmatpush1.bf16.msra.mxu0 0
      %1898 = vmatprep.subr.bf16.mxu0 0
      %1899 = vmatpush1.bf16.msra.mxu0 0
      %1900 = vmatprep.subr.bf16.mxu0 0
      %1901 = vmatpush1.bf16.msra.mxu0 0
      %1902 = vmatprep.subr.bf16.mxu0 0
      %1903 = vmatpush1.bf16.msra.mxu0 0
      %1904 = vmatprep.subr.bf16.mxu0 0
      %1905 = vmatpush1.bf16.msra.mxu0 0
      %1906 = vmatprep.subr.bf16.mxu0 0
      %1907 = vmatpush1.bf16.msra.mxu0 0
      %1908 = vmatprep.subr.bf16.mxu0 0
      %1909 = vmatpush1.bf16.msra.mxu0 0
      %1910 = vmatprep.mubr.bf16.mxu0 0
      %1911 = vmatmul.mubr.bf16.gmra.mrb[0].mxu0 %v1876
      %v1912 = vpop.f32.mrb[0].mxu0
      %v1913 = vadd.f32 0.0, %v1912
      %v1914 = vpop.f32.mrb[0].mxu0
      %v1915 = vpop.f32.mrb[0].mxu0
      %v1916 = vadd.f32 0.0, %v1915
      %v1917 = vpop.f32.mrb[0].mxu0
      %1918 = vdwg.mxu0
      %v1919 = vadd.f32 %v1862, %v1913
      %v1920 = vadd.f32 %v1863, %v1916
      %v1921 = vadd.f32 %v1919, %v526
      %v1922 = vadd.f32 %v1920, %v526
      %v1923 = vmax.f32 %v1921, 0.0
      %v1924 = vmax.f32 %v1922, 0.0
      %v1925 = vpack.c.bf16 %v1924, %v1923
      %v1927 = vunpack.c.l.b16 %v1925
      %v1928 = vunpack.c.h.b16 %v1925
      %v1929 = vpack.c.b16 %v1927, %v1927
      %v1930 = vpack.c.b16 %v1928, %v1928
      %s1933 = scalar_lea.vmem %s170, 48
      %1934 = vst.msk [vmem:[%s1933] sm:$0xf] %vm540, %v1929
      %1935 = vst.msk [vmem:[%s1933 + $0x4] sm:$0x1] %vm542, %v1930
      %v1936 = vld [vmem:[%s1810] sm:$0xf]
      %v1937 = vld [vmem:[%s1810 + $0x4] sm:$0x1]
      %v1938 = vld [vmem:[%s1810 + $0x4] sm:$0x3]
      %v1941 = vunpack.c.l.b16 %v1936
      %v1942 = vunpack.c.l.b16 %v1938
      %v1943 = vpack.c.b16 %v1942, %v1941
      %v1945 = vshrl.u32 %v1943, 16
      %v1947 = vshll.u32 %v1943, 16
      %v1949 = vrot.slane %v1947, 1
      %v1950 = vor.u32 %v1945, %v1949
      %v1952 = vsel %vm247, %v1950, 0
      %1954 = vmatprep.subr.bf16.mxu0 0
      %1955 = vmatpush1.bf16.msra.mxu0 %v239
      %1956 = vmatprep.subr.bf16.mxu0 0
      %1957 = vmatpush1.bf16.msra.mxu0 %v240
      %1958 = vmatprep.subr.bf16.mxu0 0
      %1959 = vmatpush1.bf16.msra.mxu0 %v241
      %1960 = vmatprep.subr.bf16.mxu0 0
      %1961 = vmatpush1.bf16.msra.mxu0 %v242
      %1962 = vmatprep.subr.bf16.mxu0 0
      %1963 = vmatpush1.bf16.msra.mxu0 0
      %1964 = vmatprep.subr.bf16.mxu0 0
      %1965 = vmatpush1.bf16.msra.mxu0 0
      %1966 = vmatprep.subr.bf16.mxu0 0
      %1967 = vmatpush1.bf16.msra.mxu0 0
      %1968 = vmatprep.subr.bf16.mxu0 0
      %1969 = vmatpush1.bf16.msra.mxu0 0
      %1970 = vmatprep.subr.bf16.mxu0 0
      %1971 = vmatpush1.bf16.msra.mxu0 0
      %1972 = vmatprep.subr.bf16.mxu0 0
      %1973 = vmatpush1.bf16.msra.mxu0 0
      %1974 = vmatprep.subr.bf16.mxu0 0
      %1975 = vmatpush1.bf16.msra.mxu0 0
      %1976 = vmatprep.subr.bf16.mxu0 0
      %1977 = vmatpush1.bf16.msra.mxu0 0
      %1978 = vmatprep.subr.bf16.mxu0 0
      %1979 = vmatpush1.bf16.msra.mxu0 0
      %1980 = vmatprep.subr.bf16.mxu0 0
      %1981 = vmatpush1.bf16.msra.mxu0 0
      %1982 = vmatprep.subr.bf16.mxu0 0
      %1983 = vmatpush1.bf16.msra.mxu0 0
      %1984 = vmatprep.subr.bf16.mxu0 0
      %1985 = vmatpush1.bf16.msra.mxu0 0
      %1986 = vmatprep.mubr.bf16.mxu0 0
      %1987 = vmatmul.mubr.bf16.gmra.mrb[0].mxu0 %v1952
      %v1988 = vpop.f32.mrb[0].mxu0
      %v1989 = vadd.f32 0.0, %v1988
      %v1990 = vpop.f32.mrb[0].mxu0
      %v1991 = vpop.f32.mrb[0].mxu0
      %v1992 = vadd.f32 0.0, %v1991
      %v1993 = vpop.f32.mrb[0].mxu0
      %1994 = vdwg.mxu0
      %v1996 = vunpack.c.l.b16 %v1937
      %v1997 = vpack.c.b16 %v1996, %v1941
      %v1999 = vsel %vm247, %v1997, 0
      %2001 = vmatprep.subr.bf16.mxu0 0
      %2002 = vmatpush1.bf16.msra.mxu0 %v311
      %2003 = vmatprep.subr.bf16.mxu0 0
      %2004 = vmatpush1.bf16.msra.mxu0 %v312
      %2005 = vmatprep.subr.bf16.mxu0 0
      %2006 = vmatpush1.bf16.msra.mxu0 %v313
      %2007 = vmatprep.subr.bf16.mxu0 0
      %2008 = vmatpush1.bf16.msra.mxu0 %v314
      %2009 = vmatprep.subr.bf16.mxu0 0
      %2010 = vmatpush1.bf16.msra.mxu0 0
      %2011 = vmatprep.subr.bf16.mxu0 0
      %2012 = vmatpush1.bf16.msra.mxu0 0
      %2013 = vmatprep.subr.bf16.mxu0 0
      %2014 = vmatpush1.bf16.msra.mxu0 0
      %2015 = vmatprep.subr.bf16.mxu0 0
      %2016 = vmatpush1.bf16.msra.mxu0 0
      %2017 = vmatprep.subr.bf16.mxu0 0
      %2018 = vmatpush1.bf16.msra.mxu0 0
      %2019 = vmatprep.subr.bf16.mxu0 0
      %2020 = vmatpush1.bf16.msra.mxu0 0
      %2021 = vmatprep.subr.bf16.mxu0 0
      %2022 = vmatpush1.bf16.msra.mxu0 0
      %2023 = vmatprep.subr.bf16.mxu0 0
      %2024 = vmatpush1.bf16.msra.mxu0 0
      %2025 = vmatprep.subr.bf16.mxu0 0
      %2026 = vmatpush1.bf16.msra.mxu0 0
      %2027 = vmatprep.subr.bf16.mxu0 0
      %2028 = vmatpush1.bf16.msra.mxu0 0
      %2029 = vmatprep.subr.bf16.mxu0 0
      %2030 = vmatpush1.bf16.msra.mxu0 0
      %2031 = vmatprep.subr.bf16.mxu0 0
      %2032 = vmatpush1.bf16.msra.mxu0 0
      %2033 = vmatprep.mubr.bf16.mxu0 0
      %2034 = vmatmul.mubr.bf16.gmra.mrb[0].mxu0 %v1999
      %v2035 = vpop.f32.mrb[0].mxu0
      %v2036 = vadd.f32 %v1989, %v2035
      %v2037 = vpop.f32.mrb[0].mxu0
      %v2038 = vpop.f32.mrb[0].mxu0
      %v2039 = vadd.f32 %v1992, %v2038
      %v2040 = vpop.f32.mrb[0].mxu0
      %2041 = vdwg.mxu0
      %s2042 = scalar_lea.vmem %s165, 64
      %v2043 = vld [vmem:[%s2042] sm:$0xf]
      %v2044 = vld [vmem:[%s2042 + $0x4] sm:$0x1]
      %v2047 = vunpack.c.l.b16 %v2043
      %v2048 = vunpack.c.l.b16 %v2044
      %v2049 = vpack.c.b16 %v2048, %v2047
      %v2051 = vsel %vm247, %v2049, 0
      %2053 = vmatprep.subr.bf16.mxu0 0
      %2054 = vmatpush1.bf16.msra.mxu0 %v387
      %2055 = vmatprep.subr.bf16.mxu0 0
      %2056 = vmatpush1.bf16.msra.mxu0 %v388
      %2057 = vmatprep.subr.bf16.mxu0 0
      %2058 = vmatpush1.bf16.msra.mxu0 %v389
      %2059 = vmatprep.subr.bf16.mxu0 0
      %2060 = vmatpush1.bf16.msra.mxu0 %v390
      %2061 = vmatprep.subr.bf16.mxu0 0
      %2062 = vmatpush1.bf16.msra.mxu0 0
      %2063 = vmatprep.subr.bf16.mxu0 0
      %2064 = vmatpush1.bf16.msra.mxu0 0
      %2065 = vmatprep.subr.bf16.mxu0 0
      %2066 = vmatpush1.bf16.msra.mxu0 0
      %2067 = vmatprep.subr.bf16.mxu0 0
      %2068 = vmatpush1.bf16.msra.mxu0 0
      %2069 = vmatprep.subr.bf16.mxu0 0
      %2070 = vmatpush1.bf16.msra.mxu0 0
      %2071 = vmatprep.subr.bf16.mxu0 0
      %2072 = vmatpush1.bf16.msra.mxu0 0
      %2073 = vmatprep.subr.bf16.mxu0 0
      %2074 = vmatpush1.bf16.msra.mxu0 0
      %2075 = vmatprep.subr.bf16.mxu0 0
      %2076 = vmatpush1.bf16.msra.mxu0 0
      %2077 = vmatprep.subr.bf16.mxu0 0
      %2078 = vmatpush1.bf16.msra.mxu0 0
      %2079 = vmatprep.subr.bf16.mxu0 0
      %2080 = vmatpush1.bf16.msra.mxu0 0
      %2081 = vmatprep.subr.bf16.mxu0 0
      %2082 = vmatpush1.bf16.msra.mxu0 0
      %2083 = vmatprep.subr.bf16.mxu0 0
      %2084 = vmatpush1.bf16.msra.mxu0 0
      %2085 = vmatprep.mubr.bf16.mxu0 0
      %2086 = vmatmul.mubr.bf16.gmra.mrb[0].mxu0 %v2051
      %v2087 = vpop.f32.mrb[0].mxu0
      %v2088 = vadd.f32 0.0, %v2087
      %v2089 = vpop.f32.mrb[0].mxu0
      %v2090 = vpop.f32.mrb[0].mxu0
      %v2091 = vadd.f32 0.0, %v2090
      %v2092 = vpop.f32.mrb[0].mxu0
      %2093 = vdwg.mxu0
      %v2094 = vadd.f32 %v2036, %v2088
      %v2095 = vadd.f32 %v2039, %v2091
      %v2096 = vld [vmem:[%s2042 + $0x4] sm:$0x3]
      %v2098 = vunpack.c.l.b16 %v2096
      %v2099 = vpack.c.b16 %v2098, %v2047
      %v2101 = vshrl.u32 %v2099, 16
      %v2103 = vshll.u32 %v2099, 16
      %v2105 = vrot.slane %v2103, 1
      %v2106 = vor.u32 %v2101, %v2105
      %v2108 = vsel %vm247, %v2106, 0
      %2110 = vmatprep.subr.bf16.mxu0 0
      %2111 = vmatpush1.bf16.msra.mxu0 %v468
      %2112 = vmatprep.subr.bf16.mxu0 0
      %2113 = vmatpush1.bf16.msra.mxu0 %v469
      %2114 = vmatprep.subr.bf16.mxu0 0
      %2115 = vmatpush1.bf16.msra.mxu0 %v470
      %2116 = vmatprep.subr.bf16.mxu0 0
      %2117 = vmatpush1.bf16.msra.mxu0 %v471
      %2118 = vmatprep.subr.bf16.mxu0 0
      %2119 = vmatpush1.bf16.msra.mxu0 0
      %2120 = vmatprep.subr.bf16.mxu0 0
      %2121 = vmatpush1.bf16.msra.mxu0 0
      %2122 = vmatprep.subr.bf16.mxu0 0
      %2123 = vmatpush1.bf16.msra.mxu0 0
      %2124 = vmatprep.subr.bf16.mxu0 0
      %2125 = vmatpush1.bf16.msra.mxu0 0
      %2126 = vmatprep.subr.bf16.mxu0 0
      %2127 = vmatpush1.bf16.msra.mxu0 0
      %2128 = vmatprep.subr.bf16.mxu0 0
      %2129 = vmatpush1.bf16.msra.mxu0 0
      %2130 = vmatprep.subr.bf16.mxu0 0
      %2131 = vmatpush1.bf16.msra.mxu0 0
      %2132 = vmatprep.subr.bf16.mxu0 0
      %2133 = vmatpush1.bf16.msra.mxu0 0
      %2134 = vmatprep.subr.bf16.mxu0 0
      %2135 = vmatpush1.bf16.msra.mxu0 0
      %2136 = vmatprep.subr.bf16.mxu0 0
      %2137 = vmatpush1.bf16.msra.mxu0 0
      %2138 = vmatprep.subr.bf16.mxu0 0
      %2139 = vmatpush1.bf16.msra.mxu0 0
      %2140 = vmatprep.subr.bf16.mxu0 0
      %2141 = vmatpush1.bf16.msra.mxu0 0
      %2142 = vmatprep.mubr.bf16.mxu0 0
      %2143 = vmatmul.mubr.bf16.gmra.mrb[0].mxu0 %v2108
      %v2144 = vpop.f32.mrb[0].mxu0
      %v2145 = vadd.f32 0.0, %v2144
      %v2146 = vpop.f32.mrb[0].mxu0
      %v2147 = vpop.f32.mrb[0].mxu0
      %v2148 = vadd.f32 0.0, %v2147
      %v2149 = vpop.f32.mrb[0].mxu0
      %2150 = vdwg.mxu0
      %v2151 = vadd.f32 %v2094, %v2145
      %v2152 = vadd.f32 %v2095, %v2148
      %v2153 = vadd.f32 %v2151, %v526
      %v2154 = vadd.f32 %v2152, %v526
      %v2155 = vmax.f32 %v2153, 0.0
      %v2156 = vmax.f32 %v2154, 0.0
      %v2157 = vpack.c.bf16 %v2156, %v2155
      %v2159 = vunpack.c.l.b16 %v2157
      %v2160 = vunpack.c.h.b16 %v2157
      %v2161 = vpack.c.b16 %v2159, %v2159
      %v2162 = vpack.c.b16 %v2160, %v2160
      %s2165 = scalar_lea.vmem %s170, 56
      %2166 = vst.msk [vmem:[%s2165] sm:$0xf] %vm540, %v2161
      %2167 = vst.msk [vmem:[%s2165 + $0x4] sm:$0x1] %vm542, %v2162
      %v2168 = vld [vmem:[%s2042] sm:$0xf]
      %v2169 = vld [vmem:[%s2042 + $0x4] sm:$0x1]
      %v2170 = vld [vmem:[%s2042 + $0x4] sm:$0x3]
      %v2173 = vunpack.c.l.b16 %v2168
      %v2174 = vunpack.c.l.b16 %v2170
      %v2175 = vpack.c.b16 %v2174, %v2173
      %v2177 = vshrl.u32 %v2175, 16
      %v2179 = vshll.u32 %v2175, 16
      %v2181 = vrot.slane %v2179, 1
      %v2182 = vor.u32 %v2177, %v2181
      %v2184 = vsel %vm247, %v2182, 0
      %2186 = vmatprep.subr.bf16.mxu0 0
      %2187 = vmatpush1.bf16.msra.mxu0 %v239
      %2188 = vmatprep.subr.bf16.mxu0 0
      %2189 = vmatpush1.bf16.msra.mxu0 %v240
      %2190 = vmatprep.subr.bf16.mxu0 0
      %2191 = vmatpush1.bf16.msra.mxu0 %v241
      %2192 = vmatprep.subr.bf16.mxu0 0
      %2193 = vmatpush1.bf16.msra.mxu0 %v242
      %2194 = vmatprep.subr.bf16.mxu0 0
      %2195 = vmatpush1.bf16.msra.mxu0 0
      %2196 = vmatprep.subr.bf16.mxu0 0
      %2197 = vmatpush1.bf16.msra.mxu0 0
      %2198 = vmatprep.subr.bf16.mxu0 0
      %2199 = vmatpush1.bf16.msra.mxu0 0
      %2200 = vmatprep.subr.bf16.mxu0 0
      %2201 = vmatpush1.bf16.msra.mxu0 0
      %2202 = vmatprep.subr.bf16.mxu0 0
      %2203 = vmatpush1.bf16.msra.mxu0 0
      %2204 = vmatprep.subr.bf16.mxu0 0
      %2205 = vmatpush1.bf16.msra.mxu0 0
      %2206 = vmatprep.subr.bf16.mxu0 0
      %2207 = vmatpush1.bf16.msra.mxu0 0
      %2208 = vmatprep.subr.bf16.mxu0 0
      %2209 = vmatpush1.bf16.msra.mxu0 0
      %2210 = vmatprep.subr.bf16.mxu0 0
      %2211 = vmatpush1.bf16.msra.mxu0 0
      %2212 = vmatprep.subr.bf16.mxu0 0
      %2213 = vmatpush1.bf16.msra.mxu0 0
      %2214 = vmatprep.subr.bf16.mxu0 0
      %2215 = vmatpush1.bf16.msra.mxu0 0
      %2216 = vmatprep.subr.bf16.mxu0 0
      %2217 = vmatpush1.bf16.msra.mxu0 0
      %2218 = vmatprep.mubr.bf16.mxu0 0
      %2219 = vmatmul.mubr.bf16.gmra.mrb[0].mxu0 %v2184
      %v2220 = vpop.f32.mrb[0].mxu0
      %v2221 = vadd.f32 0.0, %v2220
      %v2222 = vpop.f32.mrb[0].mxu0
      %v2223 = vpop.f32.mrb[0].mxu0
      %v2224 = vadd.f32 0.0, %v2223
      %v2225 = vpop.f32.mrb[0].mxu0
      %2226 = vdwg.mxu0
      %v2228 = vunpack.c.l.b16 %v2169
      %v2229 = vpack.c.b16 %v2228, %v2173
      %v2231 = vsel %vm247, %v2229, 0
      %2233 = vmatprep.subr.bf16.mxu0 0
      %2234 = vmatpush1.bf16.msra.mxu0 %v311
      %2235 = vmatprep.subr.bf16.mxu0 0
      %2236 = vmatpush1.bf16.msra.mxu0 %v312
      %2237 = vmatprep.subr.bf16.mxu0 0
      %2238 = vmatpush1.bf16.msra.mxu0 %v313
      %2239 = vmatprep.subr.bf16.mxu0 0
      %2240 = vmatpush1.bf16.msra.mxu0 %v314
      %2241 = vmatprep.subr.bf16.mxu0 0
      %2242 = vmatpush1.bf16.msra.mxu0 0
      %2243 = vmatprep.subr.bf16.mxu0 0
      %2244 = vmatpush1.bf16.msra.mxu0 0
      %2245 = vmatprep.subr.bf16.mxu0 0
      %2246 = vmatpush1.bf16.msra.mxu0 0
      %2247 = vmatprep.subr.bf16.mxu0 0
      %2248 = vmatpush1.bf16.msra.mxu0 0
      %2249 = vmatprep.subr.bf16.mxu0 0
      %2250 = vmatpush1.bf16.msra.mxu0 0
      %2251 = vmatprep.subr.bf16.mxu0 0
      %2252 = vmatpush1.bf16.msra.mxu0 0
      %2253 = vmatprep.subr.bf16.mxu0 0
      %2254 = vmatpush1.bf16.msra.mxu0 0
      %2255 = vmatprep.subr.bf16.mxu0 0
      %2256 = vmatpush1.bf16.msra.mxu0 0
      %2257 = vmatprep.subr.bf16.mxu0 0
      %2258 = vmatpush1.bf16.msra.mxu0 0
      %2259 = vmatprep.subr.bf16.mxu0 0
      %2260 = vmatpush1.bf16.msra.mxu0 0
      %2261 = vmatprep.subr.bf16.mxu0 0
      %2262 = vmatpush1.bf16.msra.mxu0 0
      %2263 = vmatprep.subr.bf16.mxu0 0
      %2264 = vmatpush1.bf16.msra.mxu0 0
      %2265 = vmatprep.mubr.bf16.mxu0 0
      %2266 = vmatmul.mubr.bf16.gmra.mrb[0].mxu0 %v2231
      %v2267 = vpop.f32.mrb[0].mxu0
      %v2268 = vadd.f32 %v2221, %v2267
      %v2269 = vpop.f32.mrb[0].mxu0
      %v2270 = vpop.f32.mrb[0].mxu0
      %v2271 = vadd.f32 %v2224, %v2270
      %v2272 = vpop.f32.mrb[0].mxu0
      %2273 = vdwg.mxu0
      %s2274 = scalar_lea.vmem %s165, 72
      %v2275 = vld [vmem:[%s2274] sm:$0xf]
      %v2276 = vld [vmem:[%s2274 + $0x4] sm:$0x1]
      %v2279 = vunpack.c.l.b16 %v2275
      %v2280 = vunpack.c.l.b16 %v2276
      %v2281 = vpack.c.b16 %v2280, %v2279
      %v2283 = vsel %vm247, %v2281, 0
      %2285 = vmatprep.subr.bf16.mxu0 0
      %2286 = vmatpush1.bf16.msra.mxu0 %v387
      %2287 = vmatprep.subr.bf16.mxu0 0
      %2288 = vmatpush1.bf16.msra.mxu0 %v388
      %2289 = vmatprep.subr.bf16.mxu0 0
      %2290 = vmatpush1.bf16.msra.mxu0 %v389
      %2291 = vmatprep.subr.bf16.mxu0 0
      %2292 = vmatpush1.bf16.msra.mxu0 %v390
      %2293 = vmatprep.subr.bf16.mxu0 0
      %2294 = vmatpush1.bf16.msra.mxu0 0
      %2295 = vmatprep.subr.bf16.mxu0 0
      %2296 = vmatpush1.bf16.msra.mxu0 0
      %2297 = vmatprep.subr.bf16.mxu0 0
      %2298 = vmatpush1.bf16.msra.mxu0 0
      %2299 = vmatprep.subr.bf16.mxu0 0
      %2300 = vmatpush1.bf16.msra.mxu0 0
      %2301 = vmatprep.subr.bf16.mxu0 0
      %2302 = vmatpush1.bf16.msra.mxu0 0
      %2303 = vmatprep.subr.bf16.mxu0 0
      %2304 = vmatpush1.bf16.msra.mxu0 0
      %2305 = vmatprep.subr.bf16.mxu0 0
      %2306 = vmatpush1.bf16.msra.mxu0 0
      %2307 = vmatprep.subr.bf16.mxu0 0
      %2308 = vmatpush1.bf16.msra.mxu0 0
      %2309 = vmatprep.subr.bf16.mxu0 0
      %2310 = vmatpush1.bf16.msra.mxu0 0
      %2311 = vmatprep.subr.bf16.mxu0 0
      %2312 = vmatpush1.bf16.msra.mxu0 0
      %2313 = vmatprep.subr.bf16.mxu0 0
      %2314 = vmatpush1.bf16.msra.mxu0 0
      %2315 = vmatprep.subr.bf16.mxu0 0
      %2316 = vmatpush1.bf16.msra.mxu0 0
      %2317 = vmatprep.mubr.bf16.mxu0 0
      %2318 = vmatmul.mubr.bf16.gmra.mrb[0].mxu0 %v2283
      %v2319 = vpop.f32.mrb[0].mxu0
      %v2320 = vadd.f32 0.0, %v2319
      %v2321 = vpop.f32.mrb[0].mxu0
      %v2322 = vpop.f32.mrb[0].mxu0
      %v2323 = vadd.f32 0.0, %v2322
      %v2324 = vpop.f32.mrb[0].mxu0
      %2325 = vdwg.mxu0
      %v2326 = vadd.f32 %v2268, %v2320
      %v2327 = vadd.f32 %v2271, %v2323
      %v2328 = vld [vmem:[%s2274 + $0x4] sm:$0x3]
      %v2330 = vunpack.c.l.b16 %v2328
      %v2331 = vpack.c.b16 %v2330, %v2279
      %v2333 = vshrl.u32 %v2331, 16
      %v2335 = vshll.u32 %v2331, 16
      %v2337 = vrot.slane %v2335, 1
      %v2338 = vor.u32 %v2333, %v2337
      %v2340 = vsel %vm247, %v2338, 0
      %2342 = vmatprep.subr.bf16.mxu0 0
      %2343 = vmatpush1.bf16.msra.mxu0 %v468
      %2344 = vmatprep.subr.bf16.mxu0 0
      %2345 = vmatpush1.bf16.msra.mxu0 %v469
      %2346 = vmatprep.subr.bf16.mxu0 0
      %2347 = vmatpush1.bf16.msra.mxu0 %v470
      %2348 = vmatprep.subr.bf16.mxu0 0
      %2349 = vmatpush1.bf16.msra.mxu0 %v471
      %2350 = vmatprep.subr.bf16.mxu0 0
      %2351 = vmatpush1.bf16.msra.mxu0 0
      %2352 = vmatprep.subr.bf16.mxu0 0
      %2353 = vmatpush1.bf16.msra.mxu0 0
      %2354 = vmatprep.subr.bf16.mxu0 0
      %2355 = vmatpush1.bf16.msra.mxu0 0
      %2356 = vmatprep.subr.bf16.mxu0 0
      %2357 = vmatpush1.bf16.msra.mxu0 0
      %2358 = vmatprep.subr.bf16.mxu0 0
      %2359 = vmatpush1.bf16.msra.mxu0 0
      %2360 = vmatprep.subr.bf16.mxu0 0
      %2361 = vmatpush1.bf16.msra.mxu0 0
      %2362 = vmatprep.subr.bf16.mxu0 0
      %2363 = vmatpush1.bf16.msra.mxu0 0
      %2364 = vmatprep.subr.bf16.mxu0 0
      %2365 = vmatpush1.bf16.msra.mxu0 0
      %2366 = vmatprep.subr.bf16.mxu0 0
      %2367 = vmatpush1.bf16.msra.mxu0 0
      %2368 = vmatprep.subr.bf16.mxu0 0
      %2369 = vmatpush1.bf16.msra.mxu0 0
      %2370 = vmatprep.subr.bf16.mxu0 0
      %2371 = vmatpush1.bf16.msra.mxu0 0
      %2372 = vmatprep.subr.bf16.mxu0 0
      %2373 = vmatpush1.bf16.msra.mxu0 0
      %2374 = vmatprep.mubr.bf16.mxu0 0
      %2375 = vmatmul.mubr.bf16.gmra.mrb[0].mxu0 %v2340
      %v2376 = vpop.f32.mrb[0].mxu0
      %v2377 = vadd.f32 0.0, %v2376
      %v2378 = vpop.f32.mrb[0].mxu0
      %v2379 = vpop.f32.mrb[0].mxu0
      %v2380 = vadd.f32 0.0, %v2379
      %v2381 = vpop.f32.mrb[0].mxu0
      %2382 = vdwg.mxu0
      %v2383 = vadd.f32 %v2326, %v2377
      %v2384 = vadd.f32 %v2327, %v2380
      %v2385 = vadd.f32 %v2383, %v526
      %v2386 = vadd.f32 %v2384, %v526
      %v2387 = vmax.f32 %v2385, 0.0
      %v2388 = vmax.f32 %v2386, 0.0
      %v2389 = vpack.c.bf16 %v2388, %v2387
      %v2391 = vunpack.c.l.b16 %v2389
      %v2392 = vunpack.c.h.b16 %v2389
      %v2393 = vpack.c.b16 %v2391, %v2391
      %v2394 = vpack.c.b16 %v2392, %v2392
      %s2397 = scalar_lea.vmem %s170, 64
      %2398 = vst.msk [vmem:[%s2397] sm:$0xf] %vm540, %v2393
      %2399 = vst.msk [vmem:[%s2397 + $0x4] sm:$0x1] %vm542, %v2394
      %v2400 = vld [vmem:[%s2274] sm:$0xf]
      %v2401 = vld [vmem:[%s2274 + $0x4] sm:$0x1]
      %v2402 = vld [vmem:[%s2274 + $0x4] sm:$0x3]
      %v2405 = vunpack.c.l.b16 %v2400
      %v2406 = vunpack.c.l.b16 %v2402
      %v2407 = vpack.c.b16 %v2406, %v2405
      %v2409 = vshrl.u32 %v2407, 16
      %v2411 = vshll.u32 %v2407, 16
      %v2413 = vrot.slane %v2411, 1
      %v2414 = vor.u32 %v2409, %v2413
      %v2416 = vsel %vm247, %v2414, 0
      %2418 = vmatprep.subr.bf16.mxu0 0
      %2419 = vmatpush1.bf16.msra.mxu0 %v239
      %2420 = vmatprep.subr.bf16.mxu0 0
      %2421 = vmatpush1.bf16.msra.mxu0 %v240
      %2422 = vmatprep.subr.bf16.mxu0 0
      %2423 = vmatpush1.bf16.msra.mxu0 %v241
      %2424 = vmatprep.subr.bf16.mxu0 0
      %2425 = vmatpush1.bf16.msra.mxu0 %v242
      %2426 = vmatprep.subr.bf16.mxu0 0
      %2427 = vmatpush1.bf16.msra.mxu0 0
      %2428 = vmatprep.subr.bf16.mxu0 0
      %2429 = vmatpush1.bf16.msra.mxu0 0
      %2430 = vmatprep.subr.bf16.mxu0 0
      %2431 = vmatpush1.bf16.msra.mxu0 0
      %2432 = vmatprep.subr.bf16.mxu0 0
      %2433 = vmatpush1.bf16.msra.mxu0 0
      %2434 = vmatprep.subr.bf16.mxu0 0
      %2435 = vmatpush1.bf16.msra.mxu0 0
      %2436 = vmatprep.subr.bf16.mxu0 0
      %2437 = vmatpush1.bf16.msra.mxu0 0
      %2438 = vmatprep.subr.bf16.mxu0 0
      %2439 = vmatpush1.bf16.msra.mxu0 0
      %2440 = vmatprep.subr.bf16.mxu0 0
      %2441 = vmatpush1.bf16.msra.mxu0 0
      %2442 = vmatprep.subr.bf16.mxu0 0
      %2443 = vmatpush1.bf16.msra.mxu0 0
      %2444 = vmatprep.subr.bf16.mxu0 0
      %2445 = vmatpush1.bf16.msra.mxu0 0
      %2446 = vmatprep.subr.bf16.mxu0 0
      %2447 = vmatpush1.bf16.msra.mxu0 0
      %2448 = vmatprep.subr.bf16.mxu0 0
      %2449 = vmatpush1.bf16.msra.mxu0 0
      %2450 = vmatprep.mubr.bf16.mxu0 0
      %2451 = vmatmul.mubr.bf16.gmra.mrb[0].mxu0 %v2416
      %v2452 = vpop.f32.mrb[0].mxu0
      %v2453 = vadd.f32 0.0, %v2452
      %v2454 = vpop.f32.mrb[0].mxu0
      %v2455 = vpop.f32.mrb[0].mxu0
      %v2456 = vadd.f32 0.0, %v2455
      %v2457 = vpop.f32.mrb[0].mxu0
      %2458 = vdwg.mxu0
      %v2460 = vunpack.c.l.b16 %v2401
      %v2461 = vpack.c.b16 %v2460, %v2405
      %v2463 = vsel %vm247, %v2461, 0
      %2465 = vmatprep.subr.bf16.mxu0 0
      %2466 = vmatpush1.bf16.msra.mxu0 %v311
      %2467 = vmatprep.subr.bf16.mxu0 0
      %2468 = vmatpush1.bf16.msra.mxu0 %v312
      %2469 = vmatprep.subr.bf16.mxu0 0
      %2470 = vmatpush1.bf16.msra.mxu0 %v313
      %2471 = vmatprep.subr.bf16.mxu0 0
      %2472 = vmatpush1.bf16.msra.mxu0 %v314
      %2473 = vmatprep.subr.bf16.mxu0 0
      %2474 = vmatpush1.bf16.msra.mxu0 0
      %2475 = vmatprep.subr.bf16.mxu0 0
      %2476 = vmatpush1.bf16.msra.mxu0 0
      %2477 = vmatprep.subr.bf16.mxu0 0
      %2478 = vmatpush1.bf16.msra.mxu0 0
      %2479 = vmatprep.subr.bf16.mxu0 0
      %2480 = vmatpush1.bf16.msra.mxu0 0
      %2481 = vmatprep.subr.bf16.mxu0 0
      %2482 = vmatpush1.bf16.msra.mxu0 0
      %2483 = vmatprep.subr.bf16.mxu0 0
      %2484 = vmatpush1.bf16.msra.mxu0 0
      %2485 = vmatprep.subr.bf16.mxu0 0
      %2486 = vmatpush1.bf16.msra.mxu0 0
      %2487 = vmatprep.subr.bf16.mxu0 0
      %2488 = vmatpush1.bf16.msra.mxu0 0
      %2489 = vmatprep.subr.bf16.mxu0 0
      %2490 = vmatpush1.bf16.msra.mxu0 0
      %2491 = vmatprep.subr.bf16.mxu0 0
      %2492 = vmatpush1.bf16.msra.mxu0 0
      %2493 = vmatprep.subr.bf16.mxu0 0
      %2494 = vmatpush1.bf16.msra.mxu0 0
      %2495 = vmatprep.subr.bf16.mxu0 0
      %2496 = vmatpush1.bf16.msra.mxu0 0
      %2497 = vmatprep.mubr.bf16.mxu0 0
      %2498 = vmatmul.mubr.bf16.gmra.mrb[0].mxu0 %v2463
      %v2499 = vpop.f32.mrb[0].mxu0
      %v2500 = vadd.f32 %v2453, %v2499
      %v2501 = vpop.f32.mrb[0].mxu0
      %v2502 = vpop.f32.mrb[0].mxu0
      %v2503 = vadd.f32 %v2456, %v2502
      %v2504 = vpop.f32.mrb[0].mxu0
      %2505 = vdwg.mxu0
      %s2506 = scalar_lea.vmem %s165, 80
      %v2507 = vld [vmem:[%s2506] sm:$0xf]
      %v2508 = vld [vmem:[%s2506 + $0x4] sm:$0x1]
      %v2511 = vunpack.c.l.b16 %v2507
      %v2512 = vunpack.c.l.b16 %v2508
      %v2513 = vpack.c.b16 %v2512, %v2511
      %v2515 = vsel %vm247, %v2513, 0
      %2517 = vmatprep.subr.bf16.mxu0 0
      %2518 = vmatpush1.bf16.msra.mxu0 %v387
      %2519 = vmatprep.subr.bf16.mxu0 0
      %2520 = vmatpush1.bf16.msra.mxu0 %v388
      %2521 = vmatprep.subr.bf16.mxu0 0
      %2522 = vmatpush1.bf16.msra.mxu0 %v389
      %2523 = vmatprep.subr.bf16.mxu0 0
      %2524 = vmatpush1.bf16.msra.mxu0 %v390
      %2525 = vmatprep.subr.bf16.mxu0 0
      %2526 = vmatpush1.bf16.msra.mxu0 0
      %2527 = vmatprep.subr.bf16.mxu0 0
      %2528 = vmatpush1.bf16.msra.mxu0 0
      %2529 = vmatprep.subr.bf16.mxu0 0
      %2530 = vmatpush1.bf16.msra.mxu0 0
      %2531 = vmatprep.subr.bf16.mxu0 0
      %2532 = vmatpush1.bf16.msra.mxu0 0
      %2533 = vmatprep.subr.bf16.mxu0 0
      %2534 = vmatpush1.bf16.msra.mxu0 0
      %2535 = vmatprep.subr.bf16.mxu0 0
      %2536 = vmatpush1.bf16.msra.mxu0 0
      %2537 = vmatprep.subr.bf16.mxu0 0
      %2538 = vmatpush1.bf16.msra.mxu0 0
      %2539 = vmatprep.subr.bf16.mxu0 0
      %2540 = vmatpush1.bf16.msra.mxu0 0
      %2541 = vmatprep.subr.bf16.mxu0 0
      %2542 = vmatpush1.bf16.msra.mxu0 0
      %2543 = vmatprep.subr.bf16.mxu0 0
      %2544 = vmatpush1.bf16.msra.mxu0 0
      %2545 = vmatprep.subr.bf16.mxu0 0
      %2546 = vmatpush1.bf16.msra.mxu0 0
      %2547 = vmatprep.subr.bf16.mxu0 0
      %2548 = vmatpush1.bf16.msra.mxu0 0
      %2549 = vmatprep.mubr.bf16.mxu0 0
      %2550 = vmatmul.mubr.bf16.gmra.mrb[0].mxu0 %v2515
      %v2551 = vpop.f32.mrb[0].mxu0
      %v2552 = vadd.f32 0.0, %v2551
      %v2553 = vpop.f32.mrb[0].mxu0
      %v2554 = vpop.f32.mrb[0].mxu0
      %v2555 = vadd.f32 0.0, %v2554
      %v2556 = vpop.f32.mrb[0].mxu0
      %2557 = vdwg.mxu0
      %v2558 = vadd.f32 %v2500, %v2552
      %v2559 = vadd.f32 %v2503, %v2555
      %v2560 = vld [vmem:[%s2506 + $0x4] sm:$0x3]
      %v2562 = vunpack.c.l.b16 %v2560
      %v2563 = vpack.c.b16 %v2562, %v2511
      %v2565 = vshrl.u32 %v2563, 16
      %v2567 = vshll.u32 %v2563, 16
      %v2569 = vrot.slane %v2567, 1
      %v2570 = vor.u32 %v2565, %v2569
      %v2572 = vsel %vm247, %v2570, 0
      %2574 = vmatprep.subr.bf16.mxu0 0
      %2575 = vmatpush1.bf16.msra.mxu0 %v468
      %2576 = vmatprep.subr.bf16.mxu0 0
      %2577 = vmatpush1.bf16.msra.mxu0 %v469
      %2578 = vmatprep.subr.bf16.mxu0 0
      %2579 = vmatpush1.bf16.msra.mxu0 %v470
      %2580 = vmatprep.subr.bf16.mxu0 0
      %2581 = vmatpush1.bf16.msra.mxu0 %v471
      %2582 = vmatprep.subr.bf16.mxu0 0
      %2583 = vmatpush1.bf16.msra.mxu0 0
      %2584 = vmatprep.subr.bf16.mxu0 0
      %2585 = vmatpush1.bf16.msra.mxu0 0
      %2586 = vmatprep.subr.bf16.mxu0 0
      %2587 = vmatpush1.bf16.msra.mxu0 0
      %2588 = vmatprep.subr.bf16.mxu0 0
      %2589 = vmatpush1.bf16.msra.mxu0 0
      %2590 = vmatprep.subr.bf16.mxu0 0
      %2591 = vmatpush1.bf16.msra.mxu0 0
      %2592 = vmatprep.subr.bf16.mxu0 0
      %2593 = vmatpush1.bf16.msra.mxu0 0
      %2594 = vmatprep.subr.bf16.mxu0 0
      %2595 = vmatpush1.bf16.msra.mxu0 0
      %2596 = vmatprep.subr.bf16.mxu0 0
      %2597 = vmatpush1.bf16.msra.mxu0 0
      %2598 = vmatprep.subr.bf16.mxu0 0
      %2599 = vmatpush1.bf16.msra.mxu0 0
      %2600 = vmatprep.subr.bf16.mxu0 0
      %2601 = vmatpush1.bf16.msra.mxu0 0
      %2602 = vmatprep.subr.bf16.mxu0 0
      %2603 = vmatpush1.bf16.msra.mxu0 0
      %2604 = vmatprep.subr.bf16.mxu0 0
      %2605 = vmatpush1.bf16.msra.mxu0 0
      %2606 = vmatprep.mubr.bf16.mxu0 0
      %2607 = vmatmul.mubr.bf16.gmra.mrb[0].mxu0 %v2572
      %v2608 = vpop.f32.mrb[0].mxu0
      %v2609 = vadd.f32 0.0, %v2608
      %v2610 = vpop.f32.mrb[0].mxu0
      %v2611 = vpop.f32.mrb[0].mxu0
      %v2612 = vadd.f32 0.0, %v2611
      %v2613 = vpop.f32.mrb[0].mxu0
      %2614 = vdwg.mxu0
      %v2615 = vadd.f32 %v2558, %v2609
      %v2616 = vadd.f32 %v2559, %v2612
      %v2617 = vadd.f32 %v2615, %v526
      %v2618 = vadd.f32 %v2616, %v526
      %v2619 = vmax.f32 %v2617, 0.0
      %v2620 = vmax.f32 %v2618, 0.0
      %v2621 = vpack.c.bf16 %v2620, %v2619
      %v2623 = vunpack.c.l.b16 %v2621
      %v2624 = vunpack.c.h.b16 %v2621
      %v2625 = vpack.c.b16 %v2623, %v2623
      %v2626 = vpack.c.b16 %v2624, %v2624
      %s2629 = scalar_lea.vmem %s170, 72
      %2630 = vst.msk [vmem:[%s2629] sm:$0xf] %vm540, %v2625
      %2631 = vst.msk [vmem:[%s2629 + $0x4] sm:$0x1] %vm542, %v2626
      %p2632 = scmp.lt.s32.totalorder %s14, 1
      %s2633 = scalar_select %p2632, %s14, 1
      %s2634 = smul.addr %s2633, 20
      %s2635 = smul.addr %s2634, 4
      %s2636 = scalar_lea.vmem %s3, %s2635
      // Predicated region
      $region33: #{tpu_custom_call.1} parent=31 // pred_check
        %p2637 = pneg %p100
      $region34: #{tpu_custom_call.1} parent=31 // pred_check_branch
        %2639 = sbr.rel (%p2637) target = $region36
      $region35: #{tpu_custom_call.1} parent=31 // pred_region
        _
      $region36: #{tpu_custom_call.1} parent=31 // pred_fallthru
        _
    $region32: #{tpu_custom_call.1} parent=5 // pred_fallthru
      _
    %p2640 = scmp.le.s32.totalorder 2, %s9
    // Predicated region
    $region37: #{tpu_custom_call.1} parent=5 // pred_check
      %p2641 = pneg %p2640
    $region38: #{tpu_custom_call.1} parent=5 // pred_check_branch
      %2643 = sbr.rel (%p2641) target = $region40
    $region39: #{tpu_custom_call.1} parent=5 // pred_region
      %s2644 = ssub.s32 %s9, 2
      // Predicated region
      $region41: #{tpu_custom_call.1} parent=39 // pred_check
        %p2645 = pneg %p106
      $region42: #{tpu_custom_call.1} parent=39 // pred_check_branch
        %2647 = sbr.rel (%p2645) target = $region44
      $region43: #{tpu_custom_call.1} parent=39 // pred_region
        %p2648 = scmp.lt.s32.totalorder %s15, 1
        %s2649 = scalar_select %p2648, %s15, 1
        %s2650 = smul.addr %s2649, 20
        %s2651 = smul.addr %s2650, 4
        %s2652 = scalar_lea.vmem %s3, %s2651
      $region44: #{tpu_custom_call.1} parent=39 // pred_fallthru
        _
    $region40: #{tpu_custom_call.1} parent=5 // pred_fallthru
      _
  $region6: #{tpu_custom_call.1} parent=0 // loop_footer
    %s13 = sadd.s32 1, %s9
  $region7: #{tpu_custom_call.1} parent=0 // loop_footer_branch
    %8 = sbr.rel target = $region3
  $region8: #{tpu_custom_call.1} parent=0 // loop_exit
    _

</llo_original>
